<compile_context>
chip_gen: v6e
topology: v6e:2x2x1
jax: 0.10.0
libtpu: 0.0.40
codegen_flags: <defaults>
</compile_context>

<pallas_src>
import functools

import numpy as np
import jax
import jax.numpy as jnp
from jax.experimental import pallas as pl
from jax.experimental.pallas import tpu as pltpu

_HI = jax.lax.Precision.HIGHEST


def _convmaker_kernel(x_ref, m_ref, w2b_ref, b2_ref, w3t_ref, b3_ref,
                      rep_ref, tile_ref, out_ref, *, scale):
    # x_ref   : (1, Bblk, C*H*W)   lane-dense input slab for this batch block
    # m_ref   : (C*H*W, C*K)       window-sum x depthwise-weights (block-diag)
    # w2b_ref : (C*K, Cg*K)        weight_in (1x1 conv == matmul) block matrix
    # b2_ref  : (1, Cg*K)          weight_in bias, repeated per kernel tap
    # w3t_ref : (C*K, Cout)        weight_out weights, flattened + transposed
    # b3_ref  : (1, Cout)          weight_out bias
    # rep_ref : (Cout, Cout*Cg*K)  0/1 "repeat each w_out entry Cg*K times"
    # tile_ref: (Cg*K, Cout*Cg*K)  0/1 "tile w_in Cout times"
    # out_ref : (1, Bblk, Cout*Cg*K)
    xb = x_ref[0]                                              # (Bblk, C*H*W)

    # kernel = Unflatten(Mean(DepthwiseConv(x)))  ->  one MXU matmul
    kb = jnp.dot(xb, m_ref[...], precision=_HI,
                 preferred_element_type=jnp.float32)           # (Bblk, C*K)

    # weight_in: 1x1 conv over channels (batched matmul over the block)
    w_in = jnp.dot(kb, w2b_ref[...], precision=_HI,
                   preferred_element_type=jnp.float32) + b2_ref[...]   # (Bblk, Cg*K)

    # weight_out: full-(kh,kw) conv over the (kh,kw)-sized "image"
    w_out = jnp.dot(kb, w3t_ref[...], precision=_HI,
                    preferred_element_type=jnp.float32) + b3_ref[...]  # (Bblk, Cout)

    # Outer product w_out x w_in, laid out lane-dense as (Bblk, Cout*Cg*K)
    # via two constant 0/1 selection matmuls (no in-kernel reshape/relayout).
    w_out_rep = jnp.dot(w_out, rep_ref[...],
                        preferred_element_type=jnp.float32)    # (Bblk, Cout*Cg*K)
    w_in_tile = jnp.dot(w_in, tile_ref[...],
                        preferred_element_type=jnp.float32)    # (Bblk, Cout*Cg*K)

    prod = w_out_rep * w_in_tile
    out_ref[0] = (jax.nn.sigmoid(prod) * 2.0 - 1.0) * (scale * 2.0)


def _window_sum_matrix(H, W, kh, kw):
    """Sel[p, t] = 1/(Ho*Wo) if pixel p=(py*W+px) lies inside the valid window
    of tap t=(dy*kw+dx), else 0.  Compile-time constant (inv_hw folded in)."""
    Ho, Wo = H - kh + 1, W - kw + 1
    inv_hw = 1.0 / float(Ho * Wo)
    sel = np.zeros((H * W, kh * kw), np.float32)
    for dy in range(kh):
        for dx in range(kw):
            m = np.zeros((H, W), np.float32)
            m[dy:dy + Ho, dx:dx + Wo] = inv_hw
            sel[:, dy * kw + dx] = m.reshape(-1)
    return sel


def _choose_block_b(B, max_block=128):
    if B <= 1:
        return 1
    # keep >= 2 grid steps so both v7x TensorCores get work
    return int(min(max_block, -(-B // 2)))


def convmaker_forward(x, params, *, kh, kw, out_channels, groups=1):
    """Returns (weight, bias) exactly like ConvMaker.forward (bias=False)."""
    B, C, H, W = x.shape
    K = kh * kw
    P = H * W
    assert groups == 1, "only groups=1 implemented"
    # TODO(synk): groups > 1 grouping of weight_out / bias_out not implemented.
    Cg = C // groups
    Cout = out_channels
    CgK = Cg * K
    w1, w2, b2, w3, b3 = params
    scale = 1.0 / float(K * C) ** 0.5

    # ---- plain-JAX glue: fold depthwise conv + spatial mean into one matrix --
    sel = jnp.asarray(_window_sum_matrix(H, W, kh, kw))             # (P, T) const
    w1r = w1.reshape(C, K, K)                                       # [c, k, tap]
    m_c = jnp.einsum('pt,ckt->cpk', sel, w1r, precision=_HI)        # (C, P, K)
    m_big = jnp.einsum('cpk,cd->cpdk', m_c,
                       jnp.eye(C, dtype=jnp.float32)).reshape(C * P, C * K)

    # weight_in 1x1 conv as a (C*K, Cg*K) block matrix (identity over taps)
    w2_big = jnp.einsum('dc,ke->ckde', w2.reshape(Cg, C),
                        jnp.eye(K, dtype=jnp.float32)).reshape(C * K, CgK)
    b2_big = jnp.repeat(b2.reshape(Cg), K).reshape(1, CgK)

    # weight_out conv == matmul against flattened weights
    w3t = w3.reshape(Cout, C * K).T                                 # (C*K, Cout)
    b3_row = b3.reshape(1, Cout)

    # constant 0/1 repeat / tile matrices for the lane-dense outer product
    rep = jnp.asarray(np.kron(np.eye(Cout, dtype=np.float32),
                              np.ones((1, CgK), np.float32)))       # (Cout, Cout*CgK)
    til = jnp.asarray(np.kron(np.ones((1, Cout), np.float32),
                              np.eye(CgK, dtype=np.float32)))       # (CgK, Cout*CgK)

    # ---- lane-dense, batch-blocked input ------------------------------------
    bb = _choose_block_b(B)
    nb = pl.cdiv(B, bb)
    b_pad = nb * bb
    x_flat = x.reshape(B, C * P)
    if b_pad != B:
        x_flat = jnp.pad(x_flat, ((0, b_pad - B), (0, 0)))
    x3 = x_flat.reshape(nb, bb, C * P)

    kern = functools.partial(_convmaker_kernel, scale=scale)
    out = pl.pallas_call(
        kern,
        out_shape=jax.ShapeDtypeStruct((nb, bb, Cout * CgK), jnp.float32),
        grid_spec=pltpu.PrefetchScalarGridSpec(
            num_scalar_prefetch=0,
            grid=(nb,),
            in_specs=[
                pl.BlockSpec((1, bb, C * P), lambda i: (i, 0, 0)),
                # Constant-index params: Pallas skips re-DMA on unchanged block
                # index, so they are fetched once.
                pl.BlockSpec((C * P, C * K), lambda i: (0, 0)),
                pl.BlockSpec((C * K, CgK), lambda i: (0, 0)),
                pl.BlockSpec((1, CgK), lambda i: (0, 0)),
                pl.BlockSpec((C * K, Cout), lambda i: (0, 0)),
                pl.BlockSpec((1, Cout), lambda i: (0, 0)),
                pl.BlockSpec((Cout, Cout * CgK), lambda i: (0, 0)),
                pl.BlockSpec((CgK, Cout * CgK), lambda i: (0, 0)),
            ],
            out_specs=pl.BlockSpec((1, bb, Cout * CgK), lambda i: (i, 0, 0)),
        ),
        compiler_params=pltpu.CompilerParams(
            dimension_semantics=("parallel",)),
    )(x3, m_big, w2_big, b2_big, w3t, b3_row, rep, til)

    weight = out.reshape(b_pad, Cout, Cg, kh, kw)[:B]
    weight = weight.reshape(B * Cout, Cg, kh, kw)
    # TODO(synk): bias=True path (bias_out conv + Flatten) not implemented;
    # module default bias=False returns None.
    bias = None
    return weight, bias


def ref_convmaker(x, params, *, kh, kw, out_channels, groups=1):
    """Pure-JAX reference, written directly from the PyTorch semantics."""
    B, C, H, W = x.shape
    K = kh * kw
    Ho, Wo = H - kh + 1, W - kw + 1
    w1, w2, b2, w3, b3 = params
    patches = jnp.stack([x[:, :, dy:dy + Ho, dx:dx + Wo]
                         for dy in range(kh) for dx in range(kw)], axis=2)   # (B,C,T,Ho,Wo)
    w1r = w1.reshape(C, K, K)                                                # [c, k, tap]
    conv = jnp.einsum('bctyx,ckt->bckyx', patches, w1r, precision=_HI)       # depthwise conv
    kern = conv.mean(axis=(3, 4))                                            # (B, C, K)
    w_in = jnp.einsum('dc,bck->bdk', w2.reshape(C // groups, C), kern,
                      precision=_HI) + b2[None, :, None]                     # (B, Cg, K)
    w_out = jnp.einsum('ock,bck->bo', w3.reshape(out_channels, C, K), kern,
                       precision=_HI) + b3[None, :]                          # (B, Cout)
    prod = w_in[:, None, :, :] * w_out[:, :, None, None]                     # (B,Cout,Cg,K)
    scale = 1.0 / float(K * C) ** 0.5
    weight = (jax.nn.sigmoid(prod) * 2.0 - 1.0) * scale * 2.0
    return weight.reshape(B * out_channels, C // groups, kh, kw)


if __name__ == "__main__":
    key = jax.random.PRNGKey(0)
    kx, k1, k2, k3, k4, k5 = jax.random.split(key, 6)

    # ConvMaker(dims=2, in_channels=4, out_channels=6, kernel_size=3,
    #           stride=1, padding=0, dilation=1, groups=1, bias=False)
    B, C, H, W = 2, 4, 16, 16
    out_channels, kh, kw = 6, 3, 3
    K = kh * kw

    x = jax.random.normal(kx, (B, C, H, W), jnp.float32)

    # Deterministic parameter init (shapes match the PyTorch module's params).
    w1 = jax.random.normal(k1, (C * K, kh, kw), jnp.float32) * 0.2   # depthwise conv weight
    w2 = jax.random.normal(k2, (C, C), jnp.float32) * 0.2            # weight_in (1x1 conv)
    b2 = jax.random.normal(k3, (C,), jnp.float32) * 0.1
    w3 = jax.random.normal(k4, (out_channels, C, kh, kw), jnp.float32) * 0.2  # weight_out
    b3 = jax.random.normal(k5, (out_channels,), jnp.float32) * 0.1
    params = (w1, w2, b2, w3, b3)

    weight, bias = convmaker_forward(x, params, kh=kh, kw=kw,
                                     out_channels=out_channels)
    weight = jax.block_until_ready(weight)

    ref = ref_convmaker(x, params, kh=kh, kw=kw, out_channels=out_channels)
    assert weight.shape == (B * out_channels, C, kh, kw), weight.shape
    assert bias is None
    err = float(jnp.max(jnp.abs(weight - ref)))
    assert jnp.allclose(weight, ref, rtol=1e-4, atol=1e-5), err

    print("KERNEL_OK")
</pallas_src>

<mosaic_0001>
module attributes {stable_mosaic.version = 11 : i64} {
  func.func @_convmaker_kernel(%arg0: i32, %arg1: memref<1x1x1024xf32, #tpu.memory_space<vmem>>, %arg2: memref<1024x36xf32, #tpu.memory_space<vmem>>, %arg3: memref<36x36xf32, #tpu.memory_space<vmem>>, %arg4: memref<1x36xf32, #tpu.memory_space<vmem>>, %arg5: memref<36x6xf32, #tpu.memory_space<vmem>>, %arg6: memref<1x6xf32, #tpu.memory_space<vmem>>, %arg7: memref<6x216xf32, #tpu.memory_space<vmem>>, %arg8: memref<36x216xf32, #tpu.memory_space<vmem>>, %arg9: memref<1x1x216xf32, #tpu.memory_space<vmem>>) attributes {dimension_semantics = [#tpu.dimension_semantics<parallel>], iteration_bounds = array<i64: 2>, scalar_prefetch = 0 : i64, scratch_operands = 0 : i64, tpu.core_type = #tpu.core_type<tc>, window_params = [{transform_indices = @transform_0, window_bounds = array<i64: 1, 1, 1024>}, {pipeline_mode = #tpu.pipeline_mode<synchronous>, transform_indices = @transform_1, window_bounds = array<i64: 1024, 36>}, {pipeline_mode = #tpu.pipeline_mode<synchronous>, transform_indices = @transform_2, window_bounds = array<i64: 36, 36>}, {pipeline_mode = #tpu.pipeline_mode<synchronous>, transform_indices = @transform_3, window_bounds = array<i64: 1, 36>}, {pipeline_mode = #tpu.pipeline_mode<synchronous>, transform_indices = @transform_4, window_bounds = array<i64: 36, 6>}, {pipeline_mode = #tpu.pipeline_mode<synchronous>, transform_indices = @transform_5, window_bounds = array<i64: 1, 6>}, {pipeline_mode = #tpu.pipeline_mode<synchronous>, transform_indices = @transform_6, window_bounds = array<i64: 6, 216>}, {pipeline_mode = #tpu.pipeline_mode<synchronous>, transform_indices = @transform_7, window_bounds = array<i64: 36, 216>}, {transform_indices = @transform_8, window_bounds = array<i64: 1, 1, 216>}]} {
    %c0 = arith.constant 0 : index
    %c0_0 = arith.constant 0 : index
    %c0_1 = arith.constant 0 : index
    %0 = vector.load %arg1[%c0, %c0_0, %c0_1] : memref<1x1x1024xf32, #tpu.memory_space<vmem>>, vector<1x1x1024xf32>
    %1 = vector.shape_cast %0 : vector<1x1x1024xf32> to vector<1x1024xf32>
    %c0_2 = arith.constant 0 : index
    %c0_3 = arith.constant 0 : index
    %2 = vector.load %arg2[%c0_2, %c0_3] : memref<1024x36xf32, #tpu.memory_space<vmem>>, vector<1024x36xf32>
    %cst = arith.constant dense<0.000000e+00> : vector<1x36xf32>
    %3 = tpu.matmul %1, %2, %cst {dimension_numbers = #tpu.dot_dimension_numbers<[1], [0], [0], [1], [0, 0, 1, 1], [], []>, precision = #tpu.contract_precision<fp32>} : vector<1x1024xf32>, vector<1024x36xf32>, vector<1x36xf32> -> vector<1x36xf32>
    %c0_4 = arith.constant 0 : index
    %c0_5 = arith.constant 0 : index
    %4 = vector.load %arg3[%c0_4, %c0_5] : memref<36x36xf32, #tpu.memory_space<vmem>>, vector<36x36xf32>
    %cst_6 = arith.constant dense<0.000000e+00> : vector<1x36xf32>
    %5 = tpu.matmul %3, %4, %cst_6 {dimension_numbers = #tpu.dot_dimension_numbers<[1], [0], [0], [1], [0, 0, 1, 1], [], []>, precision = #tpu.contract_precision<fp32>} : vector<1x36xf32>, vector<36x36xf32>, vector<1x36xf32> -> vector<1x36xf32>
    %c0_7 = arith.constant 0 : index
    %c0_8 = arith.constant 0 : index
    %6 = vector.load %arg4[%c0_7, %c0_8] : memref<1x36xf32, #tpu.memory_space<vmem>>, vector<1x36xf32>
    %7 = arith.addf %5, %6 : vector<1x36xf32>
    %c0_9 = arith.constant 0 : index
    %c0_10 = arith.constant 0 : index
    %8 = vector.load %arg5[%c0_9, %c0_10] : memref<36x6xf32, #tpu.memory_space<vmem>>, vector<36x6xf32>
    %cst_11 = arith.constant dense<0.000000e+00> : vector<1x6xf32>
    %9 = tpu.matmul %3, %8, %cst_11 {dimension_numbers = #tpu.dot_dimension_numbers<[1], [0], [0], [1], [0, 0, 1, 1], [], []>, precision = #tpu.contract_precision<fp32>} : vector<1x36xf32>, vector<36x6xf32>, vector<1x6xf32> -> vector<1x6xf32>
    %c0_12 = arith.constant 0 : index
    %c0_13 = arith.constant 0 : index
    %10 = vector.load %arg6[%c0_12, %c0_13] : memref<1x6xf32, #tpu.memory_space<vmem>>, vector<1x6xf32>
    %11 = arith.addf %9, %10 : vector<1x6xf32>
    %c0_14 = arith.constant 0 : index
    %c0_15 = arith.constant 0 : index
    %12 = vector.load %arg7[%c0_14, %c0_15] : memref<6x216xf32, #tpu.memory_space<vmem>>, vector<6x216xf32>
    %cst_16 = arith.constant dense<0.000000e+00> : vector<1x216xf32>
    %13 = tpu.matmul %11, %12, %cst_16 {dimension_numbers = #tpu.dot_dimension_numbers<[1], [0], [0], [1], [0, 0, 1, 1], [], []>} : vector<1x6xf32>, vector<6x216xf32>, vector<1x216xf32> -> vector<1x216xf32>
    %c0_17 = arith.constant 0 : index
    %c0_18 = arith.constant 0 : index
    %14 = vector.load %arg8[%c0_17, %c0_18] : memref<36x216xf32, #tpu.memory_space<vmem>>, vector<36x216xf32>
    %cst_19 = arith.constant dense<0.000000e+00> : vector<1x216xf32>
    %15 = tpu.matmul %7, %14, %cst_19 {dimension_numbers = #tpu.dot_dimension_numbers<[1], [0], [0], [1], [0, 0, 1, 1], [], []>} : vector<1x36xf32>, vector<36x216xf32>, vector<1x216xf32> -> vector<1x216xf32>
    %16 = arith.mulf %13, %15 : vector<1x216xf32>
    %17 = arith.negf %16 : vector<1x216xf32>
    %18 = math.exp %17 : vector<1x216xf32>
    %cst_20 = arith.constant 1.000000e+00 : f32
    %19 = vector.broadcast %cst_20 : f32 to vector<1x216xf32>
    %20 = arith.addf %19, %18 : vector<1x216xf32>
    %21 = arith.divf %19, %20 : vector<1x216xf32>
    %cst_21 = arith.constant 2.000000e+00 : f32
    %22 = vector.broadcast %cst_21 : f32 to vector<1x216xf32>
    %23 = arith.mulf %21, %22 : vector<1x216xf32>
    %cst_22 = arith.constant 1.000000e+00 : f32
    %24 = vector.broadcast %cst_22 : f32 to vector<1x216xf32>
    %25 = arith.subf %23, %24 : vector<1x216xf32>
    %cst_23 = arith.constant 0.333333343 : f32
    %26 = vector.broadcast %cst_23 : f32 to vector<1x216xf32>
    %27 = arith.mulf %25, %26 : vector<1x216xf32>
    %c0_24 = arith.constant 0 : index
    %c0_25 = arith.constant 0 : index
    %c0_26 = arith.constant 0 : index
    %28 = vector.load %arg9[%c0_24, %c0_25, %c0_26] : memref<1x1x216xf32, #tpu.memory_space<vmem>>, vector<1x1x216xf32>
    %29 = vector.shape_cast %28 : vector<1x1x216xf32> to vector<1x216xf32>
    %30 = vector.shape_cast %27 : vector<1x216xf32> to vector<1x1x216xf32>
    tpu.vector_store %arg9[%c0_24, %c0_25, %c0_26], %30 {strides = array<i32>} : memref<1x1x216xf32, #tpu.memory_space<vmem>>, vector<1x1x216xf32>,
    return
  }
  func.func @transform_0(%arg0: i32) -> (i32, i32, i32) {
    %c0_i32 = arith.constant 0 : i32
    %c0_i32_0 = arith.constant 0 : i32
    %c0_i32_1 = arith.constant 0 : i32
    return %arg0, %c0_i32, %c0_i32_0 : i32, i32, i32
  }
  func.func @transform_1(%arg0: i32) -> (i32, i32) {
    %c0_i32 = arith.constant 0 : i32
    %c0_i32_0 = arith.constant 0 : i32
    %c0_i32_1 = arith.constant 0 : i32
    return %c0_i32, %c0_i32_0 : i32, i32
  }
  func.func @transform_2(%arg0: i32) -> (i32, i32) {
    %c0_i32 = arith.constant 0 : i32
    %c0_i32_0 = arith.constant 0 : i32
    %c0_i32_1 = arith.constant 0 : i32
    return %c0_i32, %c0_i32_0 : i32, i32
  }
  func.func @transform_3(%arg0: i32) -> (i32, i32) {
    %c0_i32 = arith.constant 0 : i32
    %c0_i32_0 = arith.constant 0 : i32
    %c0_i32_1 = arith.constant 0 : i32
    return %c0_i32, %c0_i32_0 : i32, i32
  }
  func.func @transform_4(%arg0: i32) -> (i32, i32) {
    %c0_i32 = arith.constant 0 : i32
    %c0_i32_0 = arith.constant 0 : i32
    %c0_i32_1 = arith.constant 0 : i32
    return %c0_i32, %c0_i32_0 : i32, i32
  }
  func.func @transform_5(%arg0: i32) -> (i32, i32) {
    %c0_i32 = arith.constant 0 : i32
    %c0_i32_0 = arith.constant 0 : i32
    %c0_i32_1 = arith.constant 0 : i32
    return %c0_i32, %c0_i32_0 : i32, i32
  }
  func.func @transform_6(%arg0: i32) -> (i32, i32) {
    %c0_i32 = arith.constant 0 : i32
    %c0_i32_0 = arith.constant 0 : i32
    %c0_i32_1 = arith.constant 0 : i32
    return %c0_i32, %c0_i32_0 : i32, i32
  }
  func.func @transform_7(%arg0: i32) -> (i32, i32) {
    %c0_i32 = arith.constant 0 : i32
    %c0_i32_0 = arith.constant 0 : i32
    %c0_i32_1 = arith.constant 0 : i32
    return %c0_i32, %c0_i32_0 : i32, i32
  }
  func.func @transform_8(%arg0: i32) -> (i32, i32, i32) {
    %c0_i32 = arith.constant 0 : i32
    %c0_i32_0 = arith.constant 0 : i32
    %c0_i32_1 = arith.constant 0 : i32
    return %arg0, %c0_i32, %c0_i32_0 : i32, i32, i32
  }
}

</mosaic_0001>

<llo_original>
// kernel: tpu_custom_call.1
$region0: #{tpu_custom_call.1}
  #allocation0 [shape = 'u32[]', space=smem, size = 0x4, offset = 0x4, fixed_abs, tag = 'smem constant byte address 0x4 - core index']
  #allocation1 [shape = 'u32[144,128]{1,0:T(1,128)}', space=vmem, size = 0x12000, scoped, tag = 'internal scratch']
  %s0 = inlined_call_operand.vmem [shape: f32[2,1,1024], index: 0, kind: input, shape index: {}]
  %s1 = inlined_call_operand.vmem [shape: f32[1024,36], index: 1, kind: input, shape index: {}]
  %s2 = inlined_call_operand.vmem [shape: f32[36,36], index: 2, kind: input, shape index: {}]
  %s3 = inlined_call_operand.vmem [shape: f32[1,36], index: 3, kind: input, shape index: {}]
  %s4 = inlined_call_operand.vmem [shape: f32[36,6], index: 4, kind: input, shape index: {}]
  %s5 = inlined_call_operand.vmem [shape: f32[1,6], index: 5, kind: input, shape index: {}]
  %s6 = inlined_call_operand.vmem [shape: f32[6,216], index: 6, kind: input, shape index: {}]
  %s7 = inlined_call_operand.vmem [shape: f32[36,216], index: 7, kind: input, shape index: {}]
  %s8 = inlined_call_operand.hbm [shape: f32[2,1,216], index: 8, kind: output, shape index: {}]
  %s9 = sld [smem:[#allocation0]]
  $region65: #{tpu_custom_call.1} parent=0
    _
  %s11 = ssub.s32 1, %s9
  %s12 = scalar_select 0, %s11, %s9
  $region1: #{tpu_custom_call.1} parent=0
    #allocation2 [shape = 'u8[2048]{0}', space=vmem, size = 0x800, scoped, tag = 'output window, operand 0']
    #allocation3 [shape = 's32[2]{0}', space=sflag, size = 0x8, scoped, tag = 'scoped memory for tpu_custom_call.1']
    %13 = vsyncpa [#allocation3], 0
    %s14 = scalar_lea.sflag [#allocation3], 1
    %15 = vsyncpa %s14, 0
    loop: start=0, step=1, limit=4
    $region2: #{tpu_custom_call.1} parent=1 // loop_pre_header
      _
    $region3: #{tpu_custom_call.1} parent=1 // loop_header
      %s17 = sphi 0, %s21
      %p18 = scmp.ge.s32.totalorder %s17, 4
      %s27 = sphi 0, %s29
      %s30 = sphi 0, %s27
      %s31 = sphi 0, %s30
      %s47 = sphi 0, %s31
      %s51 = sphi 0, %s51
      %s53 = sphi 0, %s51
      %s54 = sphi 0, %s53
      %s68 = sphi 0, %s54
      %s72 = sphi 0, %s72
      %s74 = sphi 0, %s72
      %s75 = sphi 0, %s74
      %s89 = sphi 0, %s75
      %s93 = sphi 0, %s93
      %s95 = sphi 0, %s93
      %s96 = sphi 0, %s95
      %s110 = sphi 0, %s96
      %s114 = sphi 0, %s114
      %s116 = sphi 0, %s114
      %s117 = sphi 0, %s116
      %s131 = sphi 0, %s117
      %s135 = sphi 0, %s135
      %s137 = sphi 0, %s135
      %s138 = sphi 0, %s137
      %s152 = sphi 0, %s138
      %s156 = sphi 0, %s156
      %s158 = sphi 0, %s156
      %s159 = sphi 0, %s158
      %s173 = sphi 0, %s159
      %s177 = sphi 0, %s177
      %s179 = sphi 0, %s177
      %s180 = sphi 0, %s179
      %s194 = sphi 0, %s180
      %s200 = sphi 0, %s202
      %s203 = sphi 0, %s200
      %s204 = sphi 0, %s203
      %s220 = sphi 0, %s204
    $region4: #{tpu_custom_call.1} parent=1 // loop_header_branch
      %20 = sbr.rel (%p18) target = $region8
    $region5: #{tpu_custom_call.1} parent=1 // loop_body
      %s22 = ssub.s32 %s17, 1
      %s23 = ssub.s32 %s17, 2
      %s24 = sadd.s32 %s17, 1
      %s25 = ssub.s32 %s17, %s24
      %p26 = scmp.eq.s32.totalorder %s25, 0
      %s28 = sadd.s32 %s27, 1
      %s29 = scalar_select %p26, %s27, %s28
      %p32 = pneg %p26
      %p33 = scmp.eq.s32.totalorder %s17, 1
      %p34 = por %p32, %p33
      %p35 = scmp.ne.s32.totalorder %s27, %s30
      %p36 = scmp.eq.s32.totalorder %s17, 0
      %p37 = por %p35, %p36
      %p38 = scmp.ne.s32.totalorder %s27, %s30
      %p39 = scmp.eq.s32.totalorder %s22, 1
      %p40 = por %p38, %p39
      %p41 = scmp.ne.s32.totalorder %s30, %s31
      %p42 = scmp.eq.s32.totalorder %s22, 0
      %p43 = por %p41, %p42
      %p44 = scmp.ne.s32.totalorder %s30, %s31
      %p45 = scmp.eq.s32.totalorder %s23, 1
      %p46 = por %p44, %p45
      %p48 = scmp.ne.s32.totalorder %s31, %s47
      %p49 = scmp.eq.s32.totalorder %s23, 0
      %p50 = por %p48, %p49
      %s52 = sadd.s32 %s51, 1
      %p55 = scmp.eq.s32.totalorder %s17, 1
      %p56 = scmp.ne.s32.totalorder %s51, %s53
      %p57 = scmp.eq.s32.totalorder %s17, 0
      %p58 = por %p56, %p57
      %p59 = scmp.ne.s32.totalorder %s51, %s53
      %p60 = scmp.eq.s32.totalorder %s22, 1
      %p61 = por %p59, %p60
      %p62 = scmp.ne.s32.totalorder %s53, %s54
      %p63 = scmp.eq.s32.totalorder %s22, 0
      %p64 = por %p62, %p63
      %p65 = scmp.ne.s32.totalorder %s53, %s54
      %p66 = scmp.eq.s32.totalorder %s23, 1
      %p67 = por %p65, %p66
      %p69 = scmp.ne.s32.totalorder %s54, %s68
      %p70 = scmp.eq.s32.totalorder %s23, 0
      %p71 = por %p69, %p70
      %s73 = sadd.s32 %s72, 1
      %p76 = scmp.eq.s32.totalorder %s17, 1
      %p77 = scmp.ne.s32.totalorder %s72, %s74
      %p78 = scmp.eq.s32.totalorder %s17, 0
      %p79 = por %p77, %p78
      %p80 = scmp.ne.s32.totalorder %s72, %s74
      %p81 = scmp.eq.s32.totalorder %s22, 1
      %p82 = por %p80, %p81
      %p83 = scmp.ne.s32.totalorder %s74, %s75
      %p84 = scmp.eq.s32.totalorder %s22, 0
      %p85 = por %p83, %p84
      %p86 = scmp.ne.s32.totalorder %s74, %s75
      %p87 = scmp.eq.s32.totalorder %s23, 1
      %p88 = por %p86, %p87
      %p90 = scmp.ne.s32.totalorder %s75, %s89
      %p91 = scmp.eq.s32.totalorder %s23, 0
      %p92 = por %p90, %p91
      %s94 = sadd.s32 %s93, 1
      %p97 = scmp.eq.s32.totalorder %s17, 1
      %p98 = scmp.ne.s32.totalorder %s93, %s95
      %p99 = scmp.eq.s32.totalorder %s17, 0
      %p100 = por %p98, %p99
      %p101 = scmp.ne.s32.totalorder %s93, %s95
      %p102 = scmp.eq.s32.totalorder %s22, 1
      %p103 = por %p101, %p102
      %p104 = scmp.ne.s32.totalorder %s95, %s96
      %p105 = scmp.eq.s32.totalorder %s22, 0
      %p106 = por %p104, %p105
      %p107 = scmp.ne.s32.totalorder %s95, %s96
      %p108 = scmp.eq.s32.totalorder %s23, 1
      %p109 = por %p107, %p108
      %p111 = scmp.ne.s32.totalorder %s96, %s110
      %p112 = scmp.eq.s32.totalorder %s23, 0
      %p113 = por %p111, %p112
      %s115 = sadd.s32 %s114, 1
      %p118 = scmp.eq.s32.totalorder %s17, 1
      %p119 = scmp.ne.s32.totalorder %s114, %s116
      %p120 = scmp.eq.s32.totalorder %s17, 0
      %p121 = por %p119, %p120
      %p122 = scmp.ne.s32.totalorder %s114, %s116
      %p123 = scmp.eq.s32.totalorder %s22, 1
      %p124 = por %p122, %p123
      %p125 = scmp.ne.s32.totalorder %s116, %s117
      %p126 = scmp.eq.s32.totalorder %s22, 0
      %p127 = por %p125, %p126
      %p128 = scmp.ne.s32.totalorder %s116, %s117
      %p129 = scmp.eq.s32.totalorder %s23, 1
      %p130 = por %p128, %p129
      %p132 = scmp.ne.s32.totalorder %s117, %s131
      %p133 = scmp.eq.s32.totalorder %s23, 0
      %p134 = por %p132, %p133
      %s136 = sadd.s32 %s135, 1
      %p139 = scmp.eq.s32.totalorder %s17, 1
      %p140 = scmp.ne.s32.totalorder %s135, %s137
      %p141 = scmp.eq.s32.totalorder %s17, 0
      %p142 = por %p140, %p141
      %p143 = scmp.ne.s32.totalorder %s135, %s137
      %p144 = scmp.eq.s32.totalorder %s22, 1
      %p145 = por %p143, %p144
      %p146 = scmp.ne.s32.totalorder %s137, %s138
      %p147 = scmp.eq.s32.totalorder %s22, 0
      %p148 = por %p146, %p147
      %p149 = scmp.ne.s32.totalorder %s137, %s138
      %p150 = scmp.eq.s32.totalorder %s23, 1
      %p151 = por %p149, %p150
      %p153 = scmp.ne.s32.totalorder %s138, %s152
      %p154 = scmp.eq.s32.totalorder %s23, 0
      %p155 = por %p153, %p154
      %s157 = sadd.s32 %s156, 1
      %p160 = scmp.eq.s32.totalorder %s17, 1
      %p161 = scmp.ne.s32.totalorder %s156, %s158
      %p162 = scmp.eq.s32.totalorder %s17, 0
      %p163 = por %p161, %p162
      %p164 = scmp.ne.s32.totalorder %s156, %s158
      %p165 = scmp.eq.s32.totalorder %s22, 1
      %p166 = por %p164, %p165
      %p167 = scmp.ne.s32.totalorder %s158, %s159
      %p168 = scmp.eq.s32.totalorder %s22, 0
      %p169 = por %p167, %p168
      %p170 = scmp.ne.s32.totalorder %s158, %s159
      %p171 = scmp.eq.s32.totalorder %s23, 1
      %p172 = por %p170, %p171
      %p174 = scmp.ne.s32.totalorder %s159, %s173
      %p175 = scmp.eq.s32.totalorder %s23, 0
      %p176 = por %p174, %p175
      %s178 = sadd.s32 %s177, 1
      %p181 = scmp.eq.s32.totalorder %s17, 1
      %p182 = scmp.ne.s32.totalorder %s177, %s179
      %p183 = scmp.eq.s32.totalorder %s17, 0
      %p184 = por %p182, %p183
      %p185 = scmp.ne.s32.totalorder %s177, %s179
      %p186 = scmp.eq.s32.totalorder %s22, 1
      %p187 = por %p185, %p186
      %p188 = scmp.ne.s32.totalorder %s179, %s180
      %p189 = scmp.eq.s32.totalorder %s22, 0
      %p190 = por %p188, %p189
      %p191 = scmp.ne.s32.totalorder %s179, %s180
      %p192 = scmp.eq.s32.totalorder %s23, 1
      %p193 = por %p191, %p192
      %p195 = scmp.ne.s32.totalorder %s180, %s194
      %p196 = scmp.eq.s32.totalorder %s23, 0
      %p197 = por %p195, %p196
      %s198 = ssub.s32 %s17, %s24
      %p199 = scmp.eq.s32.totalorder %s198, 0
      %s201 = sadd.s32 %s200, 1
      %s202 = scalar_select %p199, %s200, %s201
      %p205 = pneg %p199
      %p206 = scmp.eq.s32.totalorder %s17, 1
      %p207 = por %p205, %p206
      %p208 = scmp.ne.s32.totalorder %s200, %s203
      %p209 = scmp.eq.s32.totalorder %s17, 0
      %p210 = por %p208, %p209
      %p211 = scmp.ne.s32.totalorder %s200, %s203
      %p212 = scmp.eq.s32.totalorder %s22, 1
      %p213 = por %p211, %p212
      %p214 = scmp.ne.s32.totalorder %s203, %s204
      %p215 = scmp.eq.s32.totalorder %s22, 0
      %p216 = por %p214, %p215
      %p217 = scmp.ne.s32.totalorder %s203, %s204
      %p218 = scmp.eq.s32.totalorder %s23, 1
      %p219 = por %p217, %p218
      %p221 = scmp.ne.s32.totalorder %s204, %s220
      %p222 = scmp.eq.s32.totalorder %s23, 0
      %p223 = por %p221, %p222
      %p224 = scmp.le.s32.totalorder 1, %s17
      %p225 = scmp.lt.s32.totalorder %s17, 3
      %p226 = pnand %p224, %p225
      %p227 = pneg %p226
      // Predicated region
      $region9: #{tpu_custom_call.1} parent=5 // pred_check
        _
      $region10: #{tpu_custom_call.1} parent=5 // pred_check_branch
        %229 = sbr.rel (%p226) target = $region12
      $region11: #{tpu_custom_call.1} parent=5 // pred_region
        %s230 = ssub.s32 %s17, 1
        // Predicated region
        $region13: #{tpu_custom_call.1} parent=11 // pred_check
          %p231 = pneg %p64
        $region14: #{tpu_custom_call.1} parent=11 // pred_check_branch
          %233 = sbr.rel (%p231) target = $region16
        $region15: #{tpu_custom_call.1} parent=11 // pred_region
          _
        $region16: #{tpu_custom_call.1} parent=11 // pred_fallthru
          _
        // Predicated region
        $region17: #{tpu_custom_call.1} parent=11 // pred_check
          %p234 = pneg %p85
        $region18: #{tpu_custom_call.1} parent=11 // pred_check_branch
          %236 = sbr.rel (%p234) target = $region20
        $region19: #{tpu_custom_call.1} parent=11 // pred_region
          _
        $region20: #{tpu_custom_call.1} parent=11 // pred_fallthru
          _
        // Predicated region
        $region21: #{tpu_custom_call.1} parent=11 // pred_check
          %p237 = pneg %p106
        $region22: #{tpu_custom_call.1} parent=11 // pred_check_branch
          %239 = sbr.rel (%p237) target = $region24
        $region23: #{tpu_custom_call.1} parent=11 // pred_region
          _
        $region24: #{tpu_custom_call.1} parent=11 // pred_fallthru
          _
        // Predicated region
        $region25: #{tpu_custom_call.1} parent=11 // pred_check
          %p240 = pneg %p127
        $region26: #{tpu_custom_call.1} parent=11 // pred_check_branch
          %242 = sbr.rel (%p240) target = $region28
        $region27: #{tpu_custom_call.1} parent=11 // pred_region
          _
        $region28: #{tpu_custom_call.1} parent=11 // pred_fallthru
          _
        // Predicated region
        $region29: #{tpu_custom_call.1} parent=11 // pred_check
          %p243 = pneg %p148
        $region30: #{tpu_custom_call.1} parent=11 // pred_check_branch
          %245 = sbr.rel (%p243) target = $region32
        $region31: #{tpu_custom_call.1} parent=11 // pred_region
          _
        $region32: #{tpu_custom_call.1} parent=11 // pred_fallthru
          _
        // Predicated region
        $region33: #{tpu_custom_call.1} parent=11 // pred_check
          %p246 = pneg %p169
        $region34: #{tpu_custom_call.1} parent=11 // pred_check_branch
          %248 = sbr.rel (%p246) target = $region36
        $region35: #{tpu_custom_call.1} parent=11 // pred_region
          _
        $region36: #{tpu_custom_call.1} parent=11 // pred_fallthru
          _
        // Predicated region
        $region37: #{tpu_custom_call.1} parent=11 // pred_check
          %p249 = pneg %p190
        $region38: #{tpu_custom_call.1} parent=11 // pred_check_branch
          %251 = sbr.rel (%p249) target = $region40
        $region39: #{tpu_custom_call.1} parent=11 // pred_region
          _
        $region40: #{tpu_custom_call.1} parent=11 // pred_fallthru
          _
      $region12: #{tpu_custom_call.1} parent=5 // pred_fallthru
        _
      %p252 = scmp.lt.s32.totalorder %s17, 2
      // Predicated region
      $region41: #{tpu_custom_call.1} parent=5 // pred_check
        %p253 = pneg %p252
      $region42: #{tpu_custom_call.1} parent=5 // pred_check_branch
        %255 = sbr.rel (%p253) target = $region44
      $region43: #{tpu_custom_call.1} parent=5 // pred_region
        // Predicated region
        $region45: #{tpu_custom_call.1} parent=43 // pred_check
          %p256 = pneg %p37
        $region46: #{tpu_custom_call.1} parent=43 // pred_check_branch
          %258 = sbr.rel (%p256) target = $region48
        $region47: #{tpu_custom_call.1} parent=43 // pred_region
          %p259 = scmp.lt.s32.totalorder %s17, 1
          %s260 = scalar_select %p259, %s17, 1
          %s261 = smul.addr %s260, 8
          %s262 = scalar_lea.vmem %s0, %s261
        $region48: #{tpu_custom_call.1} parent=43 // pred_fallthru
          _
      $region44: #{tpu_custom_call.1} parent=5 // pred_fallthru
        _
      %p263 = scmp.le.s32.totalorder 1, %s17
      %p264 = scmp.lt.s32.totalorder %s17, 3
      %p265 = pnand %p263, %p264
      %p266 = pneg %p265
      // Predicated region
      $region49: #{tpu_custom_call.1} parent=5 // pred_check
        _
      $region50: #{tpu_custom_call.1} parent=5 // pred_check_branch
        %268 = sbr.rel (%p265) target = $region52
      $region51: #{tpu_custom_call.1} parent=5 // pred_region
        %s269 = ssub.s32 %s17, 1
        %p270 = scmp.lt.s32.totalorder %s22, 1
        %s271 = scalar_select %p270, %s22, 1
        %s272 = smul.addr %s271, 8
        %s273 = scalar_lea.vmem %s0, %s272
        %p274 = pneg %p43
        %p275 = pneg %p40
        %p276 = pneg %p64
        %p277 = pneg %p61
        %p278 = pneg %p85
        %p279 = pneg %p82
        %p280 = pneg %p106
        %p281 = pneg %p103
        %p282 = pneg %p127
        %p283 = pneg %p124
        %p284 = pneg %p148
        %p285 = pneg %p145
        %p286 = pneg %p169
        %p287 = pneg %p166
        %p288 = pneg %p190
        %p289 = pneg %p187
        %p290 = pneg %p216
        %p291 = pneg %p213
        %s292 = sand.u32 %s203, 1
        %s293 = scalar_lea.sflag [#allocation3], %s292
        %s294 = sand.u32 %s203, 1
        %s295 = smul.addr %s294, 2
        %s296 = scalar_lea.vmem [#allocation2], %s295
        %p297 = scmp.lt.s32.totalorder %s22, 1
        %s298 = scalar_select %p297, %s22, 1
        %s299 = smul.addr %s298, 8
        %s300 = scalar_lea.vmem %s0, %s299
        %v301 = vld [vmem:[%s300] sm:$0xff]
        %v302 = vld [vmem:[%s1] sm:$0xff]
        %v303 = vld [vmem:[%s1 + $0x8] sm:$0xff]
        %v304 = vld [vmem:[%s1 + $0x10] sm:$0xff]
        %v305 = vld [vmem:[%s1 + $0x18] sm:$0xff]
        %v306 = vld [vmem:[%s1 + $0x20] sm:$0xff]
        %v307 = vld [vmem:[%s1 + $0x28] sm:$0xff]
        %v308 = vld [vmem:[%s1 + $0x30] sm:$0xff]
        %v309 = vld [vmem:[%s1 + $0x38] sm:$0xff]
        %v310 = vld [vmem:[%s1 + $0x40] sm:$0xff]
        %v311 = vld [vmem:[%s1 + $0x48] sm:$0xff]
        %v312 = vld [vmem:[%s1 + $0x50] sm:$0xff]
        %v313 = vld [vmem:[%s1 + $0x58] sm:$0xff]
        %v314 = vld [vmem:[%s1 + $0x60] sm:$0xff]
        %v315 = vld [vmem:[%s1 + $0x68] sm:$0xff]
        %v316 = vld [vmem:[%s1 + $0x70] sm:$0xff]
        %v317 = vld [vmem:[%s1 + $0x78] sm:$0xff]
        %v318 = vld [vmem:[%s1 + $0x80] sm:$0xff]
        %v319 = vld [vmem:[%s1 + $0x88] sm:$0xff]
        %v320 = vld [vmem:[%s1 + $0x90] sm:$0xff]
        %v321 = vld [vmem:[%s1 + $0x98] sm:$0xff]
        %v322 = vld [vmem:[%s1 + $0xa0] sm:$0xff]
        %v323 = vld [vmem:[%s1 + $0xa8] sm:$0xff]
        %v324 = vld [vmem:[%s1 + $0xb0] sm:$0xff]
        %v325 = vld [vmem:[%s1 + $0xb8] sm:$0xff]
        %v326 = vld [vmem:[%s1 + $0xc0] sm:$0xff]
        %v327 = vld [vmem:[%s1 + $0xc8] sm:$0xff]
        %v328 = vld [vmem:[%s1 + $0xd0] sm:$0xff]
        %v329 = vld [vmem:[%s1 + $0xd8] sm:$0xff]
        %v330 = vld [vmem:[%s1 + $0xe0] sm:$0xff]
        %v331 = vld [vmem:[%s1 + $0xe8] sm:$0xff]
        %v332 = vld [vmem:[%s1 + $0xf0] sm:$0xff]
        %v333 = vld [vmem:[%s1 + $0xf8] sm:$0xff]
        %v334 = vld [vmem:[%s1 + $0x100] sm:$0xff]
        %v335 = vld [vmem:[%s1 + $0x108] sm:$0xff]
        %v336 = vld [vmem:[%s1 + $0x110] sm:$0xff]
        %v337 = vld [vmem:[%s1 + $0x118] sm:$0xff]
        %v338 = vld [vmem:[%s1 + $0x120] sm:$0xff]
        %v339 = vld [vmem:[%s1 + $0x128] sm:$0xff]
        %v340 = vld [vmem:[%s1 + $0x130] sm:$0xff]
        %v341 = vld [vmem:[%s1 + $0x138] sm:$0xff]
        %v342 = vld [vmem:[%s1 + $0x140] sm:$0xff]
        %v343 = vld [vmem:[%s1 + $0x148] sm:$0xff]
        %v344 = vld [vmem:[%s1 + $0x150] sm:$0xff]
        %v345 = vld [vmem:[%s1 + $0x158] sm:$0xff]
        %v346 = vld [vmem:[%s1 + $0x160] sm:$0xff]
        %v347 = vld [vmem:[%s1 + $0x168] sm:$0xff]
        %v348 = vld [vmem:[%s1 + $0x170] sm:$0xff]
        %v349 = vld [vmem:[%s1 + $0x178] sm:$0xff]
        %v350 = vld [vmem:[%s1 + $0x180] sm:$0xff]
        %v351 = vld [vmem:[%s1 + $0x188] sm:$0xff]
        %v352 = vld [vmem:[%s1 + $0x190] sm:$0xff]
        %v353 = vld [vmem:[%s1 + $0x198] sm:$0xff]
        %v354 = vld [vmem:[%s1 + $0x1a0] sm:$0xff]
        %v355 = vld [vmem:[%s1 + $0x1a8] sm:$0xff]
        %v356 = vld [vmem:[%s1 + $0x1b0] sm:$0xff]
        %v357 = vld [vmem:[%s1 + $0x1b8] sm:$0xff]
        %v358 = vld [vmem:[%s1 + $0x1c0] sm:$0xff]
        %v359 = vld [vmem:[%s1 + $0x1c8] sm:$0xff]
        %v360 = vld [vmem:[%s1 + $0x1d0] sm:$0xff]
        %v361 = vld [vmem:[%s1 + $0x1d8] sm:$0xff]
        %v362 = vld [vmem:[%s1 + $0x1e0] sm:$0xff]
        %v363 = vld [vmem:[%s1 + $0x1e8] sm:$0xff]
        %v364 = vld [vmem:[%s1 + $0x1f0] sm:$0xff]
        %v365 = vld [vmem:[%s1 + $0x1f8] sm:$0xff]
        %v366 = vld [vmem:[%s1 + $0x200] sm:$0xff]
        %v367 = vld [vmem:[%s1 + $0x208] sm:$0xff]
        %v368 = vld [vmem:[%s1 + $0x210] sm:$0xff]
        %v369 = vld [vmem:[%s1 + $0x218] sm:$0xff]
        %v370 = vld [vmem:[%s1 + $0x220] sm:$0xff]
        %v371 = vld [vmem:[%s1 + $0x228] sm:$0xff]
        %v372 = vld [vmem:[%s1 + $0x230] sm:$0xff]
        %v373 = vld [vmem:[%s1 + $0x238] sm:$0xff]
        %v374 = vld [vmem:[%s1 + $0x240] sm:$0xff]
        %v375 = vld [vmem:[%s1 + $0x248] sm:$0xff]
        %v376 = vld [vmem:[%s1 + $0x250] sm:$0xff]
        %v377 = vld [vmem:[%s1 + $0x258] sm:$0xff]
        %v378 = vld [vmem:[%s1 + $0x260] sm:$0xff]
        %v379 = vld [vmem:[%s1 + $0x268] sm:$0xff]
        %v380 = vld [vmem:[%s1 + $0x270] sm:$0xff]
        %v381 = vld [vmem:[%s1 + $0x278] sm:$0xff]
        %v382 = vld [vmem:[%s1 + $0x280] sm:$0xff]
        %v383 = vld [vmem:[%s1 + $0x288] sm:$0xff]
        %v384 = vld [vmem:[%s1 + $0x290] sm:$0xff]
        %v385 = vld [vmem:[%s1 + $0x298] sm:$0xff]
        %v386 = vld [vmem:[%s1 + $0x2a0] sm:$0xff]
        %v387 = vld [vmem:[%s1 + $0x2a8] sm:$0xff]
        %v388 = vld [vmem:[%s1 + $0x2b0] sm:$0xff]
        %v389 = vld [vmem:[%s1 + $0x2b8] sm:$0xff]
        %v390 = vld [vmem:[%s1 + $0x2c0] sm:$0xff]
        %v391 = vld [vmem:[%s1 + $0x2c8] sm:$0xff]
        %v392 = vld [vmem:[%s1 + $0x2d0] sm:$0xff]
        %v393 = vld [vmem:[%s1 + $0x2d8] sm:$0xff]
        %v394 = vld [vmem:[%s1 + $0x2e0] sm:$0xff]
        %v395 = vld [vmem:[%s1 + $0x2e8] sm:$0xff]
        %v396 = vld [vmem:[%s1 + $0x2f0] sm:$0xff]
        %v397 = vld [vmem:[%s1 + $0x2f8] sm:$0xff]
        %v398 = vld [vmem:[%s1 + $0x300] sm:$0xff]
        %v399 = vld [vmem:[%s1 + $0x308] sm:$0xff]
        %v400 = vld [vmem:[%s1 + $0x310] sm:$0xff]
        %v401 = vld [vmem:[%s1 + $0x318] sm:$0xff]
        %v402 = vld [vmem:[%s1 + $0x320] sm:$0xff]
        %v403 = vld [vmem:[%s1 + $0x328] sm:$0xff]
        %v404 = vld [vmem:[%s1 + $0x330] sm:$0xff]
        %v405 = vld [vmem:[%s1 + $0x338] sm:$0xff]
        %v406 = vld [vmem:[%s1 + $0x340] sm:$0xff]
        %v407 = vld [vmem:[%s1 + $0x348] sm:$0xff]
        %v408 = vld [vmem:[%s1 + $0x350] sm:$0xff]
        %v409 = vld [vmem:[%s1 + $0x358] sm:$0xff]
        %v410 = vld [vmem:[%s1 + $0x360] sm:$0xff]
        %v411 = vld [vmem:[%s1 + $0x368] sm:$0xff]
        %v412 = vld [vmem:[%s1 + $0x370] sm:$0xff]
        %v413 = vld [vmem:[%s1 + $0x378] sm:$0xff]
        %v414 = vld [vmem:[%s1 + $0x380] sm:$0xff]
        %v415 = vld [vmem:[%s1 + $0x388] sm:$0xff]
        %v416 = vld [vmem:[%s1 + $0x390] sm:$0xff]
        %v417 = vld [vmem:[%s1 + $0x398] sm:$0xff]
        %v418 = vld [vmem:[%s1 + $0x3a0] sm:$0xff]
        %v419 = vld [vmem:[%s1 + $0x3a8] sm:$0xff]
        %v420 = vld [vmem:[%s1 + $0x3b0] sm:$0xff]
        %v421 = vld [vmem:[%s1 + $0x3b8] sm:$0xff]
        %v422 = vld [vmem:[%s1 + $0x3c0] sm:$0xff]
        %v423 = vld [vmem:[%s1 + $0x3c8] sm:$0xff]
        %v424 = vld [vmem:[%s1 + $0x3d0] sm:$0xff]
        %v425 = vld [vmem:[%s1 + $0x3d8] sm:$0xff]
        %v426 = vld [vmem:[%s1 + $0x3e0] sm:$0xff]
        %v427 = vld [vmem:[%s1 + $0x3e8] sm:$0xff]
        %v428 = vld [vmem:[%s1 + $0x3f0] sm:$0xff]
        %v429 = vld [vmem:[%s1 + $0x3f8] sm:$0xff]
        %v431 = vlaneseq
        %v432 = vshrl.u32 %v431, 7
        %v433 = vsub.s32 0, %v432
        %v434 = vrot.slane %v301, %v433
        %v435 = vlaneseq
        %v436 = vshrl.u32 %v435, 7
        %v437 = vsub.s32 1, %v436
        %v438 = vrot.slane %v301, %v437
        %v439 = vlaneseq
        %v440 = vshrl.u32 %v439, 7
        %v441 = vsub.s32 2, %v440
        %v442 = vrot.slane %v301, %v441
        %v443 = vlaneseq
        %v444 = vshrl.u32 %v443, 7
        %v445 = vsub.s32 3, %v444
        %v446 = vrot.slane %v301, %v445
        %v447 = vlaneseq
        %v448 = vshrl.u32 %v447, 7
        %v449 = vsub.s32 4, %v448
        %v450 = vrot.slane %v301, %v449
        %v451 = vlaneseq
        %v452 = vshrl.u32 %v451, 7
        %v453 = vsub.s32 5, %v452
        %v454 = vrot.slane %v301, %v453
        %v455 = vlaneseq
        %v456 = vshrl.u32 %v455, 7
        %v457 = vsub.s32 6, %v456
        %v458 = vrot.slane %v301, %v457
        %v459 = vlaneseq
        %v460 = vshrl.u32 %v459, 7
        %v461 = vsub.s32 7, %v460
        %v462 = vrot.slane %v301, %v461
        %471 = vmatprep.subr.mxu0 0.0
        %v472 = vand.u32 %v317, 4294901760
        %473 = vmatpush1.msra.mxu0 %v472
        %474 = vmatprep.subr.mxu0 0.0
        %v475 = vand.u32 %v316, 4294901760
        %476 = vmatpush1.msra.mxu0 %v475
        %477 = vmatprep.subr.mxu0 0.0
        %v478 = vand.u32 %v315, 4294901760
        %479 = vmatpush1.msra.mxu0 %v478
        %480 = vmatprep.subr.mxu0 0.0
        %v481 = vand.u32 %v314, 4294901760
        %482 = vmatpush1.msra.mxu0 %v481
        %483 = vmatprep.subr.mxu0 0.0
        %v484 = vand.u32 %v313, 4294901760
        %485 = vmatpush1.msra.mxu0 %v484
        %486 = vmatprep.subr.mxu0 0.0
        %v487 = vand.u32 %v312, 4294901760
        %488 = vmatpush1.msra.mxu0 %v487
        %489 = vmatprep.subr.mxu0 0.0
        %v490 = vand.u32 %v311, 4294901760
        %491 = vmatpush1.msra.mxu0 %v490
        %492 = vmatprep.subr.mxu0 0.0
        %v493 = vand.u32 %v310, 4294901760
        %494 = vmatpush1.msra.mxu0 %v493
        %495 = vmatprep.subr.mxu0 0.0
        %v496 = vand.u32 %v309, 4294901760
        %497 = vmatpush1.msra.mxu0 %v496
        %498 = vmatprep.subr.mxu0 0.0
        %v499 = vand.u32 %v308, 4294901760
        %500 = vmatpush1.msra.mxu0 %v499
        %501 = vmatprep.subr.mxu0 0.0
        %v502 = vand.u32 %v307, 4294901760
        %503 = vmatpush1.msra.mxu0 %v502
        %504 = vmatprep.subr.mxu0 0.0
        %v505 = vand.u32 %v306, 4294901760
        %506 = vmatpush1.msra.mxu0 %v505
        %507 = vmatprep.subr.mxu0 0.0
        %v508 = vand.u32 %v305, 4294901760
        %509 = vmatpush1.msra.mxu0 %v508
        %510 = vmatprep.subr.mxu0 0.0
        %v511 = vand.u32 %v304, 4294901760
        %512 = vmatpush1.msra.mxu0 %v511
        %513 = vmatprep.subr.mxu0 0.0
        %v514 = vand.u32 %v303, 4294901760
        %515 = vmatpush1.msra.mxu0 %v514
        %516 = vmatprep.subr.mxu0 0.0
        %v517 = vand.u32 %v302, 4294901760
        %518 = vmatpush1.msra.mxu0 %v517
        %519 = vmatprep.subr.mxu0 0.0
        %v520 = vand.u32 %v333, 4294901760
        %521 = vmatpush2.msra.mxu0 %v520
        %522 = vmatprep.subr.mxu0 0.0
        %v523 = vand.u32 %v332, 4294901760
        %524 = vmatpush2.msra.mxu0 %v523
        %525 = vmatprep.subr.mxu0 0.0
        %v526 = vand.u32 %v331, 4294901760
        %527 = vmatpush2.msra.mxu0 %v526
        %528 = vmatprep.subr.mxu0 0.0
        %v529 = vand.u32 %v330, 4294901760
        %530 = vmatpush2.msra.mxu0 %v529
        %531 = vmatprep.subr.mxu0 0.0
        %v532 = vand.u32 %v329, 4294901760
        %533 = vmatpush2.msra.mxu0 %v532
        %534 = vmatprep.subr.mxu0 0.0
        %v535 = vand.u32 %v328, 4294901760
        %536 = vmatpush2.msra.mxu0 %v535
        %537 = vmatprep.subr.mxu0 0.0
        %v538 = vand.u32 %v327, 4294901760
        %539 = vmatpush2.msra.mxu0 %v538
        %540 = vmatprep.subr.mxu0 0.0
        %v541 = vand.u32 %v326, 4294901760
        %542 = vmatpush2.msra.mxu0 %v541
        %543 = vmatprep.subr.mxu0 0.0
        %v544 = vand.u32 %v325, 4294901760
        %545 = vmatpush2.msra.mxu0 %v544
        %546 = vmatprep.subr.mxu0 0.0
        %v547 = vand.u32 %v324, 4294901760
        %548 = vmatpush2.msra.mxu0 %v547
        %549 = vmatprep.subr.mxu0 0.0
        %v550 = vand.u32 %v323, 4294901760
        %551 = vmatpush2.msra.mxu0 %v550
        %552 = vmatprep.subr.mxu0 0.0
        %v553 = vand.u32 %v322, 4294901760
        %554 = vmatpush2.msra.mxu0 %v553
        %555 = vmatprep.subr.mxu0 0.0
        %v556 = vand.u32 %v321, 4294901760
        %557 = vmatpush2.msra.mxu0 %v556
        %558 = vmatprep.subr.mxu0 0.0
        %v559 = vand.u32 %v320, 4294901760
        %560 = vmatpush2.msra.mxu0 %v559
        %561 = vmatprep.subr.mxu0 0.0
        %v562 = vand.u32 %v319, 4294901760
        %563 = vmatpush2.msra.mxu0 %v562
        %564 = vmatprep.subr.mxu0 0.0
        %v565 = vand.u32 %v318, 4294901760
        %566 = vmatpush2.msra.mxu0 %v565
        %v567 = vand.u32 %v438, 4294901760
        %v568 = vsub.f32 %v438, %v567
        %v569 = vand.u32 %v568, 4294901760
        %v570 = vsub.f32 %v568, %v569
        %v571 = vand.u32 %v570, 4294901760
        %572 = vmatprep.mubr.f32.mxu0 %v571
        %v573 = vand.u32 %v434, 4294901760
        %v574 = vsub.f32 %v434, %v573
        %v575 = vand.u32 %v574, 4294901760
        %v576 = vsub.f32 %v574, %v575
        %v577 = vand.u32 %v576, 4294901760
        %578 = vmatmul.mubr.f32.gmra.mxu0 %v577
        %v579 = vpop.f32.mrf.mxu0
        %v580 = vadd.f32 0.0, %v579
        %v581 = vpop.f32.mrf.mxu0
        %582 = vdwg.mxu0
        %583 = vmatprep.subr.mxu0 0.0
        %v584 = vand.u32 %v317, 4294901760
        %v585 = vsub.f32 %v317, %v584
        %v586 = vand.u32 %v585, 4294901760
        %v587 = vsub.f32 %v585, %v586
        %v588 = vand.u32 %v587, 4294901760
        %589 = vmatpush1.msra.mxu0 %v588
        %590 = vmatprep.subr.mxu0 0.0
        %v591 = vand.u32 %v316, 4294901760
        %v592 = vsub.f32 %v316, %v591
        %v593 = vand.u32 %v592, 4294901760
        %v594 = vsub.f32 %v592, %v593
        %v595 = vand.u32 %v594, 4294901760
        %596 = vmatpush1.msra.mxu0 %v595
        %597 = vmatprep.subr.mxu0 0.0
        %v598 = vand.u32 %v315, 4294901760
        %v599 = vsub.f32 %v315, %v598
        %v600 = vand.u32 %v599, 4294901760
        %v601 = vsub.f32 %v599, %v600
        %v602 = vand.u32 %v601, 4294901760
        %603 = vmatpush1.msra.mxu0 %v602
        %604 = vmatprep.subr.mxu0 0.0
        %v605 = vand.u32 %v314, 4294901760
        %v606 = vsub.f32 %v314, %v605
        %v607 = vand.u32 %v606, 4294901760
        %v608 = vsub.f32 %v606, %v607
        %v609 = vand.u32 %v608, 4294901760
        %610 = vmatpush1.msra.mxu0 %v609
        %611 = vmatprep.subr.mxu0 0.0
        %v612 = vand.u32 %v313, 4294901760
        %v613 = vsub.f32 %v313, %v612
        %v614 = vand.u32 %v613, 4294901760
        %v615 = vsub.f32 %v613, %v614
        %v616 = vand.u32 %v615, 4294901760
        %617 = vmatpush1.msra.mxu0 %v616
        %618 = vmatprep.subr.mxu0 0.0
        %v619 = vand.u32 %v312, 4294901760
        %v620 = vsub.f32 %v312, %v619
        %v621 = vand.u32 %v620, 4294901760
        %v622 = vsub.f32 %v620, %v621
        %v623 = vand.u32 %v622, 4294901760
        %624 = vmatpush1.msra.mxu0 %v623
        %625 = vmatprep.subr.mxu0 0.0
        %v626 = vand.u32 %v311, 4294901760
        %v627 = vsub.f32 %v311, %v626
        %v628 = vand.u32 %v627, 4294901760
        %v629 = vsub.f32 %v627, %v628
        %v630 = vand.u32 %v629, 4294901760
        %631 = vmatpush1.msra.mxu0 %v630
        %632 = vmatprep.subr.mxu0 0.0
        %v633 = vand.u32 %v310, 4294901760
        %v634 = vsub.f32 %v310, %v633
        %v635 = vand.u32 %v634, 4294901760
        %v636 = vsub.f32 %v634, %v635
        %v637 = vand.u32 %v636, 4294901760
        %638 = vmatpush1.msra.mxu0 %v637
        %639 = vmatprep.subr.mxu0 0.0
        %v640 = vand.u32 %v309, 4294901760
        %v641 = vsub.f32 %v309, %v640
        %v642 = vand.u32 %v641, 4294901760
        %v643 = vsub.f32 %v641, %v642
        %v644 = vand.u32 %v643, 4294901760
        %645 = vmatpush1.msra.mxu0 %v644
        %646 = vmatprep.subr.mxu0 0.0
        %v647 = vand.u32 %v308, 4294901760
        %v648 = vsub.f32 %v308, %v647
        %v649 = vand.u32 %v648, 4294901760
        %v650 = vsub.f32 %v648, %v649
        %v651 = vand.u32 %v650, 4294901760
        %652 = vmatpush1.msra.mxu0 %v651
        %653 = vmatprep.subr.mxu0 0.0
        %v654 = vand.u32 %v307, 4294901760
        %v655 = vsub.f32 %v307, %v654
        %v656 = vand.u32 %v655, 4294901760
        %v657 = vsub.f32 %v655, %v656
        %v658 = vand.u32 %v657, 4294901760
        %659 = vmatpush1.msra.mxu0 %v658
        %660 = vmatprep.subr.mxu0 0.0
        %v661 = vand.u32 %v306, 4294901760
        %v662 = vsub.f32 %v306, %v661
        %v663 = vand.u32 %v662, 4294901760
        %v664 = vsub.f32 %v662, %v663
        %v665 = vand.u32 %v664, 4294901760
        %666 = vmatpush1.msra.mxu0 %v665
        %667 = vmatprep.subr.mxu0 0.0
        %v668 = vand.u32 %v305, 4294901760
        %v669 = vsub.f32 %v305, %v668
        %v670 = vand.u32 %v669, 4294901760
        %v671 = vsub.f32 %v669, %v670
        %v672 = vand.u32 %v671, 4294901760
        %673 = vmatpush1.msra.mxu0 %v672
        %674 = vmatprep.subr.mxu0 0.0
        %v675 = vand.u32 %v304, 4294901760
        %v676 = vsub.f32 %v304, %v675
        %v677 = vand.u32 %v676, 4294901760
        %v678 = vsub.f32 %v676, %v677
        %v679 = vand.u32 %v678, 4294901760
        %680 = vmatpush1.msra.mxu0 %v679
        %681 = vmatprep.subr.mxu0 0.0
        %v682 = vand.u32 %v303, 4294901760
        %v683 = vsub.f32 %v303, %v682
        %v684 = vand.u32 %v683, 4294901760
        %v685 = vsub.f32 %v683, %v684
        %v686 = vand.u32 %v685, 4294901760
        %687 = vmatpush1.msra.mxu0 %v686
        %688 = vmatprep.subr.mxu0 0.0
        %v689 = vand.u32 %v302, 4294901760
        %v690 = vsub.f32 %v302, %v689
        %v691 = vand.u32 %v690, 4294901760
        %v692 = vsub.f32 %v690, %v691
        %v693 = vand.u32 %v692, 4294901760
        %694 = vmatpush1.msra.mxu0 %v693
        %695 = vmatprep.subr.mxu0 0.0
        %v696 = vand.u32 %v333, 4294901760
        %v697 = vsub.f32 %v333, %v696
        %v698 = vand.u32 %v697, 4294901760
        %v699 = vsub.f32 %v697, %v698
        %v700 = vand.u32 %v699, 4294901760
        %701 = vmatpush2.msra.mxu0 %v700
        %702 = vmatprep.subr.mxu0 0.0
        %v703 = vand.u32 %v332, 4294901760
        %v704 = vsub.f32 %v332, %v703
        %v705 = vand.u32 %v704, 4294901760
        %v706 = vsub.f32 %v704, %v705
        %v707 = vand.u32 %v706, 4294901760
        %708 = vmatpush2.msra.mxu0 %v707
        %709 = vmatprep.subr.mxu0 0.0
        %v710 = vand.u32 %v331, 4294901760
        %v711 = vsub.f32 %v331, %v710
        %v712 = vand.u32 %v711, 4294901760
        %v713 = vsub.f32 %v711, %v712
        %v714 = vand.u32 %v713, 4294901760
        %715 = vmatpush2.msra.mxu0 %v714
        %716 = vmatprep.subr.mxu0 0.0
        %v717 = vand.u32 %v330, 4294901760
        %v718 = vsub.f32 %v330, %v717
        %v719 = vand.u32 %v718, 4294901760
        %v720 = vsub.f32 %v718, %v719
        %v721 = vand.u32 %v720, 4294901760
        %722 = vmatpush2.msra.mxu0 %v721
        %723 = vmatprep.subr.mxu0 0.0
        %v724 = vand.u32 %v329, 4294901760
        %v725 = vsub.f32 %v329, %v724
        %v726 = vand.u32 %v725, 4294901760
        %v727 = vsub.f32 %v725, %v726
        %v728 = vand.u32 %v727, 4294901760
        %729 = vmatpush2.msra.mxu0 %v728
        %730 = vmatprep.subr.mxu0 0.0
        %v731 = vand.u32 %v328, 4294901760
        %v732 = vsub.f32 %v328, %v731
        %v733 = vand.u32 %v732, 4294901760
        %v734 = vsub.f32 %v732, %v733
        %v735 = vand.u32 %v734, 4294901760
        %736 = vmatpush2.msra.mxu0 %v735
        %737 = vmatprep.subr.mxu0 0.0
        %v738 = vand.u32 %v327, 4294901760
        %v739 = vsub.f32 %v327, %v738
        %v740 = vand.u32 %v739, 4294901760
        %v741 = vsub.f32 %v739, %v740
        %v742 = vand.u32 %v741, 4294901760
        %743 = vmatpush2.msra.mxu0 %v742
        %744 = vmatprep.subr.mxu0 0.0
        %v745 = vand.u32 %v326, 4294901760
        %v746 = vsub.f32 %v326, %v745
        %v747 = vand.u32 %v746, 4294901760
        %v748 = vsub.f32 %v746, %v747
        %v749 = vand.u32 %v748, 4294901760
        %750 = vmatpush2.msra.mxu0 %v749
        %751 = vmatprep.subr.mxu0 0.0
        %v752 = vand.u32 %v325, 4294901760
        %v753 = vsub.f32 %v325, %v752
        %v754 = vand.u32 %v753, 4294901760
        %v755 = vsub.f32 %v753, %v754
        %v756 = vand.u32 %v755, 4294901760
        %757 = vmatpush2.msra.mxu0 %v756
        %758 = vmatprep.subr.mxu0 0.0
        %v759 = vand.u32 %v324, 4294901760
        %v760 = vsub.f32 %v324, %v759
        %v761 = vand.u32 %v760, 4294901760
        %v762 = vsub.f32 %v760, %v761
        %v763 = vand.u32 %v762, 4294901760
        %764 = vmatpush2.msra.mxu0 %v763
        %765 = vmatprep.subr.mxu0 0.0
        %v766 = vand.u32 %v323, 4294901760
        %v767 = vsub.f32 %v323, %v766
        %v768 = vand.u32 %v767, 4294901760
        %v769 = vsub.f32 %v767, %v768
        %v770 = vand.u32 %v769, 4294901760
        %771 = vmatpush2.msra.mxu0 %v770
        %772 = vmatprep.subr.mxu0 0.0
        %v773 = vand.u32 %v322, 4294901760
        %v774 = vsub.f32 %v322, %v773
        %v775 = vand.u32 %v774, 4294901760
        %v776 = vsub.f32 %v774, %v775
        %v777 = vand.u32 %v776, 4294901760
        %778 = vmatpush2.msra.mxu0 %v777
        %779 = vmatprep.subr.mxu0 0.0
        %v780 = vand.u32 %v321, 4294901760
        %v781 = vsub.f32 %v321, %v780
        %v782 = vand.u32 %v781, 4294901760
        %v783 = vsub.f32 %v781, %v782
        %v784 = vand.u32 %v783, 4294901760
        %785 = vmatpush2.msra.mxu0 %v784
        %786 = vmatprep.subr.mxu0 0.0
        %v787 = vand.u32 %v320, 4294901760
        %v788 = vsub.f32 %v320, %v787
        %v789 = vand.u32 %v788, 4294901760
        %v790 = vsub.f32 %v788, %v789
        %v791 = vand.u32 %v790, 4294901760
        %792 = vmatpush2.msra.mxu0 %v791
        %793 = vmatprep.subr.mxu0 0.0
        %v794 = vand.u32 %v319, 4294901760
        %v795 = vsub.f32 %v319, %v794
        %v796 = vand.u32 %v795, 4294901760
        %v797 = vsub.f32 %v795, %v796
        %v798 = vand.u32 %v797, 4294901760
        %799 = vmatpush2.msra.mxu0 %v798
        %800 = vmatprep.subr.mxu0 0.0
        %v801 = vand.u32 %v318, 4294901760
        %v802 = vsub.f32 %v318, %v801
        %v803 = vand.u32 %v802, 4294901760
        %v804 = vsub.f32 %v802, %v803
        %v805 = vand.u32 %v804, 4294901760
        %806 = vmatpush2.msra.mxu0 %v805
        %v807 = vand.u32 %v438, 4294901760
        %808 = vmatprep.mubr.f32.mxu0 %v807
        %v809 = vand.u32 %v434, 4294901760
        %810 = vmatmul.mubr.f32.gmra.mxu0 %v809
        %v811 = vpop.f32.mrf.mxu0
        %v812 = vadd.f32 %v580, %v811
        %v813 = vpop.f32.mrf.mxu0
        %814 = vdwg.mxu0
        %815 = vmatprep.subr.mxu0 0.0
        %v816 = vand.u32 %v317, 4294901760
        %v817 = vsub.f32 %v317, %v816
        %818 = vmatpush1.msra.mxu0 %v817
        %819 = vmatprep.subr.mxu0 0.0
        %v820 = vand.u32 %v316, 4294901760
        %v821 = vsub.f32 %v316, %v820
        %822 = vmatpush1.msra.mxu0 %v821
        %823 = vmatprep.subr.mxu0 0.0
        %v824 = vand.u32 %v315, 4294901760
        %v825 = vsub.f32 %v315, %v824
        %826 = vmatpush1.msra.mxu0 %v825
        %827 = vmatprep.subr.mxu0 0.0
        %v828 = vand.u32 %v314, 4294901760
        %v829 = vsub.f32 %v314, %v828
        %830 = vmatpush1.msra.mxu0 %v829
        %831 = vmatprep.subr.mxu0 0.0
        %v832 = vand.u32 %v313, 4294901760
        %v833 = vsub.f32 %v313, %v832
        %834 = vmatpush1.msra.mxu0 %v833
        %835 = vmatprep.subr.mxu0 0.0
        %v836 = vand.u32 %v312, 4294901760
        %v837 = vsub.f32 %v312, %v836
        %838 = vmatpush1.msra.mxu0 %v837
        %839 = vmatprep.subr.mxu0 0.0
        %v840 = vand.u32 %v311, 4294901760
        %v841 = vsub.f32 %v311, %v840
        %842 = vmatpush1.msra.mxu0 %v841
        %843 = vmatprep.subr.mxu0 0.0
        %v844 = vand.u32 %v310, 4294901760
        %v845 = vsub.f32 %v310, %v844
        %846 = vmatpush1.msra.mxu0 %v845
        %847 = vmatprep.subr.mxu0 0.0
        %v848 = vand.u32 %v309, 4294901760
        %v849 = vsub.f32 %v309, %v848
        %850 = vmatpush1.msra.mxu0 %v849
        %851 = vmatprep.subr.mxu0 0.0
        %v852 = vand.u32 %v308, 4294901760
        %v853 = vsub.f32 %v308, %v852
        %854 = vmatpush1.msra.mxu0 %v853
        %855 = vmatprep.subr.mxu0 0.0
        %v856 = vand.u32 %v307, 4294901760
        %v857 = vsub.f32 %v307, %v856
        %858 = vmatpush1.msra.mxu0 %v857
        %859 = vmatprep.subr.mxu0 0.0
        %v860 = vand.u32 %v306, 4294901760
        %v861 = vsub.f32 %v306, %v860
        %862 = vmatpush1.msra.mxu0 %v861
        %863 = vmatprep.subr.mxu0 0.0
        %v864 = vand.u32 %v305, 4294901760
        %v865 = vsub.f32 %v305, %v864
        %866 = vmatpush1.msra.mxu0 %v865
        %867 = vmatprep.subr.mxu0 0.0
        %v868 = vand.u32 %v304, 4294901760
        %v869 = vsub.f32 %v304, %v868
        %870 = vmatpush1.msra.mxu0 %v869
        %871 = vmatprep.subr.mxu0 0.0
        %v872 = vand.u32 %v303, 4294901760
        %v873 = vsub.f32 %v303, %v872
        %874 = vmatpush1.msra.mxu0 %v873
        %875 = vmatprep.subr.mxu0 0.0
        %v876 = vand.u32 %v302, 4294901760
        %v877 = vsub.f32 %v302, %v876
        %878 = vmatpush1.msra.mxu0 %v877
        %879 = vmatprep.subr.mxu0 0.0
        %v880 = vand.u32 %v333, 4294901760
        %v881 = vsub.f32 %v333, %v880
        %882 = vmatpush2.msra.mxu0 %v881
        %883 = vmatprep.subr.mxu0 0.0
        %v884 = vand.u32 %v332, 4294901760
        %v885 = vsub.f32 %v332, %v884
        %886 = vmatpush2.msra.mxu0 %v885
        %887 = vmatprep.subr.mxu0 0.0
        %v888 = vand.u32 %v331, 4294901760
        %v889 = vsub.f32 %v331, %v888
        %890 = vmatpush2.msra.mxu0 %v889
        %891 = vmatprep.subr.mxu0 0.0
        %v892 = vand.u32 %v330, 4294901760
        %v893 = vsub.f32 %v330, %v892
        %894 = vmatpush2.msra.mxu0 %v893
        %895 = vmatprep.subr.mxu0 0.0
        %v896 = vand.u32 %v329, 4294901760
        %v897 = vsub.f32 %v329, %v896
        %898 = vmatpush2.msra.mxu0 %v897
        %899 = vmatprep.subr.mxu0 0.0
        %v900 = vand.u32 %v328, 4294901760
        %v901 = vsub.f32 %v328, %v900
        %902 = vmatpush2.msra.mxu0 %v901
        %903 = vmatprep.subr.mxu0 0.0
        %v904 = vand.u32 %v327, 4294901760
        %v905 = vsub.f32 %v327, %v904
        %906 = vmatpush2.msra.mxu0 %v905
        %907 = vmatprep.subr.mxu0 0.0
        %v908 = vand.u32 %v326, 4294901760
        %v909 = vsub.f32 %v326, %v908
        %910 = vmatpush2.msra.mxu0 %v909
        %911 = vmatprep.subr.mxu0 0.0
        %v912 = vand.u32 %v325, 4294901760
        %v913 = vsub.f32 %v325, %v912
        %914 = vmatpush2.msra.mxu0 %v913
        %915 = vmatprep.subr.mxu0 0.0
        %v916 = vand.u32 %v324, 4294901760
        %v917 = vsub.f32 %v324, %v916
        %918 = vmatpush2.msra.mxu0 %v917
        %919 = vmatprep.subr.mxu0 0.0
        %v920 = vand.u32 %v323, 4294901760
        %v921 = vsub.f32 %v323, %v920
        %922 = vmatpush2.msra.mxu0 %v921
        %923 = vmatprep.subr.mxu0 0.0
        %v924 = vand.u32 %v322, 4294901760
        %v925 = vsub.f32 %v322, %v924
        %926 = vmatpush2.msra.mxu0 %v925
        %927 = vmatprep.subr.mxu0 0.0
        %v928 = vand.u32 %v321, 4294901760
        %v929 = vsub.f32 %v321, %v928
        %930 = vmatpush2.msra.mxu0 %v929
        %931 = vmatprep.subr.mxu0 0.0
        %v932 = vand.u32 %v320, 4294901760
        %v933 = vsub.f32 %v320, %v932
        %934 = vmatpush2.msra.mxu0 %v933
        %935 = vmatprep.subr.mxu0 0.0
        %v936 = vand.u32 %v319, 4294901760
        %v937 = vsub.f32 %v319, %v936
        %938 = vmatpush2.msra.mxu0 %v937
        %939 = vmatprep.subr.mxu0 0.0
        %v940 = vand.u32 %v318, 4294901760
        %v941 = vsub.f32 %v318, %v940
        %942 = vmatpush2.msra.mxu0 %v941
        %v943 = vand.u32 %v438, 4294901760
        %v944 = vsub.f32 %v438, %v943
        %945 = vmatprep.mubr.f32.mxu0 %v944
        %v946 = vand.u32 %v434, 4294901760
        %v947 = vsub.f32 %v434, %v946
        %948 = vmatmul.mubr.f32.gmra.mxu0 %v947
        %v949 = vpop.f32.mrf.mxu0
        %v950 = vadd.f32 %v812, %v949
        %v951 = vpop.f32.mrf.mxu0
        %952 = vdwg.mxu0
        %953 = vmatprep.subr.mxu0 0.0
        %v954 = vand.u32 %v317, 4294901760
        %955 = vmatpush1.msra.mxu0 %v954
        %956 = vmatprep.subr.mxu0 0.0
        %v957 = vand.u32 %v316, 4294901760
        %958 = vmatpush1.msra.mxu0 %v957
        %959 = vmatprep.subr.mxu0 0.0
        %v960 = vand.u32 %v315, 4294901760
        %961 = vmatpush1.msra.mxu0 %v960
        %962 = vmatprep.subr.mxu0 0.0
        %v963 = vand.u32 %v314, 4294901760
        %964 = vmatpush1.msra.mxu0 %v963
        %965 = vmatprep.subr.mxu0 0.0
        %v966 = vand.u32 %v313, 4294901760
        %967 = vmatpush1.msra.mxu0 %v966
        %968 = vmatprep.subr.mxu0 0.0
        %v969 = vand.u32 %v312, 4294901760
        %970 = vmatpush1.msra.mxu0 %v969
        %971 = vmatprep.subr.mxu0 0.0
        %v972 = vand.u32 %v311, 4294901760
        %973 = vmatpush1.msra.mxu0 %v972
        %974 = vmatprep.subr.mxu0 0.0
        %v975 = vand.u32 %v310, 4294901760
        %976 = vmatpush1.msra.mxu0 %v975
        %977 = vmatprep.subr.mxu0 0.0
        %v978 = vand.u32 %v309, 4294901760
        %979 = vmatpush1.msra.mxu0 %v978
        %980 = vmatprep.subr.mxu0 0.0
        %v981 = vand.u32 %v308, 4294901760
        %982 = vmatpush1.msra.mxu0 %v981
        %983 = vmatprep.subr.mxu0 0.0
        %v984 = vand.u32 %v307, 4294901760
        %985 = vmatpush1.msra.mxu0 %v984
        %986 = vmatprep.subr.mxu0 0.0
        %v987 = vand.u32 %v306, 4294901760
        %988 = vmatpush1.msra.mxu0 %v987
        %989 = vmatprep.subr.mxu0 0.0
        %v990 = vand.u32 %v305, 4294901760
        %991 = vmatpush1.msra.mxu0 %v990
        %992 = vmatprep.subr.mxu0 0.0
        %v993 = vand.u32 %v304, 4294901760
        %994 = vmatpush1.msra.mxu0 %v993
        %995 = vmatprep.subr.mxu0 0.0
        %v996 = vand.u32 %v303, 4294901760
        %997 = vmatpush1.msra.mxu0 %v996
        %998 = vmatprep.subr.mxu0 0.0
        %v999 = vand.u32 %v302, 4294901760
        %1000 = vmatpush1.msra.mxu0 %v999
        %1001 = vmatprep.subr.mxu0 0.0
        %v1002 = vand.u32 %v333, 4294901760
        %1003 = vmatpush2.msra.mxu0 %v1002
        %1004 = vmatprep.subr.mxu0 0.0
        %v1005 = vand.u32 %v332, 4294901760
        %1006 = vmatpush2.msra.mxu0 %v1005
        %1007 = vmatprep.subr.mxu0 0.0
        %v1008 = vand.u32 %v331, 4294901760
        %1009 = vmatpush2.msra.mxu0 %v1008
        %1010 = vmatprep.subr.mxu0 0.0
        %v1011 = vand.u32 %v330, 4294901760
        %1012 = vmatpush2.msra.mxu0 %v1011
        %1013 = vmatprep.subr.mxu0 0.0
        %v1014 = vand.u32 %v329, 4294901760
        %1015 = vmatpush2.msra.mxu0 %v1014
        %1016 = vmatprep.subr.mxu0 0.0
        %v1017 = vand.u32 %v328, 4294901760
        %1018 = vmatpush2.msra.mxu0 %v1017
        %1019 = vmatprep.subr.mxu0 0.0
        %v1020 = vand.u32 %v327, 4294901760
        %1021 = vmatpush2.msra.mxu0 %v1020
        %1022 = vmatprep.subr.mxu0 0.0
        %v1023 = vand.u32 %v326, 4294901760
        %1024 = vmatpush2.msra.mxu0 %v1023
        %1025 = vmatprep.subr.mxu0 0.0
        %v1026 = vand.u32 %v325, 4294901760
        %1027 = vmatpush2.msra.mxu0 %v1026
        %1028 = vmatprep.subr.mxu0 0.0
        %v1029 = vand.u32 %v324, 4294901760
        %1030 = vmatpush2.msra.mxu0 %v1029
        %1031 = vmatprep.subr.mxu0 0.0
        %v1032 = vand.u32 %v323, 4294901760
        %1033 = vmatpush2.msra.mxu0 %v1032
        %1034 = vmatprep.subr.mxu0 0.0
        %v1035 = vand.u32 %v322, 4294901760
        %1036 = vmatpush2.msra.mxu0 %v1035
        %1037 = vmatprep.subr.mxu0 0.0
        %v1038 = vand.u32 %v321, 4294901760
        %1039 = vmatpush2.msra.mxu0 %v1038
        %1040 = vmatprep.subr.mxu0 0.0
        %v1041 = vand.u32 %v320, 4294901760
        %1042 = vmatpush2.msra.mxu0 %v1041
        %1043 = vmatprep.subr.mxu0 0.0
        %v1044 = vand.u32 %v319, 4294901760
        %1045 = vmatpush2.msra.mxu0 %v1044
        %1046 = vmatprep.subr.mxu0 0.0
        %v1047 = vand.u32 %v318, 4294901760
        %1048 = vmatpush2.msra.mxu0 %v1047
        %v1049 = vand.u32 %v438, 4294901760
        %v1050 = vsub.f32 %v438, %v1049
        %v1051 = vand.u32 %v1050, 4294901760
        %1052 = vmatprep.mubr.f32.mxu0 %v1051
        %v1053 = vand.u32 %v434, 4294901760
        %v1054 = vsub.f32 %v434, %v1053
        %v1055 = vand.u32 %v1054, 4294901760
        %1056 = vmatmul.mubr.f32.gmra.mxu0 %v1055
        %v1057 = vpop.f32.mrf.mxu0
        %v1058 = vadd.f32 %v950, %v1057
        %v1059 = vpop.f32.mrf.mxu0
        %1060 = vdwg.mxu0
        %1061 = vmatprep.subr.mxu0 0.0
        %v1062 = vand.u32 %v317, 4294901760
        %v1063 = vsub.f32 %v317, %v1062
        %v1064 = vand.u32 %v1063, 4294901760
        %1065 = vmatpush1.msra.mxu0 %v1064
        %1066 = vmatprep.subr.mxu0 0.0
        %v1067 = vand.u32 %v316, 4294901760
        %v1068 = vsub.f32 %v316, %v1067
        %v1069 = vand.u32 %v1068, 4294901760
        %1070 = vmatpush1.msra.mxu0 %v1069
        %1071 = vmatprep.subr.mxu0 0.0
        %v1072 = vand.u32 %v315, 4294901760
        %v1073 = vsub.f32 %v315, %v1072
        %v1074 = vand.u32 %v1073, 4294901760
        %1075 = vmatpush1.msra.mxu0 %v1074
        %1076 = vmatprep.subr.mxu0 0.0
        %v1077 = vand.u32 %v314, 4294901760
        %v1078 = vsub.f32 %v314, %v1077
        %v1079 = vand.u32 %v1078, 4294901760
        %1080 = vmatpush1.msra.mxu0 %v1079
        %1081 = vmatprep.subr.mxu0 0.0
        %v1082 = vand.u32 %v313, 4294901760
        %v1083 = vsub.f32 %v313, %v1082
        %v1084 = vand.u32 %v1083, 4294901760
        %1085 = vmatpush1.msra.mxu0 %v1084
        %1086 = vmatprep.subr.mxu0 0.0
        %v1087 = vand.u32 %v312, 4294901760
        %v1088 = vsub.f32 %v312, %v1087
        %v1089 = vand.u32 %v1088, 4294901760
        %1090 = vmatpush1.msra.mxu0 %v1089
        %1091 = vmatprep.subr.mxu0 0.0
        %v1092 = vand.u32 %v311, 4294901760
        %v1093 = vsub.f32 %v311, %v1092
        %v1094 = vand.u32 %v1093, 4294901760
        %1095 = vmatpush1.msra.mxu0 %v1094
        %1096 = vmatprep.subr.mxu0 0.0
        %v1097 = vand.u32 %v310, 4294901760
        %v1098 = vsub.f32 %v310, %v1097
        %v1099 = vand.u32 %v1098, 4294901760
        %1100 = vmatpush1.msra.mxu0 %v1099
        %1101 = vmatprep.subr.mxu0 0.0
        %v1102 = vand.u32 %v309, 4294901760
        %v1103 = vsub.f32 %v309, %v1102
        %v1104 = vand.u32 %v1103, 4294901760
        %1105 = vmatpush1.msra.mxu0 %v1104
        %1106 = vmatprep.subr.mxu0 0.0
        %v1107 = vand.u32 %v308, 4294901760
        %v1108 = vsub.f32 %v308, %v1107
        %v1109 = vand.u32 %v1108, 4294901760
        %1110 = vmatpush1.msra.mxu0 %v1109
        %1111 = vmatprep.subr.mxu0 0.0
        %v1112 = vand.u32 %v307, 4294901760
        %v1113 = vsub.f32 %v307, %v1112
        %v1114 = vand.u32 %v1113, 4294901760
        %1115 = vmatpush1.msra.mxu0 %v1114
        %1116 = vmatprep.subr.mxu0 0.0
        %v1117 = vand.u32 %v306, 4294901760
        %v1118 = vsub.f32 %v306, %v1117
        %v1119 = vand.u32 %v1118, 4294901760
        %1120 = vmatpush1.msra.mxu0 %v1119
        %1121 = vmatprep.subr.mxu0 0.0
        %v1122 = vand.u32 %v305, 4294901760
        %v1123 = vsub.f32 %v305, %v1122
        %v1124 = vand.u32 %v1123, 4294901760
        %1125 = vmatpush1.msra.mxu0 %v1124
        %1126 = vmatprep.subr.mxu0 0.0
        %v1127 = vand.u32 %v304, 4294901760
        %v1128 = vsub.f32 %v304, %v1127
        %v1129 = vand.u32 %v1128, 4294901760
        %1130 = vmatpush1.msra.mxu0 %v1129
        %1131 = vmatprep.subr.mxu0 0.0
        %v1132 = vand.u32 %v303, 4294901760
        %v1133 = vsub.f32 %v303, %v1132
        %v1134 = vand.u32 %v1133, 4294901760
        %1135 = vmatpush1.msra.mxu0 %v1134
        %1136 = vmatprep.subr.mxu0 0.0
        %v1137 = vand.u32 %v302, 4294901760
        %v1138 = vsub.f32 %v302, %v1137
        %v1139 = vand.u32 %v1138, 4294901760
        %1140 = vmatpush1.msra.mxu0 %v1139
        %1141 = vmatprep.subr.mxu0 0.0
        %v1142 = vand.u32 %v333, 4294901760
        %v1143 = vsub.f32 %v333, %v1142
        %v1144 = vand.u32 %v1143, 4294901760
        %1145 = vmatpush2.msra.mxu0 %v1144
        %1146 = vmatprep.subr.mxu0 0.0
        %v1147 = vand.u32 %v332, 4294901760
        %v1148 = vsub.f32 %v332, %v1147
        %v1149 = vand.u32 %v1148, 4294901760
        %1150 = vmatpush2.msra.mxu0 %v1149
        %1151 = vmatprep.subr.mxu0 0.0
        %v1152 = vand.u32 %v331, 4294901760
        %v1153 = vsub.f32 %v331, %v1152
        %v1154 = vand.u32 %v1153, 4294901760
        %1155 = vmatpush2.msra.mxu0 %v1154
        %1156 = vmatprep.subr.mxu0 0.0
        %v1157 = vand.u32 %v330, 4294901760
        %v1158 = vsub.f32 %v330, %v1157
        %v1159 = vand.u32 %v1158, 4294901760
        %1160 = vmatpush2.msra.mxu0 %v1159
        %1161 = vmatprep.subr.mxu0 0.0
        %v1162 = vand.u32 %v329, 4294901760
        %v1163 = vsub.f32 %v329, %v1162
        %v1164 = vand.u32 %v1163, 4294901760
        %1165 = vmatpush2.msra.mxu0 %v1164
        %1166 = vmatprep.subr.mxu0 0.0
        %v1167 = vand.u32 %v328, 4294901760
        %v1168 = vsub.f32 %v328, %v1167
        %v1169 = vand.u32 %v1168, 4294901760
        %1170 = vmatpush2.msra.mxu0 %v1169
        %1171 = vmatprep.subr.mxu0 0.0
        %v1172 = vand.u32 %v327, 4294901760
        %v1173 = vsub.f32 %v327, %v1172
        %v1174 = vand.u32 %v1173, 4294901760
        %1175 = vmatpush2.msra.mxu0 %v1174
        %1176 = vmatprep.subr.mxu0 0.0
        %v1177 = vand.u32 %v326, 4294901760
        %v1178 = vsub.f32 %v326, %v1177
        %v1179 = vand.u32 %v1178, 4294901760
        %1180 = vmatpush2.msra.mxu0 %v1179
        %1181 = vmatprep.subr.mxu0 0.0
        %v1182 = vand.u32 %v325, 4294901760
        %v1183 = vsub.f32 %v325, %v1182
        %v1184 = vand.u32 %v1183, 4294901760
        %1185 = vmatpush2.msra.mxu0 %v1184
        %1186 = vmatprep.subr.mxu0 0.0
        %v1187 = vand.u32 %v324, 4294901760
        %v1188 = vsub.f32 %v324, %v1187
        %v1189 = vand.u32 %v1188, 4294901760
        %1190 = vmatpush2.msra.mxu0 %v1189
        %1191 = vmatprep.subr.mxu0 0.0
        %v1192 = vand.u32 %v323, 4294901760
        %v1193 = vsub.f32 %v323, %v1192
        %v1194 = vand.u32 %v1193, 4294901760
        %1195 = vmatpush2.msra.mxu0 %v1194
        %1196 = vmatprep.subr.mxu0 0.0
        %v1197 = vand.u32 %v322, 4294901760
        %v1198 = vsub.f32 %v322, %v1197
        %v1199 = vand.u32 %v1198, 4294901760
        %1200 = vmatpush2.msra.mxu0 %v1199
        %1201 = vmatprep.subr.mxu0 0.0
        %v1202 = vand.u32 %v321, 4294901760
        %v1203 = vsub.f32 %v321, %v1202
        %v1204 = vand.u32 %v1203, 4294901760
        %1205 = vmatpush2.msra.mxu0 %v1204
        %1206 = vmatprep.subr.mxu0 0.0
        %v1207 = vand.u32 %v320, 4294901760
        %v1208 = vsub.f32 %v320, %v1207
        %v1209 = vand.u32 %v1208, 4294901760
        %1210 = vmatpush2.msra.mxu0 %v1209
        %1211 = vmatprep.subr.mxu0 0.0
        %v1212 = vand.u32 %v319, 4294901760
        %v1213 = vsub.f32 %v319, %v1212
        %v1214 = vand.u32 %v1213, 4294901760
        %1215 = vmatpush2.msra.mxu0 %v1214
        %1216 = vmatprep.subr.mxu0 0.0
        %v1217 = vand.u32 %v318, 4294901760
        %v1218 = vsub.f32 %v318, %v1217
        %v1219 = vand.u32 %v1218, 4294901760
        %1220 = vmatpush2.msra.mxu0 %v1219
        %v1221 = vand.u32 %v438, 4294901760
        %1222 = vmatprep.mubr.f32.mxu0 %v1221
        %v1223 = vand.u32 %v434, 4294901760
        %1224 = vmatmul.mubr.f32.gmra.mxu0 %v1223
        %v1225 = vpop.f32.mrf.mxu0
        %v1226 = vadd.f32 %v1058, %v1225
        %v1227 = vpop.f32.mrf.mxu0
        %1228 = vdwg.mxu0
        %1229 = vmatprep.subr.mxu0 0.0
        %v1230 = vand.u32 %v317, 4294901760
        %1231 = vmatpush1.msra.mxu0 %v1230
        %1232 = vmatprep.subr.mxu0 0.0
        %v1233 = vand.u32 %v316, 4294901760
        %1234 = vmatpush1.msra.mxu0 %v1233
        %1235 = vmatprep.subr.mxu0 0.0
        %v1236 = vand.u32 %v315, 4294901760
        %1237 = vmatpush1.msra.mxu0 %v1236
        %1238 = vmatprep.subr.mxu0 0.0
        %v1239 = vand.u32 %v314, 4294901760
        %1240 = vmatpush1.msra.mxu0 %v1239
        %1241 = vmatprep.subr.mxu0 0.0
        %v1242 = vand.u32 %v313, 4294901760
        %1243 = vmatpush1.msra.mxu0 %v1242
        %1244 = vmatprep.subr.mxu0 0.0
        %v1245 = vand.u32 %v312, 4294901760
        %1246 = vmatpush1.msra.mxu0 %v1245
        %1247 = vmatprep.subr.mxu0 0.0
        %v1248 = vand.u32 %v311, 4294901760
        %1249 = vmatpush1.msra.mxu0 %v1248
        %1250 = vmatprep.subr.mxu0 0.0
        %v1251 = vand.u32 %v310, 4294901760
        %1252 = vmatpush1.msra.mxu0 %v1251
        %1253 = vmatprep.subr.mxu0 0.0
        %v1254 = vand.u32 %v309, 4294901760
        %1255 = vmatpush1.msra.mxu0 %v1254
        %1256 = vmatprep.subr.mxu0 0.0
        %v1257 = vand.u32 %v308, 4294901760
        %1258 = vmatpush1.msra.mxu0 %v1257
        %1259 = vmatprep.subr.mxu0 0.0
        %v1260 = vand.u32 %v307, 4294901760
        %1261 = vmatpush1.msra.mxu0 %v1260
        %1262 = vmatprep.subr.mxu0 0.0
        %v1263 = vand.u32 %v306, 4294901760
        %1264 = vmatpush1.msra.mxu0 %v1263
        %1265 = vmatprep.subr.mxu0 0.0
        %v1266 = vand.u32 %v305, 4294901760
        %1267 = vmatpush1.msra.mxu0 %v1266
        %1268 = vmatprep.subr.mxu0 0.0
        %v1269 = vand.u32 %v304, 4294901760
        %1270 = vmatpush1.msra.mxu0 %v1269
        %1271 = vmatprep.subr.mxu0 0.0
        %v1272 = vand.u32 %v303, 4294901760
        %1273 = vmatpush1.msra.mxu0 %v1272
        %1274 = vmatprep.subr.mxu0 0.0
        %v1275 = vand.u32 %v302, 4294901760
        %1276 = vmatpush1.msra.mxu0 %v1275
        %1277 = vmatprep.subr.mxu0 0.0
        %v1278 = vand.u32 %v333, 4294901760
        %1279 = vmatpush2.msra.mxu0 %v1278
        %1280 = vmatprep.subr.mxu0 0.0
        %v1281 = vand.u32 %v332, 4294901760
        %1282 = vmatpush2.msra.mxu0 %v1281
        %1283 = vmatprep.subr.mxu0 0.0
        %v1284 = vand.u32 %v331, 4294901760
        %1285 = vmatpush2.msra.mxu0 %v1284
        %1286 = vmatprep.subr.mxu0 0.0
        %v1287 = vand.u32 %v330, 4294901760
        %1288 = vmatpush2.msra.mxu0 %v1287
        %1289 = vmatprep.subr.mxu0 0.0
        %v1290 = vand.u32 %v329, 4294901760
        %1291 = vmatpush2.msra.mxu0 %v1290
        %1292 = vmatprep.subr.mxu0 0.0
        %v1293 = vand.u32 %v328, 4294901760
        %1294 = vmatpush2.msra.mxu0 %v1293
        %1295 = vmatprep.subr.mxu0 0.0
        %v1296 = vand.u32 %v327, 4294901760
        %1297 = vmatpush2.msra.mxu0 %v1296
        %1298 = vmatprep.subr.mxu0 0.0
        %v1299 = vand.u32 %v326, 4294901760
        %1300 = vmatpush2.msra.mxu0 %v1299
        %1301 = vmatprep.subr.mxu0 0.0
        %v1302 = vand.u32 %v325, 4294901760
        %1303 = vmatpush2.msra.mxu0 %v1302
        %1304 = vmatprep.subr.mxu0 0.0
        %v1305 = vand.u32 %v324, 4294901760
        %1306 = vmatpush2.msra.mxu0 %v1305
        %1307 = vmatprep.subr.mxu0 0.0
        %v1308 = vand.u32 %v323, 4294901760
        %1309 = vmatpush2.msra.mxu0 %v1308
        %1310 = vmatprep.subr.mxu0 0.0
        %v1311 = vand.u32 %v322, 4294901760
        %1312 = vmatpush2.msra.mxu0 %v1311
        %1313 = vmatprep.subr.mxu0 0.0
        %v1314 = vand.u32 %v321, 4294901760
        %1315 = vmatpush2.msra.mxu0 %v1314
        %1316 = vmatprep.subr.mxu0 0.0
        %v1317 = vand.u32 %v320, 4294901760
        %1318 = vmatpush2.msra.mxu0 %v1317
        %1319 = vmatprep.subr.mxu0 0.0
        %v1320 = vand.u32 %v319, 4294901760
        %1321 = vmatpush2.msra.mxu0 %v1320
        %1322 = vmatprep.subr.mxu0 0.0
        %v1323 = vand.u32 %v318, 4294901760
        %1324 = vmatpush2.msra.mxu0 %v1323
        %v1325 = vand.u32 %v438, 4294901760
        %1326 = vmatprep.mubr.f32.mxu0 %v1325
        %v1327 = vand.u32 %v434, 4294901760
        %1328 = vmatmul.mubr.f32.gmra.mxu0 %v1327
        %v1329 = vpop.f32.mrf.mxu0
        %v1330 = vadd.f32 %v1226, %v1329
        %v1331 = vpop.f32.mrf.mxu0
        %1332 = vdwg.mxu0
        %1333 = vmatprep.subr.mxu0 0.0
        %v1334 = vand.u32 %v349, 4294901760
        %1335 = vmatpush1.msra.mxu0 %v1334
        %1336 = vmatprep.subr.mxu0 0.0
        %v1337 = vand.u32 %v348, 4294901760
        %1338 = vmatpush1.msra.mxu0 %v1337
        %1339 = vmatprep.subr.mxu0 0.0
        %v1340 = vand.u32 %v347, 4294901760
        %1341 = vmatpush1.msra.mxu0 %v1340
        %1342 = vmatprep.subr.mxu0 0.0
        %v1343 = vand.u32 %v346, 4294901760
        %1344 = vmatpush1.msra.mxu0 %v1343
        %1345 = vmatprep.subr.mxu0 0.0
        %v1346 = vand.u32 %v345, 4294901760
        %1347 = vmatpush1.msra.mxu0 %v1346
        %1348 = vmatprep.subr.mxu0 0.0
        %v1349 = vand.u32 %v344, 4294901760
        %1350 = vmatpush1.msra.mxu0 %v1349
        %1351 = vmatprep.subr.mxu0 0.0
        %v1352 = vand.u32 %v343, 4294901760
        %1353 = vmatpush1.msra.mxu0 %v1352
        %1354 = vmatprep.subr.mxu0 0.0
        %v1355 = vand.u32 %v342, 4294901760
        %1356 = vmatpush1.msra.mxu0 %v1355
        %1357 = vmatprep.subr.mxu0 0.0
        %v1358 = vand.u32 %v341, 4294901760
        %1359 = vmatpush1.msra.mxu0 %v1358
        %1360 = vmatprep.subr.mxu0 0.0
        %v1361 = vand.u32 %v340, 4294901760
        %1362 = vmatpush1.msra.mxu0 %v1361
        %1363 = vmatprep.subr.mxu0 0.0
        %v1364 = vand.u32 %v339, 4294901760
        %1365 = vmatpush1.msra.mxu0 %v1364
        %1366 = vmatprep.subr.mxu0 0.0
        %v1367 = vand.u32 %v338, 4294901760
        %1368 = vmatpush1.msra.mxu0 %v1367
        %1369 = vmatprep.subr.mxu0 0.0
        %v1370 = vand.u32 %v337, 4294901760
        %1371 = vmatpush1.msra.mxu0 %v1370
        %1372 = vmatprep.subr.mxu0 0.0
        %v1373 = vand.u32 %v336, 4294901760
        %1374 = vmatpush1.msra.mxu0 %v1373
        %1375 = vmatprep.subr.mxu0 0.0
        %v1376 = vand.u32 %v335, 4294901760
        %1377 = vmatpush1.msra.mxu0 %v1376
        %1378 = vmatprep.subr.mxu0 0.0
        %v1379 = vand.u32 %v334, 4294901760
        %1380 = vmatpush1.msra.mxu0 %v1379
        %1381 = vmatprep.subr.mxu0 0.0
        %v1382 = vand.u32 %v365, 4294901760
        %1383 = vmatpush2.msra.mxu0 %v1382
        %1384 = vmatprep.subr.mxu0 0.0
        %v1385 = vand.u32 %v364, 4294901760
        %1386 = vmatpush2.msra.mxu0 %v1385
        %1387 = vmatprep.subr.mxu0 0.0
        %v1388 = vand.u32 %v363, 4294901760
        %1389 = vmatpush2.msra.mxu0 %v1388
        %1390 = vmatprep.subr.mxu0 0.0
        %v1391 = vand.u32 %v362, 4294901760
        %1392 = vmatpush2.msra.mxu0 %v1391
        %1393 = vmatprep.subr.mxu0 0.0
        %v1394 = vand.u32 %v361, 4294901760
        %1395 = vmatpush2.msra.mxu0 %v1394
        %1396 = vmatprep.subr.mxu0 0.0
        %v1397 = vand.u32 %v360, 4294901760
        %1398 = vmatpush2.msra.mxu0 %v1397
        %1399 = vmatprep.subr.mxu0 0.0
        %v1400 = vand.u32 %v359, 4294901760
        %1401 = vmatpush2.msra.mxu0 %v1400
        %1402 = vmatprep.subr.mxu0 0.0
        %v1403 = vand.u32 %v358, 4294901760
        %1404 = vmatpush2.msra.mxu0 %v1403
        %1405 = vmatprep.subr.mxu0 0.0
        %v1406 = vand.u32 %v357, 4294901760
        %1407 = vmatpush2.msra.mxu0 %v1406
        %1408 = vmatprep.subr.mxu0 0.0
        %v1409 = vand.u32 %v356, 4294901760
        %1410 = vmatpush2.msra.mxu0 %v1409
        %1411 = vmatprep.subr.mxu0 0.0
        %v1412 = vand.u32 %v355, 4294901760
        %1413 = vmatpush2.msra.mxu0 %v1412
        %1414 = vmatprep.subr.mxu0 0.0
        %v1415 = vand.u32 %v354, 4294901760
        %1416 = vmatpush2.msra.mxu0 %v1415
        %1417 = vmatprep.subr.mxu0 0.0
        %v1418 = vand.u32 %v353, 4294901760
        %1419 = vmatpush2.msra.mxu0 %v1418
        %1420 = vmatprep.subr.mxu0 0.0
        %v1421 = vand.u32 %v352, 4294901760
        %1422 = vmatpush2.msra.mxu0 %v1421
        %1423 = vmatprep.subr.mxu0 0.0
        %v1424 = vand.u32 %v351, 4294901760
        %1425 = vmatpush2.msra.mxu0 %v1424
        %1426 = vmatprep.subr.mxu0 0.0
        %v1427 = vand.u32 %v350, 4294901760
        %1428 = vmatpush2.msra.mxu0 %v1427
        %v1429 = vand.u32 %v446, 4294901760
        %v1430 = vsub.f32 %v446, %v1429
        %v1431 = vand.u32 %v1430, 4294901760
        %v1432 = vsub.f32 %v1430, %v1431
        %v1433 = vand.u32 %v1432, 4294901760
        %1434 = vmatprep.mubr.f32.mxu0 %v1433
        %v1435 = vand.u32 %v442, 4294901760
        %v1436 = vsub.f32 %v442, %v1435
        %v1437 = vand.u32 %v1436, 4294901760
        %v1438 = vsub.f32 %v1436, %v1437
        %v1439 = vand.u32 %v1438, 4294901760
        %1440 = vmatmul.mubr.f32.gmra.mxu0 %v1439
        %v1441 = vpop.f32.mrf.mxu0
        %v1442 = vadd.f32 %v1330, %v1441
        %v1443 = vpop.f32.mrf.mxu0
        %1444 = vdwg.mxu0
        %1445 = vmatprep.subr.mxu0 0.0
        %v1446 = vand.u32 %v349, 4294901760
        %v1447 = vsub.f32 %v349, %v1446
        %v1448 = vand.u32 %v1447, 4294901760
        %v1449 = vsub.f32 %v1447, %v1448
        %v1450 = vand.u32 %v1449, 4294901760
        %1451 = vmatpush1.msra.mxu0 %v1450
        %1452 = vmatprep.subr.mxu0 0.0
        %v1453 = vand.u32 %v348, 4294901760
        %v1454 = vsub.f32 %v348, %v1453
        %v1455 = vand.u32 %v1454, 4294901760
        %v1456 = vsub.f32 %v1454, %v1455
        %v1457 = vand.u32 %v1456, 4294901760
        %1458 = vmatpush1.msra.mxu0 %v1457
        %1459 = vmatprep.subr.mxu0 0.0
        %v1460 = vand.u32 %v347, 4294901760
        %v1461 = vsub.f32 %v347, %v1460
        %v1462 = vand.u32 %v1461, 4294901760
        %v1463 = vsub.f32 %v1461, %v1462
        %v1464 = vand.u32 %v1463, 4294901760
        %1465 = vmatpush1.msra.mxu0 %v1464
        %1466 = vmatprep.subr.mxu0 0.0
        %v1467 = vand.u32 %v346, 4294901760
        %v1468 = vsub.f32 %v346, %v1467
        %v1469 = vand.u32 %v1468, 4294901760
        %v1470 = vsub.f32 %v1468, %v1469
        %v1471 = vand.u32 %v1470, 4294901760
        %1472 = vmatpush1.msra.mxu0 %v1471
        %1473 = vmatprep.subr.mxu0 0.0
        %v1474 = vand.u32 %v345, 4294901760
        %v1475 = vsub.f32 %v345, %v1474
        %v1476 = vand.u32 %v1475, 4294901760
        %v1477 = vsub.f32 %v1475, %v1476
        %v1478 = vand.u32 %v1477, 4294901760
        %1479 = vmatpush1.msra.mxu0 %v1478
        %1480 = vmatprep.subr.mxu0 0.0
        %v1481 = vand.u32 %v344, 4294901760
        %v1482 = vsub.f32 %v344, %v1481
        %v1483 = vand.u32 %v1482, 4294901760
        %v1484 = vsub.f32 %v1482, %v1483
        %v1485 = vand.u32 %v1484, 4294901760
        %1486 = vmatpush1.msra.mxu0 %v1485
        %1487 = vmatprep.subr.mxu0 0.0
        %v1488 = vand.u32 %v343, 4294901760
        %v1489 = vsub.f32 %v343, %v1488
        %v1490 = vand.u32 %v1489, 4294901760
        %v1491 = vsub.f32 %v1489, %v1490
        %v1492 = vand.u32 %v1491, 4294901760
        %1493 = vmatpush1.msra.mxu0 %v1492
        %1494 = vmatprep.subr.mxu0 0.0
        %v1495 = vand.u32 %v342, 4294901760
        %v1496 = vsub.f32 %v342, %v1495
        %v1497 = vand.u32 %v1496, 4294901760
        %v1498 = vsub.f32 %v1496, %v1497
        %v1499 = vand.u32 %v1498, 4294901760
        %1500 = vmatpush1.msra.mxu0 %v1499
        %1501 = vmatprep.subr.mxu0 0.0
        %v1502 = vand.u32 %v341, 4294901760
        %v1503 = vsub.f32 %v341, %v1502
        %v1504 = vand.u32 %v1503, 4294901760
        %v1505 = vsub.f32 %v1503, %v1504
        %v1506 = vand.u32 %v1505, 4294901760
        %1507 = vmatpush1.msra.mxu0 %v1506
        %1508 = vmatprep.subr.mxu0 0.0
        %v1509 = vand.u32 %v340, 4294901760
        %v1510 = vsub.f32 %v340, %v1509
        %v1511 = vand.u32 %v1510, 4294901760
        %v1512 = vsub.f32 %v1510, %v1511
        %v1513 = vand.u32 %v1512, 4294901760
        %1514 = vmatpush1.msra.mxu0 %v1513
        %1515 = vmatprep.subr.mxu0 0.0
        %v1516 = vand.u32 %v339, 4294901760
        %v1517 = vsub.f32 %v339, %v1516
        %v1518 = vand.u32 %v1517, 4294901760
        %v1519 = vsub.f32 %v1517, %v1518
        %v1520 = vand.u32 %v1519, 4294901760
        %1521 = vmatpush1.msra.mxu0 %v1520
        %1522 = vmatprep.subr.mxu0 0.0
        %v1523 = vand.u32 %v338, 4294901760
        %v1524 = vsub.f32 %v338, %v1523
        %v1525 = vand.u32 %v1524, 4294901760
        %v1526 = vsub.f32 %v1524, %v1525
        %v1527 = vand.u32 %v1526, 4294901760
        %1528 = vmatpush1.msra.mxu0 %v1527
        %1529 = vmatprep.subr.mxu0 0.0
        %v1530 = vand.u32 %v337, 4294901760
        %v1531 = vsub.f32 %v337, %v1530
        %v1532 = vand.u32 %v1531, 4294901760
        %v1533 = vsub.f32 %v1531, %v1532
        %v1534 = vand.u32 %v1533, 4294901760
        %1535 = vmatpush1.msra.mxu0 %v1534
        %1536 = vmatprep.subr.mxu0 0.0
        %v1537 = vand.u32 %v336, 4294901760
        %v1538 = vsub.f32 %v336, %v1537
        %v1539 = vand.u32 %v1538, 4294901760
        %v1540 = vsub.f32 %v1538, %v1539
        %v1541 = vand.u32 %v1540, 4294901760
        %1542 = vmatpush1.msra.mxu0 %v1541
        %1543 = vmatprep.subr.mxu0 0.0
        %v1544 = vand.u32 %v335, 4294901760
        %v1545 = vsub.f32 %v335, %v1544
        %v1546 = vand.u32 %v1545, 4294901760
        %v1547 = vsub.f32 %v1545, %v1546
        %v1548 = vand.u32 %v1547, 4294901760
        %1549 = vmatpush1.msra.mxu0 %v1548
        %1550 = vmatprep.subr.mxu0 0.0
        %v1551 = vand.u32 %v334, 4294901760
        %v1552 = vsub.f32 %v334, %v1551
        %v1553 = vand.u32 %v1552, 4294901760
        %v1554 = vsub.f32 %v1552, %v1553
        %v1555 = vand.u32 %v1554, 4294901760
        %1556 = vmatpush1.msra.mxu0 %v1555
        %1557 = vmatprep.subr.mxu0 0.0
        %v1558 = vand.u32 %v365, 4294901760
        %v1559 = vsub.f32 %v365, %v1558
        %v1560 = vand.u32 %v1559, 4294901760
        %v1561 = vsub.f32 %v1559, %v1560
        %v1562 = vand.u32 %v1561, 4294901760
        %1563 = vmatpush2.msra.mxu0 %v1562
        %1564 = vmatprep.subr.mxu0 0.0
        %v1565 = vand.u32 %v364, 4294901760
        %v1566 = vsub.f32 %v364, %v1565
        %v1567 = vand.u32 %v1566, 4294901760
        %v1568 = vsub.f32 %v1566, %v1567
        %v1569 = vand.u32 %v1568, 4294901760
        %1570 = vmatpush2.msra.mxu0 %v1569
        %1571 = vmatprep.subr.mxu0 0.0
        %v1572 = vand.u32 %v363, 4294901760
        %v1573 = vsub.f32 %v363, %v1572
        %v1574 = vand.u32 %v1573, 4294901760
        %v1575 = vsub.f32 %v1573, %v1574
        %v1576 = vand.u32 %v1575, 4294901760
        %1577 = vmatpush2.msra.mxu0 %v1576
        %1578 = vmatprep.subr.mxu0 0.0
        %v1579 = vand.u32 %v362, 4294901760
        %v1580 = vsub.f32 %v362, %v1579
        %v1581 = vand.u32 %v1580, 4294901760
        %v1582 = vsub.f32 %v1580, %v1581
        %v1583 = vand.u32 %v1582, 4294901760
        %1584 = vmatpush2.msra.mxu0 %v1583
        %1585 = vmatprep.subr.mxu0 0.0
        %v1586 = vand.u32 %v361, 4294901760
        %v1587 = vsub.f32 %v361, %v1586
        %v1588 = vand.u32 %v1587, 4294901760
        %v1589 = vsub.f32 %v1587, %v1588
        %v1590 = vand.u32 %v1589, 4294901760
        %1591 = vmatpush2.msra.mxu0 %v1590
        %1592 = vmatprep.subr.mxu0 0.0
        %v1593 = vand.u32 %v360, 4294901760
        %v1594 = vsub.f32 %v360, %v1593
        %v1595 = vand.u32 %v1594, 4294901760
        %v1596 = vsub.f32 %v1594, %v1595
        %v1597 = vand.u32 %v1596, 4294901760
        %1598 = vmatpush2.msra.mxu0 %v1597
        %1599 = vmatprep.subr.mxu0 0.0
        %v1600 = vand.u32 %v359, 4294901760
        %v1601 = vsub.f32 %v359, %v1600
        %v1602 = vand.u32 %v1601, 4294901760
        %v1603 = vsub.f32 %v1601, %v1602
        %v1604 = vand.u32 %v1603, 4294901760
        %1605 = vmatpush2.msra.mxu0 %v1604
        %1606 = vmatprep.subr.mxu0 0.0
        %v1607 = vand.u32 %v358, 4294901760
        %v1608 = vsub.f32 %v358, %v1607
        %v1609 = vand.u32 %v1608, 4294901760
        %v1610 = vsub.f32 %v1608, %v1609
        %v1611 = vand.u32 %v1610, 4294901760
        %1612 = vmatpush2.msra.mxu0 %v1611
        %1613 = vmatprep.subr.mxu0 0.0
        %v1614 = vand.u32 %v357, 4294901760
        %v1615 = vsub.f32 %v357, %v1614
        %v1616 = vand.u32 %v1615, 4294901760
        %v1617 = vsub.f32 %v1615, %v1616
        %v1618 = vand.u32 %v1617, 4294901760
        %1619 = vmatpush2.msra.mxu0 %v1618
        %1620 = vmatprep.subr.mxu0 0.0
        %v1621 = vand.u32 %v356, 4294901760
        %v1622 = vsub.f32 %v356, %v1621
        %v1623 = vand.u32 %v1622, 4294901760
        %v1624 = vsub.f32 %v1622, %v1623
        %v1625 = vand.u32 %v1624, 4294901760
        %1626 = vmatpush2.msra.mxu0 %v1625
        %1627 = vmatprep.subr.mxu0 0.0
        %v1628 = vand.u32 %v355, 4294901760
        %v1629 = vsub.f32 %v355, %v1628
        %v1630 = vand.u32 %v1629, 4294901760
        %v1631 = vsub.f32 %v1629, %v1630
        %v1632 = vand.u32 %v1631, 4294901760
        %1633 = vmatpush2.msra.mxu0 %v1632
        %1634 = vmatprep.subr.mxu0 0.0
        %v1635 = vand.u32 %v354, 4294901760
        %v1636 = vsub.f32 %v354, %v1635
        %v1637 = vand.u32 %v1636, 4294901760
        %v1638 = vsub.f32 %v1636, %v1637
        %v1639 = vand.u32 %v1638, 4294901760
        %1640 = vmatpush2.msra.mxu0 %v1639
        %1641 = vmatprep.subr.mxu0 0.0
        %v1642 = vand.u32 %v353, 4294901760
        %v1643 = vsub.f32 %v353, %v1642
        %v1644 = vand.u32 %v1643, 4294901760
        %v1645 = vsub.f32 %v1643, %v1644
        %v1646 = vand.u32 %v1645, 4294901760
        %1647 = vmatpush2.msra.mxu0 %v1646
        %1648 = vmatprep.subr.mxu0 0.0
        %v1649 = vand.u32 %v352, 4294901760
        %v1650 = vsub.f32 %v352, %v1649
        %v1651 = vand.u32 %v1650, 4294901760
        %v1652 = vsub.f32 %v1650, %v1651
        %v1653 = vand.u32 %v1652, 4294901760
        %1654 = vmatpush2.msra.mxu0 %v1653
        %1655 = vmatprep.subr.mxu0 0.0
        %v1656 = vand.u32 %v351, 4294901760
        %v1657 = vsub.f32 %v351, %v1656
        %v1658 = vand.u32 %v1657, 4294901760
        %v1659 = vsub.f32 %v1657, %v1658
        %v1660 = vand.u32 %v1659, 4294901760
        %1661 = vmatpush2.msra.mxu0 %v1660
        %1662 = vmatprep.subr.mxu0 0.0
        %v1663 = vand.u32 %v350, 4294901760
        %v1664 = vsub.f32 %v350, %v1663
        %v1665 = vand.u32 %v1664, 4294901760
        %v1666 = vsub.f32 %v1664, %v1665
        %v1667 = vand.u32 %v1666, 4294901760
        %1668 = vmatpush2.msra.mxu0 %v1667
        %v1669 = vand.u32 %v446, 4294901760
        %1670 = vmatprep.mubr.f32.mxu0 %v1669
        %v1671 = vand.u32 %v442, 4294901760
        %1672 = vmatmul.mubr.f32.gmra.mxu0 %v1671
        %v1673 = vpop.f32.mrf.mxu0
        %v1674 = vadd.f32 %v1442, %v1673
        %v1675 = vpop.f32.mrf.mxu0
        %1676 = vdwg.mxu0
        %1677 = vmatprep.subr.mxu0 0.0
        %v1678 = vand.u32 %v349, 4294901760
        %v1679 = vsub.f32 %v349, %v1678
        %1680 = vmatpush1.msra.mxu0 %v1679
        %1681 = vmatprep.subr.mxu0 0.0
        %v1682 = vand.u32 %v348, 4294901760
        %v1683 = vsub.f32 %v348, %v1682
        %1684 = vmatpush1.msra.mxu0 %v1683
        %1685 = vmatprep.subr.mxu0 0.0
        %v1686 = vand.u32 %v347, 4294901760
        %v1687 = vsub.f32 %v347, %v1686
        %1688 = vmatpush1.msra.mxu0 %v1687
        %1689 = vmatprep.subr.mxu0 0.0
        %v1690 = vand.u32 %v346, 4294901760
        %v1691 = vsub.f32 %v346, %v1690
        %1692 = vmatpush1.msra.mxu0 %v1691
        %1693 = vmatprep.subr.mxu0 0.0
        %v1694 = vand.u32 %v345, 4294901760
        %v1695 = vsub.f32 %v345, %v1694
        %1696 = vmatpush1.msra.mxu0 %v1695
        %1697 = vmatprep.subr.mxu0 0.0
        %v1698 = vand.u32 %v344, 4294901760
        %v1699 = vsub.f32 %v344, %v1698
        %1700 = vmatpush1.msra.mxu0 %v1699
        %1701 = vmatprep.subr.mxu0 0.0
        %v1702 = vand.u32 %v343, 4294901760
        %v1703 = vsub.f32 %v343, %v1702
        %1704 = vmatpush1.msra.mxu0 %v1703
        %1705 = vmatprep.subr.mxu0 0.0
        %v1706 = vand.u32 %v342, 4294901760
        %v1707 = vsub.f32 %v342, %v1706
        %1708 = vmatpush1.msra.mxu0 %v1707
        %1709 = vmatprep.subr.mxu0 0.0
        %v1710 = vand.u32 %v341, 4294901760
        %v1711 = vsub.f32 %v341, %v1710
        %1712 = vmatpush1.msra.mxu0 %v1711
        %1713 = vmatprep.subr.mxu0 0.0
        %v1714 = vand.u32 %v340, 4294901760
        %v1715 = vsub.f32 %v340, %v1714
        %1716 = vmatpush1.msra.mxu0 %v1715
        %1717 = vmatprep.subr.mxu0 0.0
        %v1718 = vand.u32 %v339, 4294901760
        %v1719 = vsub.f32 %v339, %v1718
        %1720 = vmatpush1.msra.mxu0 %v1719
        %1721 = vmatprep.subr.mxu0 0.0
        %v1722 = vand.u32 %v338, 4294901760
        %v1723 = vsub.f32 %v338, %v1722
        %1724 = vmatpush1.msra.mxu0 %v1723
        %1725 = vmatprep.subr.mxu0 0.0
        %v1726 = vand.u32 %v337, 4294901760
        %v1727 = vsub.f32 %v337, %v1726
        %1728 = vmatpush1.msra.mxu0 %v1727
        %1729 = vmatprep.subr.mxu0 0.0
        %v1730 = vand.u32 %v336, 4294901760
        %v1731 = vsub.f32 %v336, %v1730
        %1732 = vmatpush1.msra.mxu0 %v1731
        %1733 = vmatprep.subr.mxu0 0.0
        %v1734 = vand.u32 %v335, 4294901760
        %v1735 = vsub.f32 %v335, %v1734
        %1736 = vmatpush1.msra.mxu0 %v1735
        %1737 = vmatprep.subr.mxu0 0.0
        %v1738 = vand.u32 %v334, 4294901760
        %v1739 = vsub.f32 %v334, %v1738
        %1740 = vmatpush1.msra.mxu0 %v1739
        %1741 = vmatprep.subr.mxu0 0.0
        %v1742 = vand.u32 %v365, 4294901760
        %v1743 = vsub.f32 %v365, %v1742
        %1744 = vmatpush2.msra.mxu0 %v1743
        %1745 = vmatprep.subr.mxu0 0.0
        %v1746 = vand.u32 %v364, 4294901760
        %v1747 = vsub.f32 %v364, %v1746
        %1748 = vmatpush2.msra.mxu0 %v1747
        %1749 = vmatprep.subr.mxu0 0.0
        %v1750 = vand.u32 %v363, 4294901760
        %v1751 = vsub.f32 %v363, %v1750
        %1752 = vmatpush2.msra.mxu0 %v1751
        %1753 = vmatprep.subr.mxu0 0.0
        %v1754 = vand.u32 %v362, 4294901760
        %v1755 = vsub.f32 %v362, %v1754
        %1756 = vmatpush2.msra.mxu0 %v1755
        %1757 = vmatprep.subr.mxu0 0.0
        %v1758 = vand.u32 %v361, 4294901760
        %v1759 = vsub.f32 %v361, %v1758
        %1760 = vmatpush2.msra.mxu0 %v1759
        %1761 = vmatprep.subr.mxu0 0.0
        %v1762 = vand.u32 %v360, 4294901760
        %v1763 = vsub.f32 %v360, %v1762
        %1764 = vmatpush2.msra.mxu0 %v1763
        %1765 = vmatprep.subr.mxu0 0.0
        %v1766 = vand.u32 %v359, 4294901760
        %v1767 = vsub.f32 %v359, %v1766
        %1768 = vmatpush2.msra.mxu0 %v1767
        %1769 = vmatprep.subr.mxu0 0.0
        %v1770 = vand.u32 %v358, 4294901760
        %v1771 = vsub.f32 %v358, %v1770
        %1772 = vmatpush2.msra.mxu0 %v1771
        %1773 = vmatprep.subr.mxu0 0.0
        %v1774 = vand.u32 %v357, 4294901760
        %v1775 = vsub.f32 %v357, %v1774
        %1776 = vmatpush2.msra.mxu0 %v1775
        %1777 = vmatprep.subr.mxu0 0.0
        %v1778 = vand.u32 %v356, 4294901760
        %v1779 = vsub.f32 %v356, %v1778
        %1780 = vmatpush2.msra.mxu0 %v1779
        %1781 = vmatprep.subr.mxu0 0.0
        %v1782 = vand.u32 %v355, 4294901760
        %v1783 = vsub.f32 %v355, %v1782
        %1784 = vmatpush2.msra.mxu0 %v1783
        %1785 = vmatprep.subr.mxu0 0.0
        %v1786 = vand.u32 %v354, 4294901760
        %v1787 = vsub.f32 %v354, %v1786
        %1788 = vmatpush2.msra.mxu0 %v1787
        %1789 = vmatprep.subr.mxu0 0.0
        %v1790 = vand.u32 %v353, 4294901760
        %v1791 = vsub.f32 %v353, %v1790
        %1792 = vmatpush2.msra.mxu0 %v1791
        %1793 = vmatprep.subr.mxu0 0.0
        %v1794 = vand.u32 %v352, 4294901760
        %v1795 = vsub.f32 %v352, %v1794
        %1796 = vmatpush2.msra.mxu0 %v1795
        %1797 = vmatprep.subr.mxu0 0.0
        %v1798 = vand.u32 %v351, 4294901760
        %v1799 = vsub.f32 %v351, %v1798
        %1800 = vmatpush2.msra.mxu0 %v1799
        %1801 = vmatprep.subr.mxu0 0.0
        %v1802 = vand.u32 %v350, 4294901760
        %v1803 = vsub.f32 %v350, %v1802
        %1804 = vmatpush2.msra.mxu0 %v1803
        %v1805 = vand.u32 %v446, 4294901760
        %v1806 = vsub.f32 %v446, %v1805
        %1807 = vmatprep.mubr.f32.mxu0 %v1806
        %v1808 = vand.u32 %v442, 4294901760
        %v1809 = vsub.f32 %v442, %v1808
        %1810 = vmatmul.mubr.f32.gmra.mxu0 %v1809
        %v1811 = vpop.f32.mrf.mxu0
        %v1812 = vadd.f32 %v1674, %v1811
        %v1813 = vpop.f32.mrf.mxu0
        %1814 = vdwg.mxu0
        %1815 = vmatprep.subr.mxu0 0.0
        %v1816 = vand.u32 %v349, 4294901760
        %1817 = vmatpush1.msra.mxu0 %v1816
        %1818 = vmatprep.subr.mxu0 0.0
        %v1819 = vand.u32 %v348, 4294901760
        %1820 = vmatpush1.msra.mxu0 %v1819
        %1821 = vmatprep.subr.mxu0 0.0
        %v1822 = vand.u32 %v347, 4294901760
        %1823 = vmatpush1.msra.mxu0 %v1822
        %1824 = vmatprep.subr.mxu0 0.0
        %v1825 = vand.u32 %v346, 4294901760
        %1826 = vmatpush1.msra.mxu0 %v1825
        %1827 = vmatprep.subr.mxu0 0.0
        %v1828 = vand.u32 %v345, 4294901760
        %1829 = vmatpush1.msra.mxu0 %v1828
        %1830 = vmatprep.subr.mxu0 0.0
        %v1831 = vand.u32 %v344, 4294901760
        %1832 = vmatpush1.msra.mxu0 %v1831
        %1833 = vmatprep.subr.mxu0 0.0
        %v1834 = vand.u32 %v343, 4294901760
        %1835 = vmatpush1.msra.mxu0 %v1834
        %1836 = vmatprep.subr.mxu0 0.0
        %v1837 = vand.u32 %v342, 4294901760
        %1838 = vmatpush1.msra.mxu0 %v1837
        %1839 = vmatprep.subr.mxu0 0.0
        %v1840 = vand.u32 %v341, 4294901760
        %1841 = vmatpush1.msra.mxu0 %v1840
        %1842 = vmatprep.subr.mxu0 0.0
        %v1843 = vand.u32 %v340, 4294901760
        %1844 = vmatpush1.msra.mxu0 %v1843
        %1845 = vmatprep.subr.mxu0 0.0
        %v1846 = vand.u32 %v339, 4294901760
        %1847 = vmatpush1.msra.mxu0 %v1846
        %1848 = vmatprep.subr.mxu0 0.0
        %v1849 = vand.u32 %v338, 4294901760
        %1850 = vmatpush1.msra.mxu0 %v1849
        %1851 = vmatprep.subr.mxu0 0.0
        %v1852 = vand.u32 %v337, 4294901760
        %1853 = vmatpush1.msra.mxu0 %v1852
        %1854 = vmatprep.subr.mxu0 0.0
        %v1855 = vand.u32 %v336, 4294901760
        %1856 = vmatpush1.msra.mxu0 %v1855
        %1857 = vmatprep.subr.mxu0 0.0
        %v1858 = vand.u32 %v335, 4294901760
        %1859 = vmatpush1.msra.mxu0 %v1858
        %1860 = vmatprep.subr.mxu0 0.0
        %v1861 = vand.u32 %v334, 4294901760
        %1862 = vmatpush1.msra.mxu0 %v1861
        %1863 = vmatprep.subr.mxu0 0.0
        %v1864 = vand.u32 %v365, 4294901760
        %1865 = vmatpush2.msra.mxu0 %v1864
        %1866 = vmatprep.subr.mxu0 0.0
        %v1867 = vand.u32 %v364, 4294901760
        %1868 = vmatpush2.msra.mxu0 %v1867
        %1869 = vmatprep.subr.mxu0 0.0
        %v1870 = vand.u32 %v363, 4294901760
        %1871 = vmatpush2.msra.mxu0 %v1870
        %1872 = vmatprep.subr.mxu0 0.0
        %v1873 = vand.u32 %v362, 4294901760
        %1874 = vmatpush2.msra.mxu0 %v1873
        %1875 = vmatprep.subr.mxu0 0.0
        %v1876 = vand.u32 %v361, 4294901760
        %1877 = vmatpush2.msra.mxu0 %v1876
        %1878 = vmatprep.subr.mxu0 0.0
        %v1879 = vand.u32 %v360, 4294901760
        %1880 = vmatpush2.msra.mxu0 %v1879
        %1881 = vmatprep.subr.mxu0 0.0
        %v1882 = vand.u32 %v359, 4294901760
        %1883 = vmatpush2.msra.mxu0 %v1882
        %1884 = vmatprep.subr.mxu0 0.0
        %v1885 = vand.u32 %v358, 4294901760
        %1886 = vmatpush2.msra.mxu0 %v1885
        %1887 = vmatprep.subr.mxu0 0.0
        %v1888 = vand.u32 %v357, 4294901760
        %1889 = vmatpush2.msra.mxu0 %v1888
        %1890 = vmatprep.subr.mxu0 0.0
        %v1891 = vand.u32 %v356, 4294901760
        %1892 = vmatpush2.msra.mxu0 %v1891
        %1893 = vmatprep.subr.mxu0 0.0
        %v1894 = vand.u32 %v355, 4294901760
        %1895 = vmatpush2.msra.mxu0 %v1894
        %1896 = vmatprep.subr.mxu0 0.0
        %v1897 = vand.u32 %v354, 4294901760
        %1898 = vmatpush2.msra.mxu0 %v1897
        %1899 = vmatprep.subr.mxu0 0.0
        %v1900 = vand.u32 %v353, 4294901760
        %1901 = vmatpush2.msra.mxu0 %v1900
        %1902 = vmatprep.subr.mxu0 0.0
        %v1903 = vand.u32 %v352, 4294901760
        %1904 = vmatpush2.msra.mxu0 %v1903
        %1905 = vmatprep.subr.mxu0 0.0
        %v1906 = vand.u32 %v351, 4294901760
        %1907 = vmatpush2.msra.mxu0 %v1906
        %1908 = vmatprep.subr.mxu0 0.0
        %v1909 = vand.u32 %v350, 4294901760
        %1910 = vmatpush2.msra.mxu0 %v1909
        %v1911 = vand.u32 %v446, 4294901760
        %v1912 = vsub.f32 %v446, %v1911
        %v1913 = vand.u32 %v1912, 4294901760
        %1914 = vmatprep.mubr.f32.mxu0 %v1913
        %v1915 = vand.u32 %v442, 4294901760
        %v1916 = vsub.f32 %v442, %v1915
        %v1917 = vand.u32 %v1916, 4294901760
        %1918 = vmatmul.mubr.f32.gmra.mxu0 %v1917
        %v1919 = vpop.f32.mrf.mxu0
        %v1920 = vadd.f32 %v1812, %v1919
        %v1921 = vpop.f32.mrf.mxu0
        %1922 = vdwg.mxu0
        %1923 = vmatprep.subr.mxu0 0.0
        %v1924 = vand.u32 %v349, 4294901760
        %v1925 = vsub.f32 %v349, %v1924
        %v1926 = vand.u32 %v1925, 4294901760
        %1927 = vmatpush1.msra.mxu0 %v1926
        %1928 = vmatprep.subr.mxu0 0.0
        %v1929 = vand.u32 %v348, 4294901760
        %v1930 = vsub.f32 %v348, %v1929
        %v1931 = vand.u32 %v1930, 4294901760
        %1932 = vmatpush1.msra.mxu0 %v1931
        %1933 = vmatprep.subr.mxu0 0.0
        %v1934 = vand.u32 %v347, 4294901760
        %v1935 = vsub.f32 %v347, %v1934
        %v1936 = vand.u32 %v1935, 4294901760
        %1937 = vmatpush1.msra.mxu0 %v1936
        %1938 = vmatprep.subr.mxu0 0.0
        %v1939 = vand.u32 %v346, 4294901760
        %v1940 = vsub.f32 %v346, %v1939
        %v1941 = vand.u32 %v1940, 4294901760
        %1942 = vmatpush1.msra.mxu0 %v1941
        %1943 = vmatprep.subr.mxu0 0.0
        %v1944 = vand.u32 %v345, 4294901760
        %v1945 = vsub.f32 %v345, %v1944
        %v1946 = vand.u32 %v1945, 4294901760
        %1947 = vmatpush1.msra.mxu0 %v1946
        %1948 = vmatprep.subr.mxu0 0.0
        %v1949 = vand.u32 %v344, 4294901760
        %v1950 = vsub.f32 %v344, %v1949
        %v1951 = vand.u32 %v1950, 4294901760
        %1952 = vmatpush1.msra.mxu0 %v1951
        %1953 = vmatprep.subr.mxu0 0.0
        %v1954 = vand.u32 %v343, 4294901760
        %v1955 = vsub.f32 %v343, %v1954
        %v1956 = vand.u32 %v1955, 4294901760
        %1957 = vmatpush1.msra.mxu0 %v1956
        %1958 = vmatprep.subr.mxu0 0.0
        %v1959 = vand.u32 %v342, 4294901760
        %v1960 = vsub.f32 %v342, %v1959
        %v1961 = vand.u32 %v1960, 4294901760
        %1962 = vmatpush1.msra.mxu0 %v1961
        %1963 = vmatprep.subr.mxu0 0.0
        %v1964 = vand.u32 %v341, 4294901760
        %v1965 = vsub.f32 %v341, %v1964
        %v1966 = vand.u32 %v1965, 4294901760
        %1967 = vmatpush1.msra.mxu0 %v1966
        %1968 = vmatprep.subr.mxu0 0.0
        %v1969 = vand.u32 %v340, 4294901760
        %v1970 = vsub.f32 %v340, %v1969
        %v1971 = vand.u32 %v1970, 4294901760
        %1972 = vmatpush1.msra.mxu0 %v1971
        %1973 = vmatprep.subr.mxu0 0.0
        %v1974 = vand.u32 %v339, 4294901760
        %v1975 = vsub.f32 %v339, %v1974
        %v1976 = vand.u32 %v1975, 4294901760
        %1977 = vmatpush1.msra.mxu0 %v1976
        %1978 = vmatprep.subr.mxu0 0.0
        %v1979 = vand.u32 %v338, 4294901760
        %v1980 = vsub.f32 %v338, %v1979
        %v1981 = vand.u32 %v1980, 4294901760
        %1982 = vmatpush1.msra.mxu0 %v1981
        %1983 = vmatprep.subr.mxu0 0.0
        %v1984 = vand.u32 %v337, 4294901760
        %v1985 = vsub.f32 %v337, %v1984
        %v1986 = vand.u32 %v1985, 4294901760
        %1987 = vmatpush1.msra.mxu0 %v1986
        %1988 = vmatprep.subr.mxu0 0.0
        %v1989 = vand.u32 %v336, 4294901760
        %v1990 = vsub.f32 %v336, %v1989
        %v1991 = vand.u32 %v1990, 4294901760
        %1992 = vmatpush1.msra.mxu0 %v1991
        %1993 = vmatprep.subr.mxu0 0.0
        %v1994 = vand.u32 %v335, 4294901760
        %v1995 = vsub.f32 %v335, %v1994
        %v1996 = vand.u32 %v1995, 4294901760
        %1997 = vmatpush1.msra.mxu0 %v1996
        %1998 = vmatprep.subr.mxu0 0.0
        %v1999 = vand.u32 %v334, 4294901760
        %v2000 = vsub.f32 %v334, %v1999
        %v2001 = vand.u32 %v2000, 4294901760
        %2002 = vmatpush1.msra.mxu0 %v2001
        %2003 = vmatprep.subr.mxu0 0.0
        %v2004 = vand.u32 %v365, 4294901760
        %v2005 = vsub.f32 %v365, %v2004
        %v2006 = vand.u32 %v2005, 4294901760
        %2007 = vmatpush2.msra.mxu0 %v2006
        %2008 = vmatprep.subr.mxu0 0.0
        %v2009 = vand.u32 %v364, 4294901760
        %v2010 = vsub.f32 %v364, %v2009
        %v2011 = vand.u32 %v2010, 4294901760
        %2012 = vmatpush2.msra.mxu0 %v2011
        %2013 = vmatprep.subr.mxu0 0.0
        %v2014 = vand.u32 %v363, 4294901760
        %v2015 = vsub.f32 %v363, %v2014
        %v2016 = vand.u32 %v2015, 4294901760
        %2017 = vmatpush2.msra.mxu0 %v2016
        %2018 = vmatprep.subr.mxu0 0.0
        %v2019 = vand.u32 %v362, 4294901760
        %v2020 = vsub.f32 %v362, %v2019
        %v2021 = vand.u32 %v2020, 4294901760
        %2022 = vmatpush2.msra.mxu0 %v2021
        %2023 = vmatprep.subr.mxu0 0.0
        %v2024 = vand.u32 %v361, 4294901760
        %v2025 = vsub.f32 %v361, %v2024
        %v2026 = vand.u32 %v2025, 4294901760
        %2027 = vmatpush2.msra.mxu0 %v2026
        %2028 = vmatprep.subr.mxu0 0.0
        %v2029 = vand.u32 %v360, 4294901760
        %v2030 = vsub.f32 %v360, %v2029
        %v2031 = vand.u32 %v2030, 4294901760
        %2032 = vmatpush2.msra.mxu0 %v2031
        %2033 = vmatprep.subr.mxu0 0.0
        %v2034 = vand.u32 %v359, 4294901760
        %v2035 = vsub.f32 %v359, %v2034
        %v2036 = vand.u32 %v2035, 4294901760
        %2037 = vmatpush2.msra.mxu0 %v2036
        %2038 = vmatprep.subr.mxu0 0.0
        %v2039 = vand.u32 %v358, 4294901760
        %v2040 = vsub.f32 %v358, %v2039
        %v2041 = vand.u32 %v2040, 4294901760
        %2042 = vmatpush2.msra.mxu0 %v2041
        %2043 = vmatprep.subr.mxu0 0.0
        %v2044 = vand.u32 %v357, 4294901760
        %v2045 = vsub.f32 %v357, %v2044
        %v2046 = vand.u32 %v2045, 4294901760
        %2047 = vmatpush2.msra.mxu0 %v2046
        %2048 = vmatprep.subr.mxu0 0.0
        %v2049 = vand.u32 %v356, 4294901760
        %v2050 = vsub.f32 %v356, %v2049
        %v2051 = vand.u32 %v2050, 4294901760
        %2052 = vmatpush2.msra.mxu0 %v2051
        %2053 = vmatprep.subr.mxu0 0.0
        %v2054 = vand.u32 %v355, 4294901760
        %v2055 = vsub.f32 %v355, %v2054
        %v2056 = vand.u32 %v2055, 4294901760
        %2057 = vmatpush2.msra.mxu0 %v2056
        %2058 = vmatprep.subr.mxu0 0.0
        %v2059 = vand.u32 %v354, 4294901760
        %v2060 = vsub.f32 %v354, %v2059
        %v2061 = vand.u32 %v2060, 4294901760
        %2062 = vmatpush2.msra.mxu0 %v2061
        %2063 = vmatprep.subr.mxu0 0.0
        %v2064 = vand.u32 %v353, 4294901760
        %v2065 = vsub.f32 %v353, %v2064
        %v2066 = vand.u32 %v2065, 4294901760
        %2067 = vmatpush2.msra.mxu0 %v2066
        %2068 = vmatprep.subr.mxu0 0.0
        %v2069 = vand.u32 %v352, 4294901760
        %v2070 = vsub.f32 %v352, %v2069
        %v2071 = vand.u32 %v2070, 4294901760
        %2072 = vmatpush2.msra.mxu0 %v2071
        %2073 = vmatprep.subr.mxu0 0.0
        %v2074 = vand.u32 %v351, 4294901760
        %v2075 = vsub.f32 %v351, %v2074
        %v2076 = vand.u32 %v2075, 4294901760
        %2077 = vmatpush2.msra.mxu0 %v2076
        %2078 = vmatprep.subr.mxu0 0.0
        %v2079 = vand.u32 %v350, 4294901760
        %v2080 = vsub.f32 %v350, %v2079
        %v2081 = vand.u32 %v2080, 4294901760
        %2082 = vmatpush2.msra.mxu0 %v2081
        %v2083 = vand.u32 %v446, 4294901760
        %2084 = vmatprep.mubr.f32.mxu0 %v2083
        %v2085 = vand.u32 %v442, 4294901760
        %2086 = vmatmul.mubr.f32.gmra.mxu0 %v2085
        %v2087 = vpop.f32.mrf.mxu0
        %v2088 = vadd.f32 %v1920, %v2087
        %v2089 = vpop.f32.mrf.mxu0
        %2090 = vdwg.mxu0
        %2091 = vmatprep.subr.mxu0 0.0
        %v2092 = vand.u32 %v349, 4294901760
        %2093 = vmatpush1.msra.mxu0 %v2092
        %2094 = vmatprep.subr.mxu0 0.0
        %v2095 = vand.u32 %v348, 4294901760
        %2096 = vmatpush1.msra.mxu0 %v2095
        %2097 = vmatprep.subr.mxu0 0.0
        %v2098 = vand.u32 %v347, 4294901760
        %2099 = vmatpush1.msra.mxu0 %v2098
        %2100 = vmatprep.subr.mxu0 0.0
        %v2101 = vand.u32 %v346, 4294901760
        %2102 = vmatpush1.msra.mxu0 %v2101
        %2103 = vmatprep.subr.mxu0 0.0
        %v2104 = vand.u32 %v345, 4294901760
        %2105 = vmatpush1.msra.mxu0 %v2104
        %2106 = vmatprep.subr.mxu0 0.0
        %v2107 = vand.u32 %v344, 4294901760
        %2108 = vmatpush1.msra.mxu0 %v2107
        %2109 = vmatprep.subr.mxu0 0.0
        %v2110 = vand.u32 %v343, 4294901760
        %2111 = vmatpush1.msra.mxu0 %v2110
        %2112 = vmatprep.subr.mxu0 0.0
        %v2113 = vand.u32 %v342, 4294901760
        %2114 = vmatpush1.msra.mxu0 %v2113
        %2115 = vmatprep.subr.mxu0 0.0
        %v2116 = vand.u32 %v341, 4294901760
        %2117 = vmatpush1.msra.mxu0 %v2116
        %2118 = vmatprep.subr.mxu0 0.0
        %v2119 = vand.u32 %v340, 4294901760
        %2120 = vmatpush1.msra.mxu0 %v2119
        %2121 = vmatprep.subr.mxu0 0.0
        %v2122 = vand.u32 %v339, 4294901760
        %2123 = vmatpush1.msra.mxu0 %v2122
        %2124 = vmatprep.subr.mxu0 0.0
        %v2125 = vand.u32 %v338, 4294901760
        %2126 = vmatpush1.msra.mxu0 %v2125
        %2127 = vmatprep.subr.mxu0 0.0
        %v2128 = vand.u32 %v337, 4294901760
        %2129 = vmatpush1.msra.mxu0 %v2128
        %2130 = vmatprep.subr.mxu0 0.0
        %v2131 = vand.u32 %v336, 4294901760
        %2132 = vmatpush1.msra.mxu0 %v2131
        %2133 = vmatprep.subr.mxu0 0.0
        %v2134 = vand.u32 %v335, 4294901760
        %2135 = vmatpush1.msra.mxu0 %v2134
        %2136 = vmatprep.subr.mxu0 0.0
        %v2137 = vand.u32 %v334, 4294901760
        %2138 = vmatpush1.msra.mxu0 %v2137
        %2139 = vmatprep.subr.mxu0 0.0
        %v2140 = vand.u32 %v365, 4294901760
        %2141 = vmatpush2.msra.mxu0 %v2140
        %2142 = vmatprep.subr.mxu0 0.0
        %v2143 = vand.u32 %v364, 4294901760
        %2144 = vmatpush2.msra.mxu0 %v2143
        %2145 = vmatprep.subr.mxu0 0.0
        %v2146 = vand.u32 %v363, 4294901760
        %2147 = vmatpush2.msra.mxu0 %v2146
        %2148 = vmatprep.subr.mxu0 0.0
        %v2149 = vand.u32 %v362, 4294901760
        %2150 = vmatpush2.msra.mxu0 %v2149
        %2151 = vmatprep.subr.mxu0 0.0
        %v2152 = vand.u32 %v361, 4294901760
        %2153 = vmatpush2.msra.mxu0 %v2152
        %2154 = vmatprep.subr.mxu0 0.0
        %v2155 = vand.u32 %v360, 4294901760
        %2156 = vmatpush2.msra.mxu0 %v2155
        %2157 = vmatprep.subr.mxu0 0.0
        %v2158 = vand.u32 %v359, 4294901760
        %2159 = vmatpush2.msra.mxu0 %v2158
        %2160 = vmatprep.subr.mxu0 0.0
        %v2161 = vand.u32 %v358, 4294901760
        %2162 = vmatpush2.msra.mxu0 %v2161
        %2163 = vmatprep.subr.mxu0 0.0
        %v2164 = vand.u32 %v357, 4294901760
        %2165 = vmatpush2.msra.mxu0 %v2164
        %2166 = vmatprep.subr.mxu0 0.0
        %v2167 = vand.u32 %v356, 4294901760
        %2168 = vmatpush2.msra.mxu0 %v2167
        %2169 = vmatprep.subr.mxu0 0.0
        %v2170 = vand.u32 %v355, 4294901760
        %2171 = vmatpush2.msra.mxu0 %v2170
        %2172 = vmatprep.subr.mxu0 0.0
        %v2173 = vand.u32 %v354, 4294901760
        %2174 = vmatpush2.msra.mxu0 %v2173
        %2175 = vmatprep.subr.mxu0 0.0
        %v2176 = vand.u32 %v353, 4294901760
        %2177 = vmatpush2.msra.mxu0 %v2176
        %2178 = vmatprep.subr.mxu0 0.0
        %v2179 = vand.u32 %v352, 4294901760
        %2180 = vmatpush2.msra.mxu0 %v2179
        %2181 = vmatprep.subr.mxu0 0.0
        %v2182 = vand.u32 %v351, 4294901760
        %2183 = vmatpush2.msra.mxu0 %v2182
        %2184 = vmatprep.subr.mxu0 0.0
        %v2185 = vand.u32 %v350, 4294901760
        %2186 = vmatpush2.msra.mxu0 %v2185
        %v2187 = vand.u32 %v446, 4294901760
        %2188 = vmatprep.mubr.f32.mxu0 %v2187
        %v2189 = vand.u32 %v442, 4294901760
        %2190 = vmatmul.mubr.f32.gmra.mxu0 %v2189
        %v2191 = vpop.f32.mrf.mxu0
        %v2192 = vadd.f32 %v2088, %v2191
        %v2193 = vpop.f32.mrf.mxu0
        %2194 = vdwg.mxu0
        %2195 = vmatprep.subr.mxu0 0.0
        %v2196 = vand.u32 %v381, 4294901760
        %2197 = vmatpush1.msra.mxu0 %v2196
        %2198 = vmatprep.subr.mxu0 0.0
        %v2199 = vand.u32 %v380, 4294901760
        %2200 = vmatpush1.msra.mxu0 %v2199
        %2201 = vmatprep.subr.mxu0 0.0
        %v2202 = vand.u32 %v379, 4294901760
        %2203 = vmatpush1.msra.mxu0 %v2202
        %2204 = vmatprep.subr.mxu0 0.0
        %v2205 = vand.u32 %v378, 4294901760
        %2206 = vmatpush1.msra.mxu0 %v2205
        %2207 = vmatprep.subr.mxu0 0.0
        %v2208 = vand.u32 %v377, 4294901760
        %2209 = vmatpush1.msra.mxu0 %v2208
        %2210 = vmatprep.subr.mxu0 0.0
        %v2211 = vand.u32 %v376, 4294901760
        %2212 = vmatpush1.msra.mxu0 %v2211
        %2213 = vmatprep.subr.mxu0 0.0
        %v2214 = vand.u32 %v375, 4294901760
        %2215 = vmatpush1.msra.mxu0 %v2214
        %2216 = vmatprep.subr.mxu0 0.0
        %v2217 = vand.u32 %v374, 4294901760
        %2218 = vmatpush1.msra.mxu0 %v2217
        %2219 = vmatprep.subr.mxu0 0.0
        %v2220 = vand.u32 %v373, 4294901760
        %2221 = vmatpush1.msra.mxu0 %v2220
        %2222 = vmatprep.subr.mxu0 0.0
        %v2223 = vand.u32 %v372, 4294901760
        %2224 = vmatpush1.msra.mxu0 %v2223
        %2225 = vmatprep.subr.mxu0 0.0
        %v2226 = vand.u32 %v371, 4294901760
        %2227 = vmatpush1.msra.mxu0 %v2226
        %2228 = vmatprep.subr.mxu0 0.0
        %v2229 = vand.u32 %v370, 4294901760
        %2230 = vmatpush1.msra.mxu0 %v2229
        %2231 = vmatprep.subr.mxu0 0.0
        %v2232 = vand.u32 %v369, 4294901760
        %2233 = vmatpush1.msra.mxu0 %v2232
        %2234 = vmatprep.subr.mxu0 0.0
        %v2235 = vand.u32 %v368, 4294901760
        %2236 = vmatpush1.msra.mxu0 %v2235
        %2237 = vmatprep.subr.mxu0 0.0
        %v2238 = vand.u32 %v367, 4294901760
        %2239 = vmatpush1.msra.mxu0 %v2238
        %2240 = vmatprep.subr.mxu0 0.0
        %v2241 = vand.u32 %v366, 4294901760
        %2242 = vmatpush1.msra.mxu0 %v2241
        %2243 = vmatprep.subr.mxu0 0.0
        %v2244 = vand.u32 %v397, 4294901760
        %2245 = vmatpush2.msra.mxu0 %v2244
        %2246 = vmatprep.subr.mxu0 0.0
        %v2247 = vand.u32 %v396, 4294901760
        %2248 = vmatpush2.msra.mxu0 %v2247
        %2249 = vmatprep.subr.mxu0 0.0
        %v2250 = vand.u32 %v395, 4294901760
        %2251 = vmatpush2.msra.mxu0 %v2250
        %2252 = vmatprep.subr.mxu0 0.0
        %v2253 = vand.u32 %v394, 4294901760
        %2254 = vmatpush2.msra.mxu0 %v2253
        %2255 = vmatprep.subr.mxu0 0.0
        %v2256 = vand.u32 %v393, 4294901760
        %2257 = vmatpush2.msra.mxu0 %v2256
        %2258 = vmatprep.subr.mxu0 0.0
        %v2259 = vand.u32 %v392, 4294901760
        %2260 = vmatpush2.msra.mxu0 %v2259
        %2261 = vmatprep.subr.mxu0 0.0
        %v2262 = vand.u32 %v391, 4294901760
        %2263 = vmatpush2.msra.mxu0 %v2262
        %2264 = vmatprep.subr.mxu0 0.0
        %v2265 = vand.u32 %v390, 4294901760
        %2266 = vmatpush2.msra.mxu0 %v2265
        %2267 = vmatprep.subr.mxu0 0.0
        %v2268 = vand.u32 %v389, 4294901760
        %2269 = vmatpush2.msra.mxu0 %v2268
        %2270 = vmatprep.subr.mxu0 0.0
        %v2271 = vand.u32 %v388, 4294901760
        %2272 = vmatpush2.msra.mxu0 %v2271
        %2273 = vmatprep.subr.mxu0 0.0
        %v2274 = vand.u32 %v387, 4294901760
        %2275 = vmatpush2.msra.mxu0 %v2274
        %2276 = vmatprep.subr.mxu0 0.0
        %v2277 = vand.u32 %v386, 4294901760
        %2278 = vmatpush2.msra.mxu0 %v2277
        %2279 = vmatprep.subr.mxu0 0.0
        %v2280 = vand.u32 %v385, 4294901760
        %2281 = vmatpush2.msra.mxu0 %v2280
        %2282 = vmatprep.subr.mxu0 0.0
        %v2283 = vand.u32 %v384, 4294901760
        %2284 = vmatpush2.msra.mxu0 %v2283
        %2285 = vmatprep.subr.mxu0 0.0
        %v2286 = vand.u32 %v383, 4294901760
        %2287 = vmatpush2.msra.mxu0 %v2286
        %2288 = vmatprep.subr.mxu0 0.0
        %v2289 = vand.u32 %v382, 4294901760
        %2290 = vmatpush2.msra.mxu0 %v2289
        %v2291 = vand.u32 %v454, 4294901760
        %v2292 = vsub.f32 %v454, %v2291
        %v2293 = vand.u32 %v2292, 4294901760
        %v2294 = vsub.f32 %v2292, %v2293
        %v2295 = vand.u32 %v2294, 4294901760
        %2296 = vmatprep.mubr.f32.mxu0 %v2295
        %v2297 = vand.u32 %v450, 4294901760
        %v2298 = vsub.f32 %v450, %v2297
        %v2299 = vand.u32 %v2298, 4294901760
        %v2300 = vsub.f32 %v2298, %v2299
        %v2301 = vand.u32 %v2300, 4294901760
        %2302 = vmatmul.mubr.f32.gmra.mxu0 %v2301
        %v2303 = vpop.f32.mrf.mxu0
        %v2304 = vadd.f32 %v2192, %v2303
        %v2305 = vpop.f32.mrf.mxu0
        %2306 = vdwg.mxu0
        %2307 = vmatprep.subr.mxu0 0.0
        %v2308 = vand.u32 %v381, 4294901760
        %v2309 = vsub.f32 %v381, %v2308
        %v2310 = vand.u32 %v2309, 4294901760
        %v2311 = vsub.f32 %v2309, %v2310
        %v2312 = vand.u32 %v2311, 4294901760
        %2313 = vmatpush1.msra.mxu0 %v2312
        %2314 = vmatprep.subr.mxu0 0.0
        %v2315 = vand.u32 %v380, 4294901760
        %v2316 = vsub.f32 %v380, %v2315
        %v2317 = vand.u32 %v2316, 4294901760
        %v2318 = vsub.f32 %v2316, %v2317
        %v2319 = vand.u32 %v2318, 4294901760
        %2320 = vmatpush1.msra.mxu0 %v2319
        %2321 = vmatprep.subr.mxu0 0.0
        %v2322 = vand.u32 %v379, 4294901760
        %v2323 = vsub.f32 %v379, %v2322
        %v2324 = vand.u32 %v2323, 4294901760
        %v2325 = vsub.f32 %v2323, %v2324
        %v2326 = vand.u32 %v2325, 4294901760
        %2327 = vmatpush1.msra.mxu0 %v2326
        %2328 = vmatprep.subr.mxu0 0.0
        %v2329 = vand.u32 %v378, 4294901760
        %v2330 = vsub.f32 %v378, %v2329
        %v2331 = vand.u32 %v2330, 4294901760
        %v2332 = vsub.f32 %v2330, %v2331
        %v2333 = vand.u32 %v2332, 4294901760
        %2334 = vmatpush1.msra.mxu0 %v2333
        %2335 = vmatprep.subr.mxu0 0.0
        %v2336 = vand.u32 %v377, 4294901760
        %v2337 = vsub.f32 %v377, %v2336
        %v2338 = vand.u32 %v2337, 4294901760
        %v2339 = vsub.f32 %v2337, %v2338
        %v2340 = vand.u32 %v2339, 4294901760
        %2341 = vmatpush1.msra.mxu0 %v2340
        %2342 = vmatprep.subr.mxu0 0.0
        %v2343 = vand.u32 %v376, 4294901760
        %v2344 = vsub.f32 %v376, %v2343
        %v2345 = vand.u32 %v2344, 4294901760
        %v2346 = vsub.f32 %v2344, %v2345
        %v2347 = vand.u32 %v2346, 4294901760
        %2348 = vmatpush1.msra.mxu0 %v2347
        %2349 = vmatprep.subr.mxu0 0.0
        %v2350 = vand.u32 %v375, 4294901760
        %v2351 = vsub.f32 %v375, %v2350
        %v2352 = vand.u32 %v2351, 4294901760
        %v2353 = vsub.f32 %v2351, %v2352
        %v2354 = vand.u32 %v2353, 4294901760
        %2355 = vmatpush1.msra.mxu0 %v2354
        %2356 = vmatprep.subr.mxu0 0.0
        %v2357 = vand.u32 %v374, 4294901760
        %v2358 = vsub.f32 %v374, %v2357
        %v2359 = vand.u32 %v2358, 4294901760
        %v2360 = vsub.f32 %v2358, %v2359
        %v2361 = vand.u32 %v2360, 4294901760
        %2362 = vmatpush1.msra.mxu0 %v2361
        %2363 = vmatprep.subr.mxu0 0.0
        %v2364 = vand.u32 %v373, 4294901760
        %v2365 = vsub.f32 %v373, %v2364
        %v2366 = vand.u32 %v2365, 4294901760
        %v2367 = vsub.f32 %v2365, %v2366
        %v2368 = vand.u32 %v2367, 4294901760
        %2369 = vmatpush1.msra.mxu0 %v2368
        %2370 = vmatprep.subr.mxu0 0.0
        %v2371 = vand.u32 %v372, 4294901760
        %v2372 = vsub.f32 %v372, %v2371
        %v2373 = vand.u32 %v2372, 4294901760
        %v2374 = vsub.f32 %v2372, %v2373
        %v2375 = vand.u32 %v2374, 4294901760
        %2376 = vmatpush1.msra.mxu0 %v2375
        %2377 = vmatprep.subr.mxu0 0.0
        %v2378 = vand.u32 %v371, 4294901760
        %v2379 = vsub.f32 %v371, %v2378
        %v2380 = vand.u32 %v2379, 4294901760
        %v2381 = vsub.f32 %v2379, %v2380
        %v2382 = vand.u32 %v2381, 4294901760
        %2383 = vmatpush1.msra.mxu0 %v2382
        %2384 = vmatprep.subr.mxu0 0.0
        %v2385 = vand.u32 %v370, 4294901760
        %v2386 = vsub.f32 %v370, %v2385
        %v2387 = vand.u32 %v2386, 4294901760
        %v2388 = vsub.f32 %v2386, %v2387
        %v2389 = vand.u32 %v2388, 4294901760
        %2390 = vmatpush1.msra.mxu0 %v2389
        %2391 = vmatprep.subr.mxu0 0.0
        %v2392 = vand.u32 %v369, 4294901760
        %v2393 = vsub.f32 %v369, %v2392
        %v2394 = vand.u32 %v2393, 4294901760
        %v2395 = vsub.f32 %v2393, %v2394
        %v2396 = vand.u32 %v2395, 4294901760
        %2397 = vmatpush1.msra.mxu0 %v2396
        %2398 = vmatprep.subr.mxu0 0.0
        %v2399 = vand.u32 %v368, 4294901760
        %v2400 = vsub.f32 %v368, %v2399
        %v2401 = vand.u32 %v2400, 4294901760
        %v2402 = vsub.f32 %v2400, %v2401
        %v2403 = vand.u32 %v2402, 4294901760
        %2404 = vmatpush1.msra.mxu0 %v2403
        %2405 = vmatprep.subr.mxu0 0.0
        %v2406 = vand.u32 %v367, 4294901760
        %v2407 = vsub.f32 %v367, %v2406
        %v2408 = vand.u32 %v2407, 4294901760
        %v2409 = vsub.f32 %v2407, %v2408
        %v2410 = vand.u32 %v2409, 4294901760
        %2411 = vmatpush1.msra.mxu0 %v2410
        %2412 = vmatprep.subr.mxu0 0.0
        %v2413 = vand.u32 %v366, 4294901760
        %v2414 = vsub.f32 %v366, %v2413
        %v2415 = vand.u32 %v2414, 4294901760
        %v2416 = vsub.f32 %v2414, %v2415
        %v2417 = vand.u32 %v2416, 4294901760
        %2418 = vmatpush1.msra.mxu0 %v2417
        %2419 = vmatprep.subr.mxu0 0.0
        %v2420 = vand.u32 %v397, 4294901760
        %v2421 = vsub.f32 %v397, %v2420
        %v2422 = vand.u32 %v2421, 4294901760
        %v2423 = vsub.f32 %v2421, %v2422
        %v2424 = vand.u32 %v2423, 4294901760
        %2425 = vmatpush2.msra.mxu0 %v2424
        %2426 = vmatprep.subr.mxu0 0.0
        %v2427 = vand.u32 %v396, 4294901760
        %v2428 = vsub.f32 %v396, %v2427
        %v2429 = vand.u32 %v2428, 4294901760
        %v2430 = vsub.f32 %v2428, %v2429
        %v2431 = vand.u32 %v2430, 4294901760
        %2432 = vmatpush2.msra.mxu0 %v2431
        %2433 = vmatprep.subr.mxu0 0.0
        %v2434 = vand.u32 %v395, 4294901760
        %v2435 = vsub.f32 %v395, %v2434
        %v2436 = vand.u32 %v2435, 4294901760
        %v2437 = vsub.f32 %v2435, %v2436
        %v2438 = vand.u32 %v2437, 4294901760
        %2439 = vmatpush2.msra.mxu0 %v2438
        %2440 = vmatprep.subr.mxu0 0.0
        %v2441 = vand.u32 %v394, 4294901760
        %v2442 = vsub.f32 %v394, %v2441
        %v2443 = vand.u32 %v2442, 4294901760
        %v2444 = vsub.f32 %v2442, %v2443
        %v2445 = vand.u32 %v2444, 4294901760
        %2446 = vmatpush2.msra.mxu0 %v2445
        %2447 = vmatprep.subr.mxu0 0.0
        %v2448 = vand.u32 %v393, 4294901760
        %v2449 = vsub.f32 %v393, %v2448
        %v2450 = vand.u32 %v2449, 4294901760
        %v2451 = vsub.f32 %v2449, %v2450
        %v2452 = vand.u32 %v2451, 4294901760
        %2453 = vmatpush2.msra.mxu0 %v2452
        %2454 = vmatprep.subr.mxu0 0.0
        %v2455 = vand.u32 %v392, 4294901760
        %v2456 = vsub.f32 %v392, %v2455
        %v2457 = vand.u32 %v2456, 4294901760
        %v2458 = vsub.f32 %v2456, %v2457
        %v2459 = vand.u32 %v2458, 4294901760
        %2460 = vmatpush2.msra.mxu0 %v2459
        %2461 = vmatprep.subr.mxu0 0.0
        %v2462 = vand.u32 %v391, 4294901760
        %v2463 = vsub.f32 %v391, %v2462
        %v2464 = vand.u32 %v2463, 4294901760
        %v2465 = vsub.f32 %v2463, %v2464
        %v2466 = vand.u32 %v2465, 4294901760
        %2467 = vmatpush2.msra.mxu0 %v2466
        %2468 = vmatprep.subr.mxu0 0.0
        %v2469 = vand.u32 %v390, 4294901760
        %v2470 = vsub.f32 %v390, %v2469
        %v2471 = vand.u32 %v2470, 4294901760
        %v2472 = vsub.f32 %v2470, %v2471
        %v2473 = vand.u32 %v2472, 4294901760
        %2474 = vmatpush2.msra.mxu0 %v2473
        %2475 = vmatprep.subr.mxu0 0.0
        %v2476 = vand.u32 %v389, 4294901760
        %v2477 = vsub.f32 %v389, %v2476
        %v2478 = vand.u32 %v2477, 4294901760
        %v2479 = vsub.f32 %v2477, %v2478
        %v2480 = vand.u32 %v2479, 4294901760
        %2481 = vmatpush2.msra.mxu0 %v2480
        %2482 = vmatprep.subr.mxu0 0.0
        %v2483 = vand.u32 %v388, 4294901760
        %v2484 = vsub.f32 %v388, %v2483
        %v2485 = vand.u32 %v2484, 4294901760
        %v2486 = vsub.f32 %v2484, %v2485
        %v2487 = vand.u32 %v2486, 4294901760
        %2488 = vmatpush2.msra.mxu0 %v2487
        %2489 = vmatprep.subr.mxu0 0.0
        %v2490 = vand.u32 %v387, 4294901760
        %v2491 = vsub.f32 %v387, %v2490
        %v2492 = vand.u32 %v2491, 4294901760
        %v2493 = vsub.f32 %v2491, %v2492
        %v2494 = vand.u32 %v2493, 4294901760
        %2495 = vmatpush2.msra.mxu0 %v2494
        %2496 = vmatprep.subr.mxu0 0.0
        %v2497 = vand.u32 %v386, 4294901760
        %v2498 = vsub.f32 %v386, %v2497
        %v2499 = vand.u32 %v2498, 4294901760
        %v2500 = vsub.f32 %v2498, %v2499
        %v2501 = vand.u32 %v2500, 4294901760
        %2502 = vmatpush2.msra.mxu0 %v2501
        %2503 = vmatprep.subr.mxu0 0.0
        %v2504 = vand.u32 %v385, 4294901760
        %v2505 = vsub.f32 %v385, %v2504
        %v2506 = vand.u32 %v2505, 4294901760
        %v2507 = vsub.f32 %v2505, %v2506
        %v2508 = vand.u32 %v2507, 4294901760
        %2509 = vmatpush2.msra.mxu0 %v2508
        %2510 = vmatprep.subr.mxu0 0.0
        %v2511 = vand.u32 %v384, 4294901760
        %v2512 = vsub.f32 %v384, %v2511
        %v2513 = vand.u32 %v2512, 4294901760
        %v2514 = vsub.f32 %v2512, %v2513
        %v2515 = vand.u32 %v2514, 4294901760
        %2516 = vmatpush2.msra.mxu0 %v2515
        %2517 = vmatprep.subr.mxu0 0.0
        %v2518 = vand.u32 %v383, 4294901760
        %v2519 = vsub.f32 %v383, %v2518
        %v2520 = vand.u32 %v2519, 4294901760
        %v2521 = vsub.f32 %v2519, %v2520
        %v2522 = vand.u32 %v2521, 4294901760
        %2523 = vmatpush2.msra.mxu0 %v2522
        %2524 = vmatprep.subr.mxu0 0.0
        %v2525 = vand.u32 %v382, 4294901760
        %v2526 = vsub.f32 %v382, %v2525
        %v2527 = vand.u32 %v2526, 4294901760
        %v2528 = vsub.f32 %v2526, %v2527
        %v2529 = vand.u32 %v2528, 4294901760
        %2530 = vmatpush2.msra.mxu0 %v2529
        %v2531 = vand.u32 %v454, 4294901760
        %2532 = vmatprep.mubr.f32.mxu0 %v2531
        %v2533 = vand.u32 %v450, 4294901760
        %2534 = vmatmul.mubr.f32.gmra.mxu0 %v2533
        %v2535 = vpop.f32.mrf.mxu0
        %v2536 = vadd.f32 %v2304, %v2535
        %v2537 = vpop.f32.mrf.mxu0
        %2538 = vdwg.mxu0
        %2539 = vmatprep.subr.mxu0 0.0
        %v2540 = vand.u32 %v381, 4294901760
        %v2541 = vsub.f32 %v381, %v2540
        %2542 = vmatpush1.msra.mxu0 %v2541
        %2543 = vmatprep.subr.mxu0 0.0
        %v2544 = vand.u32 %v380, 4294901760
        %v2545 = vsub.f32 %v380, %v2544
        %2546 = vmatpush1.msra.mxu0 %v2545
        %2547 = vmatprep.subr.mxu0 0.0
        %v2548 = vand.u32 %v379, 4294901760
        %v2549 = vsub.f32 %v379, %v2548
        %2550 = vmatpush1.msra.mxu0 %v2549
        %2551 = vmatprep.subr.mxu0 0.0
        %v2552 = vand.u32 %v378, 4294901760
        %v2553 = vsub.f32 %v378, %v2552
        %2554 = vmatpush1.msra.mxu0 %v2553
        %2555 = vmatprep.subr.mxu0 0.0
        %v2556 = vand.u32 %v377, 4294901760
        %v2557 = vsub.f32 %v377, %v2556
        %2558 = vmatpush1.msra.mxu0 %v2557
        %2559 = vmatprep.subr.mxu0 0.0
        %v2560 = vand.u32 %v376, 4294901760
        %v2561 = vsub.f32 %v376, %v2560
        %2562 = vmatpush1.msra.mxu0 %v2561
        %2563 = vmatprep.subr.mxu0 0.0
        %v2564 = vand.u32 %v375, 4294901760
        %v2565 = vsub.f32 %v375, %v2564
        %2566 = vmatpush1.msra.mxu0 %v2565
        %2567 = vmatprep.subr.mxu0 0.0
        %v2568 = vand.u32 %v374, 4294901760
        %v2569 = vsub.f32 %v374, %v2568
        %2570 = vmatpush1.msra.mxu0 %v2569
        %2571 = vmatprep.subr.mxu0 0.0
        %v2572 = vand.u32 %v373, 4294901760
        %v2573 = vsub.f32 %v373, %v2572
        %2574 = vmatpush1.msra.mxu0 %v2573
        %2575 = vmatprep.subr.mxu0 0.0
        %v2576 = vand.u32 %v372, 4294901760
        %v2577 = vsub.f32 %v372, %v2576
        %2578 = vmatpush1.msra.mxu0 %v2577
        %2579 = vmatprep.subr.mxu0 0.0
        %v2580 = vand.u32 %v371, 4294901760
        %v2581 = vsub.f32 %v371, %v2580
        %2582 = vmatpush1.msra.mxu0 %v2581
        %2583 = vmatprep.subr.mxu0 0.0
        %v2584 = vand.u32 %v370, 4294901760
        %v2585 = vsub.f32 %v370, %v2584
        %2586 = vmatpush1.msra.mxu0 %v2585
        %2587 = vmatprep.subr.mxu0 0.0
        %v2588 = vand.u32 %v369, 4294901760
        %v2589 = vsub.f32 %v369, %v2588
        %2590 = vmatpush1.msra.mxu0 %v2589
        %2591 = vmatprep.subr.mxu0 0.0
        %v2592 = vand.u32 %v368, 4294901760
        %v2593 = vsub.f32 %v368, %v2592
        %2594 = vmatpush1.msra.mxu0 %v2593
        %2595 = vmatprep.subr.mxu0 0.0
        %v2596 = vand.u32 %v367, 4294901760
        %v2597 = vsub.f32 %v367, %v2596
        %2598 = vmatpush1.msra.mxu0 %v2597
        %2599 = vmatprep.subr.mxu0 0.0
        %v2600 = vand.u32 %v366, 4294901760
        %v2601 = vsub.f32 %v366, %v2600
        %2602 = vmatpush1.msra.mxu0 %v2601
        %2603 = vmatprep.subr.mxu0 0.0
        %v2604 = vand.u32 %v397, 4294901760
        %v2605 = vsub.f32 %v397, %v2604
        %2606 = vmatpush2.msra.mxu0 %v2605
        %2607 = vmatprep.subr.mxu0 0.0
        %v2608 = vand.u32 %v396, 4294901760
        %v2609 = vsub.f32 %v396, %v2608
        %2610 = vmatpush2.msra.mxu0 %v2609
        %2611 = vmatprep.subr.mxu0 0.0
        %v2612 = vand.u32 %v395, 4294901760
        %v2613 = vsub.f32 %v395, %v2612
        %2614 = vmatpush2.msra.mxu0 %v2613
        %2615 = vmatprep.subr.mxu0 0.0
        %v2616 = vand.u32 %v394, 4294901760
        %v2617 = vsub.f32 %v394, %v2616
        %2618 = vmatpush2.msra.mxu0 %v2617
        %2619 = vmatprep.subr.mxu0 0.0
        %v2620 = vand.u32 %v393, 4294901760
        %v2621 = vsub.f32 %v393, %v2620
        %2622 = vmatpush2.msra.mxu0 %v2621
        %2623 = vmatprep.subr.mxu0 0.0
        %v2624 = vand.u32 %v392, 4294901760
        %v2625 = vsub.f32 %v392, %v2624
        %2626 = vmatpush2.msra.mxu0 %v2625
        %2627 = vmatprep.subr.mxu0 0.0
        %v2628 = vand.u32 %v391, 4294901760
        %v2629 = vsub.f32 %v391, %v2628
        %2630 = vmatpush2.msra.mxu0 %v2629
        %2631 = vmatprep.subr.mxu0 0.0
        %v2632 = vand.u32 %v390, 4294901760
        %v2633 = vsub.f32 %v390, %v2632
        %2634 = vmatpush2.msra.mxu0 %v2633
        %2635 = vmatprep.subr.mxu0 0.0
        %v2636 = vand.u32 %v389, 4294901760
        %v2637 = vsub.f32 %v389, %v2636
        %2638 = vmatpush2.msra.mxu0 %v2637
        %2639 = vmatprep.subr.mxu0 0.0
        %v2640 = vand.u32 %v388, 4294901760
        %v2641 = vsub.f32 %v388, %v2640
        %2642 = vmatpush2.msra.mxu0 %v2641
        %2643 = vmatprep.subr.mxu0 0.0
        %v2644 = vand.u32 %v387, 4294901760
        %v2645 = vsub.f32 %v387, %v2644
        %2646 = vmatpush2.msra.mxu0 %v2645
        %2647 = vmatprep.subr.mxu0 0.0
        %v2648 = vand.u32 %v386, 4294901760
        %v2649 = vsub.f32 %v386, %v2648
        %2650 = vmatpush2.msra.mxu0 %v2649
        %2651 = vmatprep.subr.mxu0 0.0
        %v2652 = vand.u32 %v385, 4294901760
        %v2653 = vsub.f32 %v385, %v2652
        %2654 = vmatpush2.msra.mxu0 %v2653
        %2655 = vmatprep.subr.mxu0 0.0
        %v2656 = vand.u32 %v384, 4294901760
        %v2657 = vsub.f32 %v384, %v2656
        %2658 = vmatpush2.msra.mxu0 %v2657
        %2659 = vmatprep.subr.mxu0 0.0
        %v2660 = vand.u32 %v383, 4294901760
        %v2661 = vsub.f32 %v383, %v2660
        %2662 = vmatpush2.msra.mxu0 %v2661
        %2663 = vmatprep.subr.mxu0 0.0
        %v2664 = vand.u32 %v382, 4294901760
        %v2665 = vsub.f32 %v382, %v2664
        %2666 = vmatpush2.msra.mxu0 %v2665
        %v2667 = vand.u32 %v454, 4294901760
        %v2668 = vsub.f32 %v454, %v2667
        %2669 = vmatprep.mubr.f32.mxu0 %v2668
        %v2670 = vand.u32 %v450, 4294901760
        %v2671 = vsub.f32 %v450, %v2670
        %2672 = vmatmul.mubr.f32.gmra.mxu0 %v2671
        %v2673 = vpop.f32.mrf.mxu0
        %v2674 = vadd.f32 %v2536, %v2673
        %v2675 = vpop.f32.mrf.mxu0
        %2676 = vdwg.mxu0
        %2677 = vmatprep.subr.mxu0 0.0
        %v2678 = vand.u32 %v381, 4294901760
        %2679 = vmatpush1.msra.mxu0 %v2678
        %2680 = vmatprep.subr.mxu0 0.0
        %v2681 = vand.u32 %v380, 4294901760
        %2682 = vmatpush1.msra.mxu0 %v2681
        %2683 = vmatprep.subr.mxu0 0.0
        %v2684 = vand.u32 %v379, 4294901760
        %2685 = vmatpush1.msra.mxu0 %v2684
        %2686 = vmatprep.subr.mxu0 0.0
        %v2687 = vand.u32 %v378, 4294901760
        %2688 = vmatpush1.msra.mxu0 %v2687
        %2689 = vmatprep.subr.mxu0 0.0
        %v2690 = vand.u32 %v377, 4294901760
        %2691 = vmatpush1.msra.mxu0 %v2690
        %2692 = vmatprep.subr.mxu0 0.0
        %v2693 = vand.u32 %v376, 4294901760
        %2694 = vmatpush1.msra.mxu0 %v2693
        %2695 = vmatprep.subr.mxu0 0.0
        %v2696 = vand.u32 %v375, 4294901760
        %2697 = vmatpush1.msra.mxu0 %v2696
        %2698 = vmatprep.subr.mxu0 0.0
        %v2699 = vand.u32 %v374, 4294901760
        %2700 = vmatpush1.msra.mxu0 %v2699
        %2701 = vmatprep.subr.mxu0 0.0
        %v2702 = vand.u32 %v373, 4294901760
        %2703 = vmatpush1.msra.mxu0 %v2702
        %2704 = vmatprep.subr.mxu0 0.0
        %v2705 = vand.u32 %v372, 4294901760
        %2706 = vmatpush1.msra.mxu0 %v2705
        %2707 = vmatprep.subr.mxu0 0.0
        %v2708 = vand.u32 %v371, 4294901760
        %2709 = vmatpush1.msra.mxu0 %v2708
        %2710 = vmatprep.subr.mxu0 0.0
        %v2711 = vand.u32 %v370, 4294901760
        %2712 = vmatpush1.msra.mxu0 %v2711
        %2713 = vmatprep.subr.mxu0 0.0
        %v2714 = vand.u32 %v369, 4294901760
        %2715 = vmatpush1.msra.mxu0 %v2714
        %2716 = vmatprep.subr.mxu0 0.0
        %v2717 = vand.u32 %v368, 4294901760
        %2718 = vmatpush1.msra.mxu0 %v2717
        %2719 = vmatprep.subr.mxu0 0.0
        %v2720 = vand.u32 %v367, 4294901760
        %2721 = vmatpush1.msra.mxu0 %v2720
        %2722 = vmatprep.subr.mxu0 0.0
        %v2723 = vand.u32 %v366, 4294901760
        %2724 = vmatpush1.msra.mxu0 %v2723
        %2725 = vmatprep.subr.mxu0 0.0
        %v2726 = vand.u32 %v397, 4294901760
        %2727 = vmatpush2.msra.mxu0 %v2726
        %2728 = vmatprep.subr.mxu0 0.0
        %v2729 = vand.u32 %v396, 4294901760
        %2730 = vmatpush2.msra.mxu0 %v2729
        %2731 = vmatprep.subr.mxu0 0.0
        %v2732 = vand.u32 %v395, 4294901760
        %2733 = vmatpush2.msra.mxu0 %v2732
        %2734 = vmatprep.subr.mxu0 0.0
        %v2735 = vand.u32 %v394, 4294901760
        %2736 = vmatpush2.msra.mxu0 %v2735
        %2737 = vmatprep.subr.mxu0 0.0
        %v2738 = vand.u32 %v393, 4294901760
        %2739 = vmatpush2.msra.mxu0 %v2738
        %2740 = vmatprep.subr.mxu0 0.0
        %v2741 = vand.u32 %v392, 4294901760
        %2742 = vmatpush2.msra.mxu0 %v2741
        %2743 = vmatprep.subr.mxu0 0.0
        %v2744 = vand.u32 %v391, 4294901760
        %2745 = vmatpush2.msra.mxu0 %v2744
        %2746 = vmatprep.subr.mxu0 0.0
        %v2747 = vand.u32 %v390, 4294901760
        %2748 = vmatpush2.msra.mxu0 %v2747
        %2749 = vmatprep.subr.mxu0 0.0
        %v2750 = vand.u32 %v389, 4294901760
        %2751 = vmatpush2.msra.mxu0 %v2750
        %2752 = vmatprep.subr.mxu0 0.0
        %v2753 = vand.u32 %v388, 4294901760
        %2754 = vmatpush2.msra.mxu0 %v2753
        %2755 = vmatprep.subr.mxu0 0.0
        %v2756 = vand.u32 %v387, 4294901760
        %2757 = vmatpush2.msra.mxu0 %v2756
        %2758 = vmatprep.subr.mxu0 0.0
        %v2759 = vand.u32 %v386, 4294901760
        %2760 = vmatpush2.msra.mxu0 %v2759
        %2761 = vmatprep.subr.mxu0 0.0
        %v2762 = vand.u32 %v385, 4294901760
        %2763 = vmatpush2.msra.mxu0 %v2762
        %2764 = vmatprep.subr.mxu0 0.0
        %v2765 = vand.u32 %v384, 4294901760
        %2766 = vmatpush2.msra.mxu0 %v2765
        %2767 = vmatprep.subr.mxu0 0.0
        %v2768 = vand.u32 %v383, 4294901760
        %2769 = vmatpush2.msra.mxu0 %v2768
        %2770 = vmatprep.subr.mxu0 0.0
        %v2771 = vand.u32 %v382, 4294901760
        %2772 = vmatpush2.msra.mxu0 %v2771
        %v2773 = vand.u32 %v454, 4294901760
        %v2774 = vsub.f32 %v454, %v2773
        %v2775 = vand.u32 %v2774, 4294901760
        %2776 = vmatprep.mubr.f32.mxu0 %v2775
        %v2777 = vand.u32 %v450, 4294901760
        %v2778 = vsub.f32 %v450, %v2777
        %v2779 = vand.u32 %v2778, 4294901760
        %2780 = vmatmul.mubr.f32.gmra.mxu0 %v2779
        %v2781 = vpop.f32.mrf.mxu0
        %v2782 = vadd.f32 %v2674, %v2781
        %v2783 = vpop.f32.mrf.mxu0
        %2784 = vdwg.mxu0
        %2785 = vmatprep.subr.mxu0 0.0
        %v2786 = vand.u32 %v381, 4294901760
        %v2787 = vsub.f32 %v381, %v2786
        %v2788 = vand.u32 %v2787, 4294901760
        %2789 = vmatpush1.msra.mxu0 %v2788
        %2790 = vmatprep.subr.mxu0 0.0
        %v2791 = vand.u32 %v380, 4294901760
        %v2792 = vsub.f32 %v380, %v2791
        %v2793 = vand.u32 %v2792, 4294901760
        %2794 = vmatpush1.msra.mxu0 %v2793
        %2795 = vmatprep.subr.mxu0 0.0
        %v2796 = vand.u32 %v379, 4294901760
        %v2797 = vsub.f32 %v379, %v2796
        %v2798 = vand.u32 %v2797, 4294901760
        %2799 = vmatpush1.msra.mxu0 %v2798
        %2800 = vmatprep.subr.mxu0 0.0
        %v2801 = vand.u32 %v378, 4294901760
        %v2802 = vsub.f32 %v378, %v2801
        %v2803 = vand.u32 %v2802, 4294901760
        %2804 = vmatpush1.msra.mxu0 %v2803
        %2805 = vmatprep.subr.mxu0 0.0
        %v2806 = vand.u32 %v377, 4294901760
        %v2807 = vsub.f32 %v377, %v2806
        %v2808 = vand.u32 %v2807, 4294901760
        %2809 = vmatpush1.msra.mxu0 %v2808
        %2810 = vmatprep.subr.mxu0 0.0
        %v2811 = vand.u32 %v376, 4294901760
        %v2812 = vsub.f32 %v376, %v2811
        %v2813 = vand.u32 %v2812, 4294901760
        %2814 = vmatpush1.msra.mxu0 %v2813
        %2815 = vmatprep.subr.mxu0 0.0
        %v2816 = vand.u32 %v375, 4294901760
        %v2817 = vsub.f32 %v375, %v2816
        %v2818 = vand.u32 %v2817, 4294901760
        %2819 = vmatpush1.msra.mxu0 %v2818
        %2820 = vmatprep.subr.mxu0 0.0
        %v2821 = vand.u32 %v374, 4294901760
        %v2822 = vsub.f32 %v374, %v2821
        %v2823 = vand.u32 %v2822, 4294901760
        %2824 = vmatpush1.msra.mxu0 %v2823
        %2825 = vmatprep.subr.mxu0 0.0
        %v2826 = vand.u32 %v373, 4294901760
        %v2827 = vsub.f32 %v373, %v2826
        %v2828 = vand.u32 %v2827, 4294901760
        %2829 = vmatpush1.msra.mxu0 %v2828
        %2830 = vmatprep.subr.mxu0 0.0
        %v2831 = vand.u32 %v372, 4294901760
        %v2832 = vsub.f32 %v372, %v2831
        %v2833 = vand.u32 %v2832, 4294901760
        %2834 = vmatpush1.msra.mxu0 %v2833
        %2835 = vmatprep.subr.mxu0 0.0
        %v2836 = vand.u32 %v371, 4294901760
        %v2837 = vsub.f32 %v371, %v2836
        %v2838 = vand.u32 %v2837, 4294901760
        %2839 = vmatpush1.msra.mxu0 %v2838
        %2840 = vmatprep.subr.mxu0 0.0
        %v2841 = vand.u32 %v370, 4294901760
        %v2842 = vsub.f32 %v370, %v2841
        %v2843 = vand.u32 %v2842, 4294901760
        %2844 = vmatpush1.msra.mxu0 %v2843
        %2845 = vmatprep.subr.mxu0 0.0
        %v2846 = vand.u32 %v369, 4294901760
        %v2847 = vsub.f32 %v369, %v2846
        %v2848 = vand.u32 %v2847, 4294901760
        %2849 = vmatpush1.msra.mxu0 %v2848
        %2850 = vmatprep.subr.mxu0 0.0
        %v2851 = vand.u32 %v368, 4294901760
        %v2852 = vsub.f32 %v368, %v2851
        %v2853 = vand.u32 %v2852, 4294901760
        %2854 = vmatpush1.msra.mxu0 %v2853
        %2855 = vmatprep.subr.mxu0 0.0
        %v2856 = vand.u32 %v367, 4294901760
        %v2857 = vsub.f32 %v367, %v2856
        %v2858 = vand.u32 %v2857, 4294901760
        %2859 = vmatpush1.msra.mxu0 %v2858
        %2860 = vmatprep.subr.mxu0 0.0
        %v2861 = vand.u32 %v366, 4294901760
        %v2862 = vsub.f32 %v366, %v2861
        %v2863 = vand.u32 %v2862, 4294901760
        %2864 = vmatpush1.msra.mxu0 %v2863
        %2865 = vmatprep.subr.mxu0 0.0
        %v2866 = vand.u32 %v397, 4294901760
        %v2867 = vsub.f32 %v397, %v2866
        %v2868 = vand.u32 %v2867, 4294901760
        %2869 = vmatpush2.msra.mxu0 %v2868
        %2870 = vmatprep.subr.mxu0 0.0
        %v2871 = vand.u32 %v396, 4294901760
        %v2872 = vsub.f32 %v396, %v2871
        %v2873 = vand.u32 %v2872, 4294901760
        %2874 = vmatpush2.msra.mxu0 %v2873
        %2875 = vmatprep.subr.mxu0 0.0
        %v2876 = vand.u32 %v395, 4294901760
        %v2877 = vsub.f32 %v395, %v2876
        %v2878 = vand.u32 %v2877, 4294901760
        %2879 = vmatpush2.msra.mxu0 %v2878
        %2880 = vmatprep.subr.mxu0 0.0
        %v2881 = vand.u32 %v394, 4294901760
        %v2882 = vsub.f32 %v394, %v2881
        %v2883 = vand.u32 %v2882, 4294901760
        %2884 = vmatpush2.msra.mxu0 %v2883
        %2885 = vmatprep.subr.mxu0 0.0
        %v2886 = vand.u32 %v393, 4294901760
        %v2887 = vsub.f32 %v393, %v2886
        %v2888 = vand.u32 %v2887, 4294901760
        %2889 = vmatpush2.msra.mxu0 %v2888
        %2890 = vmatprep.subr.mxu0 0.0
        %v2891 = vand.u32 %v392, 4294901760
        %v2892 = vsub.f32 %v392, %v2891
        %v2893 = vand.u32 %v2892, 4294901760
        %2894 = vmatpush2.msra.mxu0 %v2893
        %2895 = vmatprep.subr.mxu0 0.0
        %v2896 = vand.u32 %v391, 4294901760
        %v2897 = vsub.f32 %v391, %v2896
        %v2898 = vand.u32 %v2897, 4294901760
        %2899 = vmatpush2.msra.mxu0 %v2898
        %2900 = vmatprep.subr.mxu0 0.0
        %v2901 = vand.u32 %v390, 4294901760
        %v2902 = vsub.f32 %v390, %v2901
        %v2903 = vand.u32 %v2902, 4294901760
        %2904 = vmatpush2.msra.mxu0 %v2903
        %2905 = vmatprep.subr.mxu0 0.0
        %v2906 = vand.u32 %v389, 4294901760
        %v2907 = vsub.f32 %v389, %v2906
        %v2908 = vand.u32 %v2907, 4294901760
        %2909 = vmatpush2.msra.mxu0 %v2908
        %2910 = vmatprep.subr.mxu0 0.0
        %v2911 = vand.u32 %v388, 4294901760
        %v2912 = vsub.f32 %v388, %v2911
        %v2913 = vand.u32 %v2912, 4294901760
        %2914 = vmatpush2.msra.mxu0 %v2913
        %2915 = vmatprep.subr.mxu0 0.0
        %v2916 = vand.u32 %v387, 4294901760
        %v2917 = vsub.f32 %v387, %v2916
        %v2918 = vand.u32 %v2917, 4294901760
        %2919 = vmatpush2.msra.mxu0 %v2918
        %2920 = vmatprep.subr.mxu0 0.0
        %v2921 = vand.u32 %v386, 4294901760
        %v2922 = vsub.f32 %v386, %v2921
        %v2923 = vand.u32 %v2922, 4294901760
        %2924 = vmatpush2.msra.mxu0 %v2923
        %2925 = vmatprep.subr.mxu0 0.0
        %v2926 = vand.u32 %v385, 4294901760
        %v2927 = vsub.f32 %v385, %v2926
        %v2928 = vand.u32 %v2927, 4294901760
        %2929 = vmatpush2.msra.mxu0 %v2928
        %2930 = vmatprep.subr.mxu0 0.0
        %v2931 = vand.u32 %v384, 4294901760
        %v2932 = vsub.f32 %v384, %v2931
        %v2933 = vand.u32 %v2932, 4294901760
        %2934 = vmatpush2.msra.mxu0 %v2933
        %2935 = vmatprep.subr.mxu0 0.0
        %v2936 = vand.u32 %v383, 4294901760
        %v2937 = vsub.f32 %v383, %v2936
        %v2938 = vand.u32 %v2937, 4294901760
        %2939 = vmatpush2.msra.mxu0 %v2938
        %2940 = vmatprep.subr.mxu0 0.0
        %v2941 = vand.u32 %v382, 4294901760
        %v2942 = vsub.f32 %v382, %v2941
        %v2943 = vand.u32 %v2942, 4294901760
        %2944 = vmatpush2.msra.mxu0 %v2943
        %v2945 = vand.u32 %v454, 4294901760
        %2946 = vmatprep.mubr.f32.mxu0 %v2945
        %v2947 = vand.u32 %v450, 4294901760
        %2948 = vmatmul.mubr.f32.gmra.mxu0 %v2947
        %v2949 = vpop.f32.mrf.mxu0
        %v2950 = vadd.f32 %v2782, %v2949
        %v2951 = vpop.f32.mrf.mxu0
        %2952 = vdwg.mxu0
        %2953 = vmatprep.subr.mxu0 0.0
        %v2954 = vand.u32 %v381, 4294901760
        %2955 = vmatpush1.msra.mxu0 %v2954
        %2956 = vmatprep.subr.mxu0 0.0
        %v2957 = vand.u32 %v380, 4294901760
        %2958 = vmatpush1.msra.mxu0 %v2957
        %2959 = vmatprep.subr.mxu0 0.0
        %v2960 = vand.u32 %v379, 4294901760
        %2961 = vmatpush1.msra.mxu0 %v2960
        %2962 = vmatprep.subr.mxu0 0.0
        %v2963 = vand.u32 %v378, 4294901760
        %2964 = vmatpush1.msra.mxu0 %v2963
        %2965 = vmatprep.subr.mxu0 0.0
        %v2966 = vand.u32 %v377, 4294901760
        %2967 = vmatpush1.msra.mxu0 %v2966
        %2968 = vmatprep.subr.mxu0 0.0
        %v2969 = vand.u32 %v376, 4294901760
        %2970 = vmatpush1.msra.mxu0 %v2969
        %2971 = vmatprep.subr.mxu0 0.0
        %v2972 = vand.u32 %v375, 4294901760
        %2973 = vmatpush1.msra.mxu0 %v2972
        %2974 = vmatprep.subr.mxu0 0.0
        %v2975 = vand.u32 %v374, 4294901760
        %2976 = vmatpush1.msra.mxu0 %v2975
        %2977 = vmatprep.subr.mxu0 0.0
        %v2978 = vand.u32 %v373, 4294901760
        %2979 = vmatpush1.msra.mxu0 %v2978
        %2980 = vmatprep.subr.mxu0 0.0
        %v2981 = vand.u32 %v372, 4294901760
        %2982 = vmatpush1.msra.mxu0 %v2981
        %2983 = vmatprep.subr.mxu0 0.0
        %v2984 = vand.u32 %v371, 4294901760
        %2985 = vmatpush1.msra.mxu0 %v2984
        %2986 = vmatprep.subr.mxu0 0.0
        %v2987 = vand.u32 %v370, 4294901760
        %2988 = vmatpush1.msra.mxu0 %v2987
        %2989 = vmatprep.subr.mxu0 0.0
        %v2990 = vand.u32 %v369, 4294901760
        %2991 = vmatpush1.msra.mxu0 %v2990
        %2992 = vmatprep.subr.mxu0 0.0
        %v2993 = vand.u32 %v368, 4294901760
        %2994 = vmatpush1.msra.mxu0 %v2993
        %2995 = vmatprep.subr.mxu0 0.0
        %v2996 = vand.u32 %v367, 4294901760
        %2997 = vmatpush1.msra.mxu0 %v2996
        %2998 = vmatprep.subr.mxu0 0.0
        %v2999 = vand.u32 %v366, 4294901760
        %3000 = vmatpush1.msra.mxu0 %v2999
        %3001 = vmatprep.subr.mxu0 0.0
        %v3002 = vand.u32 %v397, 4294901760
        %3003 = vmatpush2.msra.mxu0 %v3002
        %3004 = vmatprep.subr.mxu0 0.0
        %v3005 = vand.u32 %v396, 4294901760
        %3006 = vmatpush2.msra.mxu0 %v3005
        %3007 = vmatprep.subr.mxu0 0.0
        %v3008 = vand.u32 %v395, 4294901760
        %3009 = vmatpush2.msra.mxu0 %v3008
        %3010 = vmatprep.subr.mxu0 0.0
        %v3011 = vand.u32 %v394, 4294901760
        %3012 = vmatpush2.msra.mxu0 %v3011
        %3013 = vmatprep.subr.mxu0 0.0
        %v3014 = vand.u32 %v393, 4294901760
        %3015 = vmatpush2.msra.mxu0 %v3014
        %3016 = vmatprep.subr.mxu0 0.0
        %v3017 = vand.u32 %v392, 4294901760
        %3018 = vmatpush2.msra.mxu0 %v3017
        %3019 = vmatprep.subr.mxu0 0.0
        %v3020 = vand.u32 %v391, 4294901760
        %3021 = vmatpush2.msra.mxu0 %v3020
        %3022 = vmatprep.subr.mxu0 0.0
        %v3023 = vand.u32 %v390, 4294901760
        %3024 = vmatpush2.msra.mxu0 %v3023
        %3025 = vmatprep.subr.mxu0 0.0
        %v3026 = vand.u32 %v389, 4294901760
        %3027 = vmatpush2.msra.mxu0 %v3026
        %3028 = vmatprep.subr.mxu0 0.0
        %v3029 = vand.u32 %v388, 4294901760
        %3030 = vmatpush2.msra.mxu0 %v3029
        %3031 = vmatprep.subr.mxu0 0.0
        %v3032 = vand.u32 %v387, 4294901760
        %3033 = vmatpush2.msra.mxu0 %v3032
        %3034 = vmatprep.subr.mxu0 0.0
        %v3035 = vand.u32 %v386, 4294901760
        %3036 = vmatpush2.msra.mxu0 %v3035
        %3037 = vmatprep.subr.mxu0 0.0
        %v3038 = vand.u32 %v385, 4294901760
        %3039 = vmatpush2.msra.mxu0 %v3038
        %3040 = vmatprep.subr.mxu0 0.0
        %v3041 = vand.u32 %v384, 4294901760
        %3042 = vmatpush2.msra.mxu0 %v3041
        %3043 = vmatprep.subr.mxu0 0.0
        %v3044 = vand.u32 %v383, 4294901760
        %3045 = vmatpush2.msra.mxu0 %v3044
        %3046 = vmatprep.subr.mxu0 0.0
        %v3047 = vand.u32 %v382, 4294901760
        %3048 = vmatpush2.msra.mxu0 %v3047
        %v3049 = vand.u32 %v454, 4294901760
        %3050 = vmatprep.mubr.f32.mxu0 %v3049
        %v3051 = vand.u32 %v450, 4294901760
        %3052 = vmatmul.mubr.f32.gmra.mxu0 %v3051
        %v3053 = vpop.f32.mrf.mxu0
        %v3054 = vadd.f32 %v2950, %v3053
        %v3055 = vpop.f32.mrf.mxu0
        %3056 = vdwg.mxu0
        %3057 = vmatprep.subr.mxu0 0.0
        %v3058 = vand.u32 %v413, 4294901760
        %3059 = vmatpush1.msra.mxu0 %v3058
        %3060 = vmatprep.subr.mxu0 0.0
        %v3061 = vand.u32 %v412, 4294901760
        %3062 = vmatpush1.msra.mxu0 %v3061
        %3063 = vmatprep.subr.mxu0 0.0
        %v3064 = vand.u32 %v411, 4294901760
        %3065 = vmatpush1.msra.mxu0 %v3064
        %3066 = vmatprep.subr.mxu0 0.0
        %v3067 = vand.u32 %v410, 4294901760
        %3068 = vmatpush1.msra.mxu0 %v3067
        %3069 = vmatprep.subr.mxu0 0.0
        %v3070 = vand.u32 %v409, 4294901760
        %3071 = vmatpush1.msra.mxu0 %v3070
        %3072 = vmatprep.subr.mxu0 0.0
        %v3073 = vand.u32 %v408, 4294901760
        %3074 = vmatpush1.msra.mxu0 %v3073
        %3075 = vmatprep.subr.mxu0 0.0
        %v3076 = vand.u32 %v407, 4294901760
        %3077 = vmatpush1.msra.mxu0 %v3076
        %3078 = vmatprep.subr.mxu0 0.0
        %v3079 = vand.u32 %v406, 4294901760
        %3080 = vmatpush1.msra.mxu0 %v3079
        %3081 = vmatprep.subr.mxu0 0.0
        %v3082 = vand.u32 %v405, 4294901760
        %3083 = vmatpush1.msra.mxu0 %v3082
        %3084 = vmatprep.subr.mxu0 0.0
        %v3085 = vand.u32 %v404, 4294901760
        %3086 = vmatpush1.msra.mxu0 %v3085
        %3087 = vmatprep.subr.mxu0 0.0
        %v3088 = vand.u32 %v403, 4294901760
        %3089 = vmatpush1.msra.mxu0 %v3088
        %3090 = vmatprep.subr.mxu0 0.0
        %v3091 = vand.u32 %v402, 4294901760
        %3092 = vmatpush1.msra.mxu0 %v3091
        %3093 = vmatprep.subr.mxu0 0.0
        %v3094 = vand.u32 %v401, 4294901760
        %3095 = vmatpush1.msra.mxu0 %v3094
        %3096 = vmatprep.subr.mxu0 0.0
        %v3097 = vand.u32 %v400, 4294901760
        %3098 = vmatpush1.msra.mxu0 %v3097
        %3099 = vmatprep.subr.mxu0 0.0
        %v3100 = vand.u32 %v399, 4294901760
        %3101 = vmatpush1.msra.mxu0 %v3100
        %3102 = vmatprep.subr.mxu0 0.0
        %v3103 = vand.u32 %v398, 4294901760
        %3104 = vmatpush1.msra.mxu0 %v3103
        %3105 = vmatprep.subr.mxu0 0.0
        %v3106 = vand.u32 %v429, 4294901760
        %3107 = vmatpush2.msra.mxu0 %v3106
        %3108 = vmatprep.subr.mxu0 0.0
        %v3109 = vand.u32 %v428, 4294901760
        %3110 = vmatpush2.msra.mxu0 %v3109
        %3111 = vmatprep.subr.mxu0 0.0
        %v3112 = vand.u32 %v427, 4294901760
        %3113 = vmatpush2.msra.mxu0 %v3112
        %3114 = vmatprep.subr.mxu0 0.0
        %v3115 = vand.u32 %v426, 4294901760
        %3116 = vmatpush2.msra.mxu0 %v3115
        %3117 = vmatprep.subr.mxu0 0.0
        %v3118 = vand.u32 %v425, 4294901760
        %3119 = vmatpush2.msra.mxu0 %v3118
        %3120 = vmatprep.subr.mxu0 0.0
        %v3121 = vand.u32 %v424, 4294901760
        %3122 = vmatpush2.msra.mxu0 %v3121
        %3123 = vmatprep.subr.mxu0 0.0
        %v3124 = vand.u32 %v423, 4294901760
        %3125 = vmatpush2.msra.mxu0 %v3124
        %3126 = vmatprep.subr.mxu0 0.0
        %v3127 = vand.u32 %v422, 4294901760
        %3128 = vmatpush2.msra.mxu0 %v3127
        %3129 = vmatprep.subr.mxu0 0.0
        %v3130 = vand.u32 %v421, 4294901760
        %3131 = vmatpush2.msra.mxu0 %v3130
        %3132 = vmatprep.subr.mxu0 0.0
        %v3133 = vand.u32 %v420, 4294901760
        %3134 = vmatpush2.msra.mxu0 %v3133
        %3135 = vmatprep.subr.mxu0 0.0
        %v3136 = vand.u32 %v419, 4294901760
        %3137 = vmatpush2.msra.mxu0 %v3136
        %3138 = vmatprep.subr.mxu0 0.0
        %v3139 = vand.u32 %v418, 4294901760
        %3140 = vmatpush2.msra.mxu0 %v3139
        %3141 = vmatprep.subr.mxu0 0.0
        %v3142 = vand.u32 %v417, 4294901760
        %3143 = vmatpush2.msra.mxu0 %v3142
        %3144 = vmatprep.subr.mxu0 0.0
        %v3145 = vand.u32 %v416, 4294901760
        %3146 = vmatpush2.msra.mxu0 %v3145
        %3147 = vmatprep.subr.mxu0 0.0
        %v3148 = vand.u32 %v415, 4294901760
        %3149 = vmatpush2.msra.mxu0 %v3148
        %3150 = vmatprep.subr.mxu0 0.0
        %v3151 = vand.u32 %v414, 4294901760
        %3152 = vmatpush2.msra.mxu0 %v3151
        %v3153 = vand.u32 %v462, 4294901760
        %v3154 = vsub.f32 %v462, %v3153
        %v3155 = vand.u32 %v3154, 4294901760
        %v3156 = vsub.f32 %v3154, %v3155
        %v3157 = vand.u32 %v3156, 4294901760
        %3158 = vmatprep.mubr.f32.mxu0 %v3157
        %v3159 = vand.u32 %v458, 4294901760
        %v3160 = vsub.f32 %v458, %v3159
        %v3161 = vand.u32 %v3160, 4294901760
        %v3162 = vsub.f32 %v3160, %v3161
        %v3163 = vand.u32 %v3162, 4294901760
        %3164 = vmatmul.mubr.f32.gmra.mxu0 %v3163
        %v3165 = vpop.f32.mrf.mxu0
        %v3166 = vadd.f32 %v3054, %v3165
        %v3167 = vpop.f32.mrf.mxu0
        %3168 = vdwg.mxu0
        %3169 = vmatprep.subr.mxu0 0.0
        %v3170 = vand.u32 %v413, 4294901760
        %v3171 = vsub.f32 %v413, %v3170
        %v3172 = vand.u32 %v3171, 4294901760
        %v3173 = vsub.f32 %v3171, %v3172
        %v3174 = vand.u32 %v3173, 4294901760
        %3175 = vmatpush1.msra.mxu0 %v3174
        %3176 = vmatprep.subr.mxu0 0.0
        %v3177 = vand.u32 %v412, 4294901760
        %v3178 = vsub.f32 %v412, %v3177
        %v3179 = vand.u32 %v3178, 4294901760
        %v3180 = vsub.f32 %v3178, %v3179
        %v3181 = vand.u32 %v3180, 4294901760
        %3182 = vmatpush1.msra.mxu0 %v3181
        %3183 = vmatprep.subr.mxu0 0.0
        %v3184 = vand.u32 %v411, 4294901760
        %v3185 = vsub.f32 %v411, %v3184
        %v3186 = vand.u32 %v3185, 4294901760
        %v3187 = vsub.f32 %v3185, %v3186
        %v3188 = vand.u32 %v3187, 4294901760
        %3189 = vmatpush1.msra.mxu0 %v3188
        %3190 = vmatprep.subr.mxu0 0.0
        %v3191 = vand.u32 %v410, 4294901760
        %v3192 = vsub.f32 %v410, %v3191
        %v3193 = vand.u32 %v3192, 4294901760
        %v3194 = vsub.f32 %v3192, %v3193
        %v3195 = vand.u32 %v3194, 4294901760
        %3196 = vmatpush1.msra.mxu0 %v3195
        %3197 = vmatprep.subr.mxu0 0.0
        %v3198 = vand.u32 %v409, 4294901760
        %v3199 = vsub.f32 %v409, %v3198
        %v3200 = vand.u32 %v3199, 4294901760
        %v3201 = vsub.f32 %v3199, %v3200
        %v3202 = vand.u32 %v3201, 4294901760
        %3203 = vmatpush1.msra.mxu0 %v3202
        %3204 = vmatprep.subr.mxu0 0.0
        %v3205 = vand.u32 %v408, 4294901760
        %v3206 = vsub.f32 %v408, %v3205
        %v3207 = vand.u32 %v3206, 4294901760
        %v3208 = vsub.f32 %v3206, %v3207
        %v3209 = vand.u32 %v3208, 4294901760
        %3210 = vmatpush1.msra.mxu0 %v3209
        %3211 = vmatprep.subr.mxu0 0.0
        %v3212 = vand.u32 %v407, 4294901760
        %v3213 = vsub.f32 %v407, %v3212
        %v3214 = vand.u32 %v3213, 4294901760
        %v3215 = vsub.f32 %v3213, %v3214
        %v3216 = vand.u32 %v3215, 4294901760
        %3217 = vmatpush1.msra.mxu0 %v3216
        %3218 = vmatprep.subr.mxu0 0.0
        %v3219 = vand.u32 %v406, 4294901760
        %v3220 = vsub.f32 %v406, %v3219
        %v3221 = vand.u32 %v3220, 4294901760
        %v3222 = vsub.f32 %v3220, %v3221
        %v3223 = vand.u32 %v3222, 4294901760
        %3224 = vmatpush1.msra.mxu0 %v3223
        %3225 = vmatprep.subr.mxu0 0.0
        %v3226 = vand.u32 %v405, 4294901760
        %v3227 = vsub.f32 %v405, %v3226
        %v3228 = vand.u32 %v3227, 4294901760
        %v3229 = vsub.f32 %v3227, %v3228
        %v3230 = vand.u32 %v3229, 4294901760
        %3231 = vmatpush1.msra.mxu0 %v3230
        %3232 = vmatprep.subr.mxu0 0.0
        %v3233 = vand.u32 %v404, 4294901760
        %v3234 = vsub.f32 %v404, %v3233
        %v3235 = vand.u32 %v3234, 4294901760
        %v3236 = vsub.f32 %v3234, %v3235
        %v3237 = vand.u32 %v3236, 4294901760
        %3238 = vmatpush1.msra.mxu0 %v3237
        %3239 = vmatprep.subr.mxu0 0.0
        %v3240 = vand.u32 %v403, 4294901760
        %v3241 = vsub.f32 %v403, %v3240
        %v3242 = vand.u32 %v3241, 4294901760
        %v3243 = vsub.f32 %v3241, %v3242
        %v3244 = vand.u32 %v3243, 4294901760
        %3245 = vmatpush1.msra.mxu0 %v3244
        %3246 = vmatprep.subr.mxu0 0.0
        %v3247 = vand.u32 %v402, 4294901760
        %v3248 = vsub.f32 %v402, %v3247
        %v3249 = vand.u32 %v3248, 4294901760
        %v3250 = vsub.f32 %v3248, %v3249
        %v3251 = vand.u32 %v3250, 4294901760
        %3252 = vmatpush1.msra.mxu0 %v3251
        %3253 = vmatprep.subr.mxu0 0.0
        %v3254 = vand.u32 %v401, 4294901760
        %v3255 = vsub.f32 %v401, %v3254
        %v3256 = vand.u32 %v3255, 4294901760
        %v3257 = vsub.f32 %v3255, %v3256
        %v3258 = vand.u32 %v3257, 4294901760
        %3259 = vmatpush1.msra.mxu0 %v3258
        %3260 = vmatprep.subr.mxu0 0.0
        %v3261 = vand.u32 %v400, 4294901760
        %v3262 = vsub.f32 %v400, %v3261
        %v3263 = vand.u32 %v3262, 4294901760
        %v3264 = vsub.f32 %v3262, %v3263
        %v3265 = vand.u32 %v3264, 4294901760
        %3266 = vmatpush1.msra.mxu0 %v3265
        %3267 = vmatprep.subr.mxu0 0.0
        %v3268 = vand.u32 %v399, 4294901760
        %v3269 = vsub.f32 %v399, %v3268
        %v3270 = vand.u32 %v3269, 4294901760
        %v3271 = vsub.f32 %v3269, %v3270
        %v3272 = vand.u32 %v3271, 4294901760
        %3273 = vmatpush1.msra.mxu0 %v3272
        %3274 = vmatprep.subr.mxu0 0.0
        %v3275 = vand.u32 %v398, 4294901760
        %v3276 = vsub.f32 %v398, %v3275
        %v3277 = vand.u32 %v3276, 4294901760
        %v3278 = vsub.f32 %v3276, %v3277
        %v3279 = vand.u32 %v3278, 4294901760
        %3280 = vmatpush1.msra.mxu0 %v3279
        %3281 = vmatprep.subr.mxu0 0.0
        %v3282 = vand.u32 %v429, 4294901760
        %v3283 = vsub.f32 %v429, %v3282
        %v3284 = vand.u32 %v3283, 4294901760
        %v3285 = vsub.f32 %v3283, %v3284
        %v3286 = vand.u32 %v3285, 4294901760
        %3287 = vmatpush2.msra.mxu0 %v3286
        %3288 = vmatprep.subr.mxu0 0.0
        %v3289 = vand.u32 %v428, 4294901760
        %v3290 = vsub.f32 %v428, %v3289
        %v3291 = vand.u32 %v3290, 4294901760
        %v3292 = vsub.f32 %v3290, %v3291
        %v3293 = vand.u32 %v3292, 4294901760
        %3294 = vmatpush2.msra.mxu0 %v3293
        %3295 = vmatprep.subr.mxu0 0.0
        %v3296 = vand.u32 %v427, 4294901760
        %v3297 = vsub.f32 %v427, %v3296
        %v3298 = vand.u32 %v3297, 4294901760
        %v3299 = vsub.f32 %v3297, %v3298
        %v3300 = vand.u32 %v3299, 4294901760
        %3301 = vmatpush2.msra.mxu0 %v3300
        %3302 = vmatprep.subr.mxu0 0.0
        %v3303 = vand.u32 %v426, 4294901760
        %v3304 = vsub.f32 %v426, %v3303
        %v3305 = vand.u32 %v3304, 4294901760
        %v3306 = vsub.f32 %v3304, %v3305
        %v3307 = vand.u32 %v3306, 4294901760
        %3308 = vmatpush2.msra.mxu0 %v3307
        %3309 = vmatprep.subr.mxu0 0.0
        %v3310 = vand.u32 %v425, 4294901760
        %v3311 = vsub.f32 %v425, %v3310
        %v3312 = vand.u32 %v3311, 4294901760
        %v3313 = vsub.f32 %v3311, %v3312
        %v3314 = vand.u32 %v3313, 4294901760
        %3315 = vmatpush2.msra.mxu0 %v3314
        %3316 = vmatprep.subr.mxu0 0.0
        %v3317 = vand.u32 %v424, 4294901760
        %v3318 = vsub.f32 %v424, %v3317
        %v3319 = vand.u32 %v3318, 4294901760
        %v3320 = vsub.f32 %v3318, %v3319
        %v3321 = vand.u32 %v3320, 4294901760
        %3322 = vmatpush2.msra.mxu0 %v3321
        %3323 = vmatprep.subr.mxu0 0.0
        %v3324 = vand.u32 %v423, 4294901760
        %v3325 = vsub.f32 %v423, %v3324
        %v3326 = vand.u32 %v3325, 4294901760
        %v3327 = vsub.f32 %v3325, %v3326
        %v3328 = vand.u32 %v3327, 4294901760
        %3329 = vmatpush2.msra.mxu0 %v3328
        %3330 = vmatprep.subr.mxu0 0.0
        %v3331 = vand.u32 %v422, 4294901760
        %v3332 = vsub.f32 %v422, %v3331
        %v3333 = vand.u32 %v3332, 4294901760
        %v3334 = vsub.f32 %v3332, %v3333
        %v3335 = vand.u32 %v3334, 4294901760
        %3336 = vmatpush2.msra.mxu0 %v3335
        %3337 = vmatprep.subr.mxu0 0.0
        %v3338 = vand.u32 %v421, 4294901760
        %v3339 = vsub.f32 %v421, %v3338
        %v3340 = vand.u32 %v3339, 4294901760
        %v3341 = vsub.f32 %v3339, %v3340
        %v3342 = vand.u32 %v3341, 4294901760
        %3343 = vmatpush2.msra.mxu0 %v3342
        %3344 = vmatprep.subr.mxu0 0.0
        %v3345 = vand.u32 %v420, 4294901760
        %v3346 = vsub.f32 %v420, %v3345
        %v3347 = vand.u32 %v3346, 4294901760
        %v3348 = vsub.f32 %v3346, %v3347
        %v3349 = vand.u32 %v3348, 4294901760
        %3350 = vmatpush2.msra.mxu0 %v3349
        %3351 = vmatprep.subr.mxu0 0.0
        %v3352 = vand.u32 %v419, 4294901760
        %v3353 = vsub.f32 %v419, %v3352
        %v3354 = vand.u32 %v3353, 4294901760
        %v3355 = vsub.f32 %v3353, %v3354
        %v3356 = vand.u32 %v3355, 4294901760
        %3357 = vmatpush2.msra.mxu0 %v3356
        %3358 = vmatprep.subr.mxu0 0.0
        %v3359 = vand.u32 %v418, 4294901760
        %v3360 = vsub.f32 %v418, %v3359
        %v3361 = vand.u32 %v3360, 4294901760
        %v3362 = vsub.f32 %v3360, %v3361
        %v3363 = vand.u32 %v3362, 4294901760
        %3364 = vmatpush2.msra.mxu0 %v3363
        %3365 = vmatprep.subr.mxu0 0.0
        %v3366 = vand.u32 %v417, 4294901760
        %v3367 = vsub.f32 %v417, %v3366
        %v3368 = vand.u32 %v3367, 4294901760
        %v3369 = vsub.f32 %v3367, %v3368
        %v3370 = vand.u32 %v3369, 4294901760
        %3371 = vmatpush2.msra.mxu0 %v3370
        %3372 = vmatprep.subr.mxu0 0.0
        %v3373 = vand.u32 %v416, 4294901760
        %v3374 = vsub.f32 %v416, %v3373
        %v3375 = vand.u32 %v3374, 4294901760
        %v3376 = vsub.f32 %v3374, %v3375
        %v3377 = vand.u32 %v3376, 4294901760
        %3378 = vmatpush2.msra.mxu0 %v3377
        %3379 = vmatprep.subr.mxu0 0.0
        %v3380 = vand.u32 %v415, 4294901760
        %v3381 = vsub.f32 %v415, %v3380
        %v3382 = vand.u32 %v3381, 4294901760
        %v3383 = vsub.f32 %v3381, %v3382
        %v3384 = vand.u32 %v3383, 4294901760
        %3385 = vmatpush2.msra.mxu0 %v3384
        %3386 = vmatprep.subr.mxu0 0.0
        %v3387 = vand.u32 %v414, 4294901760
        %v3388 = vsub.f32 %v414, %v3387
        %v3389 = vand.u32 %v3388, 4294901760
        %v3390 = vsub.f32 %v3388, %v3389
        %v3391 = vand.u32 %v3390, 4294901760
        %3392 = vmatpush2.msra.mxu0 %v3391
        %v3393 = vand.u32 %v462, 4294901760
        %3394 = vmatprep.mubr.f32.mxu0 %v3393
        %v3395 = vand.u32 %v458, 4294901760
        %3396 = vmatmul.mubr.f32.gmra.mxu0 %v3395
        %v3397 = vpop.f32.mrf.mxu0
        %v3398 = vadd.f32 %v3166, %v3397
        %v3399 = vpop.f32.mrf.mxu0
        %3400 = vdwg.mxu0
        %3401 = vmatprep.subr.mxu0 0.0
        %v3402 = vand.u32 %v413, 4294901760
        %v3403 = vsub.f32 %v413, %v3402
        %3404 = vmatpush1.msra.mxu0 %v3403
        %3405 = vmatprep.subr.mxu0 0.0
        %v3406 = vand.u32 %v412, 4294901760
        %v3407 = vsub.f32 %v412, %v3406
        %3408 = vmatpush1.msra.mxu0 %v3407
        %3409 = vmatprep.subr.mxu0 0.0
        %v3410 = vand.u32 %v411, 4294901760
        %v3411 = vsub.f32 %v411, %v3410
        %3412 = vmatpush1.msra.mxu0 %v3411
        %3413 = vmatprep.subr.mxu0 0.0
        %v3414 = vand.u32 %v410, 4294901760
        %v3415 = vsub.f32 %v410, %v3414
        %3416 = vmatpush1.msra.mxu0 %v3415
        %3417 = vmatprep.subr.mxu0 0.0
        %v3418 = vand.u32 %v409, 4294901760
        %v3419 = vsub.f32 %v409, %v3418
        %3420 = vmatpush1.msra.mxu0 %v3419
        %3421 = vmatprep.subr.mxu0 0.0
        %v3422 = vand.u32 %v408, 4294901760
        %v3423 = vsub.f32 %v408, %v3422
        %3424 = vmatpush1.msra.mxu0 %v3423
        %3425 = vmatprep.subr.mxu0 0.0
        %v3426 = vand.u32 %v407, 4294901760
        %v3427 = vsub.f32 %v407, %v3426
        %3428 = vmatpush1.msra.mxu0 %v3427
        %3429 = vmatprep.subr.mxu0 0.0
        %v3430 = vand.u32 %v406, 4294901760
        %v3431 = vsub.f32 %v406, %v3430
        %3432 = vmatpush1.msra.mxu0 %v3431
        %3433 = vmatprep.subr.mxu0 0.0
        %v3434 = vand.u32 %v405, 4294901760
        %v3435 = vsub.f32 %v405, %v3434
        %3436 = vmatpush1.msra.mxu0 %v3435
        %3437 = vmatprep.subr.mxu0 0.0
        %v3438 = vand.u32 %v404, 4294901760
        %v3439 = vsub.f32 %v404, %v3438
        %3440 = vmatpush1.msra.mxu0 %v3439
        %3441 = vmatprep.subr.mxu0 0.0
        %v3442 = vand.u32 %v403, 4294901760
        %v3443 = vsub.f32 %v403, %v3442
        %3444 = vmatpush1.msra.mxu0 %v3443
        %3445 = vmatprep.subr.mxu0 0.0
        %v3446 = vand.u32 %v402, 4294901760
        %v3447 = vsub.f32 %v402, %v3446
        %3448 = vmatpush1.msra.mxu0 %v3447
        %3449 = vmatprep.subr.mxu0 0.0
        %v3450 = vand.u32 %v401, 4294901760
        %v3451 = vsub.f32 %v401, %v3450
        %3452 = vmatpush1.msra.mxu0 %v3451
        %3453 = vmatprep.subr.mxu0 0.0
        %v3454 = vand.u32 %v400, 4294901760
        %v3455 = vsub.f32 %v400, %v3454
        %3456 = vmatpush1.msra.mxu0 %v3455
        %3457 = vmatprep.subr.mxu0 0.0
        %v3458 = vand.u32 %v399, 4294901760
        %v3459 = vsub.f32 %v399, %v3458
        %3460 = vmatpush1.msra.mxu0 %v3459
        %3461 = vmatprep.subr.mxu0 0.0
        %v3462 = vand.u32 %v398, 4294901760
        %v3463 = vsub.f32 %v398, %v3462
        %3464 = vmatpush1.msra.mxu0 %v3463
        %3465 = vmatprep.subr.mxu0 0.0
        %v3466 = vand.u32 %v429, 4294901760
        %v3467 = vsub.f32 %v429, %v3466
        %3468 = vmatpush2.msra.mxu0 %v3467
        %3469 = vmatprep.subr.mxu0 0.0
        %v3470 = vand.u32 %v428, 4294901760
        %v3471 = vsub.f32 %v428, %v3470
        %3472 = vmatpush2.msra.mxu0 %v3471
        %3473 = vmatprep.subr.mxu0 0.0
        %v3474 = vand.u32 %v427, 4294901760
        %v3475 = vsub.f32 %v427, %v3474
        %3476 = vmatpush2.msra.mxu0 %v3475
        %3477 = vmatprep.subr.mxu0 0.0
        %v3478 = vand.u32 %v426, 4294901760
        %v3479 = vsub.f32 %v426, %v3478
        %3480 = vmatpush2.msra.mxu0 %v3479
        %3481 = vmatprep.subr.mxu0 0.0
        %v3482 = vand.u32 %v425, 4294901760
        %v3483 = vsub.f32 %v425, %v3482
        %3484 = vmatpush2.msra.mxu0 %v3483
        %3485 = vmatprep.subr.mxu0 0.0
        %v3486 = vand.u32 %v424, 4294901760
        %v3487 = vsub.f32 %v424, %v3486
        %3488 = vmatpush2.msra.mxu0 %v3487
        %3489 = vmatprep.subr.mxu0 0.0
        %v3490 = vand.u32 %v423, 4294901760
        %v3491 = vsub.f32 %v423, %v3490
        %3492 = vmatpush2.msra.mxu0 %v3491
        %3493 = vmatprep.subr.mxu0 0.0
        %v3494 = vand.u32 %v422, 4294901760
        %v3495 = vsub.f32 %v422, %v3494
        %3496 = vmatpush2.msra.mxu0 %v3495
        %3497 = vmatprep.subr.mxu0 0.0
        %v3498 = vand.u32 %v421, 4294901760
        %v3499 = vsub.f32 %v421, %v3498
        %3500 = vmatpush2.msra.mxu0 %v3499
        %3501 = vmatprep.subr.mxu0 0.0
        %v3502 = vand.u32 %v420, 4294901760
        %v3503 = vsub.f32 %v420, %v3502
        %3504 = vmatpush2.msra.mxu0 %v3503
        %3505 = vmatprep.subr.mxu0 0.0
        %v3506 = vand.u32 %v419, 4294901760
        %v3507 = vsub.f32 %v419, %v3506
        %3508 = vmatpush2.msra.mxu0 %v3507
        %3509 = vmatprep.subr.mxu0 0.0
        %v3510 = vand.u32 %v418, 4294901760
        %v3511 = vsub.f32 %v418, %v3510
        %3512 = vmatpush2.msra.mxu0 %v3511
        %3513 = vmatprep.subr.mxu0 0.0
        %v3514 = vand.u32 %v417, 4294901760
        %v3515 = vsub.f32 %v417, %v3514
        %3516 = vmatpush2.msra.mxu0 %v3515
        %3517 = vmatprep.subr.mxu0 0.0
        %v3518 = vand.u32 %v416, 4294901760
        %v3519 = vsub.f32 %v416, %v3518
        %3520 = vmatpush2.msra.mxu0 %v3519
        %3521 = vmatprep.subr.mxu0 0.0
        %v3522 = vand.u32 %v415, 4294901760
        %v3523 = vsub.f32 %v415, %v3522
        %3524 = vmatpush2.msra.mxu0 %v3523
        %3525 = vmatprep.subr.mxu0 0.0
        %v3526 = vand.u32 %v414, 4294901760
        %v3527 = vsub.f32 %v414, %v3526
        %3528 = vmatpush2.msra.mxu0 %v3527
        %v3529 = vand.u32 %v462, 4294901760
        %v3530 = vsub.f32 %v462, %v3529
        %3531 = vmatprep.mubr.f32.mxu0 %v3530
        %v3532 = vand.u32 %v458, 4294901760
        %v3533 = vsub.f32 %v458, %v3532
        %3534 = vmatmul.mubr.f32.gmra.mxu0 %v3533
        %v3535 = vpop.f32.mrf.mxu0
        %v3536 = vadd.f32 %v3398, %v3535
        %v3537 = vpop.f32.mrf.mxu0
        %3538 = vdwg.mxu0
        %3539 = vmatprep.subr.mxu0 0.0
        %v3540 = vand.u32 %v413, 4294901760
        %3541 = vmatpush1.msra.mxu0 %v3540
        %3542 = vmatprep.subr.mxu0 0.0
        %v3543 = vand.u32 %v412, 4294901760
        %3544 = vmatpush1.msra.mxu0 %v3543
        %3545 = vmatprep.subr.mxu0 0.0
        %v3546 = vand.u32 %v411, 4294901760
        %3547 = vmatpush1.msra.mxu0 %v3546
        %3548 = vmatprep.subr.mxu0 0.0
        %v3549 = vand.u32 %v410, 4294901760
        %3550 = vmatpush1.msra.mxu0 %v3549
        %3551 = vmatprep.subr.mxu0 0.0
        %v3552 = vand.u32 %v409, 4294901760
        %3553 = vmatpush1.msra.mxu0 %v3552
        %3554 = vmatprep.subr.mxu0 0.0
        %v3555 = vand.u32 %v408, 4294901760
        %3556 = vmatpush1.msra.mxu0 %v3555
        %3557 = vmatprep.subr.mxu0 0.0
        %v3558 = vand.u32 %v407, 4294901760
        %3559 = vmatpush1.msra.mxu0 %v3558
        %3560 = vmatprep.subr.mxu0 0.0
        %v3561 = vand.u32 %v406, 4294901760
        %3562 = vmatpush1.msra.mxu0 %v3561
        %3563 = vmatprep.subr.mxu0 0.0
        %v3564 = vand.u32 %v405, 4294901760
        %3565 = vmatpush1.msra.mxu0 %v3564
        %3566 = vmatprep.subr.mxu0 0.0
        %v3567 = vand.u32 %v404, 4294901760
        %3568 = vmatpush1.msra.mxu0 %v3567
        %3569 = vmatprep.subr.mxu0 0.0
        %v3570 = vand.u32 %v403, 4294901760
        %3571 = vmatpush1.msra.mxu0 %v3570
        %3572 = vmatprep.subr.mxu0 0.0
        %v3573 = vand.u32 %v402, 4294901760
        %3574 = vmatpush1.msra.mxu0 %v3573
        %3575 = vmatprep.subr.mxu0 0.0
        %v3576 = vand.u32 %v401, 4294901760
        %3577 = vmatpush1.msra.mxu0 %v3576
        %3578 = vmatprep.subr.mxu0 0.0
        %v3579 = vand.u32 %v400, 4294901760
        %3580 = vmatpush1.msra.mxu0 %v3579
        %3581 = vmatprep.subr.mxu0 0.0
        %v3582 = vand.u32 %v399, 4294901760
        %3583 = vmatpush1.msra.mxu0 %v3582
        %3584 = vmatprep.subr.mxu0 0.0
        %v3585 = vand.u32 %v398, 4294901760
        %3586 = vmatpush1.msra.mxu0 %v3585
        %3587 = vmatprep.subr.mxu0 0.0
        %v3588 = vand.u32 %v429, 4294901760
        %3589 = vmatpush2.msra.mxu0 %v3588
        %3590 = vmatprep.subr.mxu0 0.0
        %v3591 = vand.u32 %v428, 4294901760
        %3592 = vmatpush2.msra.mxu0 %v3591
        %3593 = vmatprep.subr.mxu0 0.0
        %v3594 = vand.u32 %v427, 4294901760
        %3595 = vmatpush2.msra.mxu0 %v3594
        %3596 = vmatprep.subr.mxu0 0.0
        %v3597 = vand.u32 %v426, 4294901760
        %3598 = vmatpush2.msra.mxu0 %v3597
        %3599 = vmatprep.subr.mxu0 0.0
        %v3600 = vand.u32 %v425, 4294901760
        %3601 = vmatpush2.msra.mxu0 %v3600
        %3602 = vmatprep.subr.mxu0 0.0
        %v3603 = vand.u32 %v424, 4294901760
        %3604 = vmatpush2.msra.mxu0 %v3603
        %3605 = vmatprep.subr.mxu0 0.0
        %v3606 = vand.u32 %v423, 4294901760
        %3607 = vmatpush2.msra.mxu0 %v3606
        %3608 = vmatprep.subr.mxu0 0.0
        %v3609 = vand.u32 %v422, 4294901760
        %3610 = vmatpush2.msra.mxu0 %v3609
        %3611 = vmatprep.subr.mxu0 0.0
        %v3612 = vand.u32 %v421, 4294901760
        %3613 = vmatpush2.msra.mxu0 %v3612
        %3614 = vmatprep.subr.mxu0 0.0
        %v3615 = vand.u32 %v420, 4294901760
        %3616 = vmatpush2.msra.mxu0 %v3615
        %3617 = vmatprep.subr.mxu0 0.0
        %v3618 = vand.u32 %v419, 4294901760
        %3619 = vmatpush2.msra.mxu0 %v3618
        %3620 = vmatprep.subr.mxu0 0.0
        %v3621 = vand.u32 %v418, 4294901760
        %3622 = vmatpush2.msra.mxu0 %v3621
        %3623 = vmatprep.subr.mxu0 0.0
        %v3624 = vand.u32 %v417, 4294901760
        %3625 = vmatpush2.msra.mxu0 %v3624
        %3626 = vmatprep.subr.mxu0 0.0
        %v3627 = vand.u32 %v416, 4294901760
        %3628 = vmatpush2.msra.mxu0 %v3627
        %3629 = vmatprep.subr.mxu0 0.0
        %v3630 = vand.u32 %v415, 4294901760
        %3631 = vmatpush2.msra.mxu0 %v3630
        %3632 = vmatprep.subr.mxu0 0.0
        %v3633 = vand.u32 %v414, 4294901760
        %3634 = vmatpush2.msra.mxu0 %v3633
        %v3635 = vand.u32 %v462, 4294901760
        %v3636 = vsub.f32 %v462, %v3635
        %v3637 = vand.u32 %v3636, 4294901760
        %3638 = vmatprep.mubr.f32.mxu0 %v3637
        %v3639 = vand.u32 %v458, 4294901760
        %v3640 = vsub.f32 %v458, %v3639
        %v3641 = vand.u32 %v3640, 4294901760
        %3642 = vmatmul.mubr.f32.gmra.mxu0 %v3641
        %v3643 = vpop.f32.mrf.mxu0
        %v3644 = vadd.f32 %v3536, %v3643
        %v3645 = vpop.f32.mrf.mxu0
        %3646 = vdwg.mxu0
        %3647 = vmatprep.subr.mxu0 0.0
        %v3648 = vand.u32 %v413, 4294901760
        %v3649 = vsub.f32 %v413, %v3648
        %v3650 = vand.u32 %v3649, 4294901760
        %3651 = vmatpush1.msra.mxu0 %v3650
        %3652 = vmatprep.subr.mxu0 0.0
        %v3653 = vand.u32 %v412, 4294901760
        %v3654 = vsub.f32 %v412, %v3653
        %v3655 = vand.u32 %v3654, 4294901760
        %3656 = vmatpush1.msra.mxu0 %v3655
        %3657 = vmatprep.subr.mxu0 0.0
        %v3658 = vand.u32 %v411, 4294901760
        %v3659 = vsub.f32 %v411, %v3658
        %v3660 = vand.u32 %v3659, 4294901760
        %3661 = vmatpush1.msra.mxu0 %v3660
        %3662 = vmatprep.subr.mxu0 0.0
        %v3663 = vand.u32 %v410, 4294901760
        %v3664 = vsub.f32 %v410, %v3663
        %v3665 = vand.u32 %v3664, 4294901760
        %3666 = vmatpush1.msra.mxu0 %v3665
        %3667 = vmatprep.subr.mxu0 0.0
        %v3668 = vand.u32 %v409, 4294901760
        %v3669 = vsub.f32 %v409, %v3668
        %v3670 = vand.u32 %v3669, 4294901760
        %3671 = vmatpush1.msra.mxu0 %v3670
        %3672 = vmatprep.subr.mxu0 0.0
        %v3673 = vand.u32 %v408, 4294901760
        %v3674 = vsub.f32 %v408, %v3673
        %v3675 = vand.u32 %v3674, 4294901760
        %3676 = vmatpush1.msra.mxu0 %v3675
        %3677 = vmatprep.subr.mxu0 0.0
        %v3678 = vand.u32 %v407, 4294901760
        %v3679 = vsub.f32 %v407, %v3678
        %v3680 = vand.u32 %v3679, 4294901760
        %3681 = vmatpush1.msra.mxu0 %v3680
        %3682 = vmatprep.subr.mxu0 0.0
        %v3683 = vand.u32 %v406, 4294901760
        %v3684 = vsub.f32 %v406, %v3683
        %v3685 = vand.u32 %v3684, 4294901760
        %3686 = vmatpush1.msra.mxu0 %v3685
        %3687 = vmatprep.subr.mxu0 0.0
        %v3688 = vand.u32 %v405, 4294901760
        %v3689 = vsub.f32 %v405, %v3688
        %v3690 = vand.u32 %v3689, 4294901760
        %3691 = vmatpush1.msra.mxu0 %v3690
        %3692 = vmatprep.subr.mxu0 0.0
        %v3693 = vand.u32 %v404, 4294901760
        %v3694 = vsub.f32 %v404, %v3693
        %v3695 = vand.u32 %v3694, 4294901760
        %3696 = vmatpush1.msra.mxu0 %v3695
        %3697 = vmatprep.subr.mxu0 0.0
        %v3698 = vand.u32 %v403, 4294901760
        %v3699 = vsub.f32 %v403, %v3698
        %v3700 = vand.u32 %v3699, 4294901760
        %3701 = vmatpush1.msra.mxu0 %v3700
        %3702 = vmatprep.subr.mxu0 0.0
        %v3703 = vand.u32 %v402, 4294901760
        %v3704 = vsub.f32 %v402, %v3703
        %v3705 = vand.u32 %v3704, 4294901760
        %3706 = vmatpush1.msra.mxu0 %v3705
        %3707 = vmatprep.subr.mxu0 0.0
        %v3708 = vand.u32 %v401, 4294901760
        %v3709 = vsub.f32 %v401, %v3708
        %v3710 = vand.u32 %v3709, 4294901760
        %3711 = vmatpush1.msra.mxu0 %v3710
        %3712 = vmatprep.subr.mxu0 0.0
        %v3713 = vand.u32 %v400, 4294901760
        %v3714 = vsub.f32 %v400, %v3713
        %v3715 = vand.u32 %v3714, 4294901760
        %3716 = vmatpush1.msra.mxu0 %v3715
        %3717 = vmatprep.subr.mxu0 0.0
        %v3718 = vand.u32 %v399, 4294901760
        %v3719 = vsub.f32 %v399, %v3718
        %v3720 = vand.u32 %v3719, 4294901760
        %3721 = vmatpush1.msra.mxu0 %v3720
        %3722 = vmatprep.subr.mxu0 0.0
        %v3723 = vand.u32 %v398, 4294901760
        %v3724 = vsub.f32 %v398, %v3723
        %v3725 = vand.u32 %v3724, 4294901760
        %3726 = vmatpush1.msra.mxu0 %v3725
        %3727 = vmatprep.subr.mxu0 0.0
        %v3728 = vand.u32 %v429, 4294901760
        %v3729 = vsub.f32 %v429, %v3728
        %v3730 = vand.u32 %v3729, 4294901760
        %3731 = vmatpush2.msra.mxu0 %v3730
        %3732 = vmatprep.subr.mxu0 0.0
        %v3733 = vand.u32 %v428, 4294901760
        %v3734 = vsub.f32 %v428, %v3733
        %v3735 = vand.u32 %v3734, 4294901760
        %3736 = vmatpush2.msra.mxu0 %v3735
        %3737 = vmatprep.subr.mxu0 0.0
        %v3738 = vand.u32 %v427, 4294901760
        %v3739 = vsub.f32 %v427, %v3738
        %v3740 = vand.u32 %v3739, 4294901760
        %3741 = vmatpush2.msra.mxu0 %v3740
        %3742 = vmatprep.subr.mxu0 0.0
        %v3743 = vand.u32 %v426, 4294901760
        %v3744 = vsub.f32 %v426, %v3743
        %v3745 = vand.u32 %v3744, 4294901760
        %3746 = vmatpush2.msra.mxu0 %v3745
        %3747 = vmatprep.subr.mxu0 0.0
        %v3748 = vand.u32 %v425, 4294901760
        %v3749 = vsub.f32 %v425, %v3748
        %v3750 = vand.u32 %v3749, 4294901760
        %3751 = vmatpush2.msra.mxu0 %v3750
        %3752 = vmatprep.subr.mxu0 0.0
        %v3753 = vand.u32 %v424, 4294901760
        %v3754 = vsub.f32 %v424, %v3753
        %v3755 = vand.u32 %v3754, 4294901760
        %3756 = vmatpush2.msra.mxu0 %v3755
        %3757 = vmatprep.subr.mxu0 0.0
        %v3758 = vand.u32 %v423, 4294901760
        %v3759 = vsub.f32 %v423, %v3758
        %v3760 = vand.u32 %v3759, 4294901760
        %3761 = vmatpush2.msra.mxu0 %v3760
        %3762 = vmatprep.subr.mxu0 0.0
        %v3763 = vand.u32 %v422, 4294901760
        %v3764 = vsub.f32 %v422, %v3763
        %v3765 = vand.u32 %v3764, 4294901760
        %3766 = vmatpush2.msra.mxu0 %v3765
        %3767 = vmatprep.subr.mxu0 0.0
        %v3768 = vand.u32 %v421, 4294901760
        %v3769 = vsub.f32 %v421, %v3768
        %v3770 = vand.u32 %v3769, 4294901760
        %3771 = vmatpush2.msra.mxu0 %v3770
        %3772 = vmatprep.subr.mxu0 0.0
        %v3773 = vand.u32 %v420, 4294901760
        %v3774 = vsub.f32 %v420, %v3773
        %v3775 = vand.u32 %v3774, 4294901760
        %3776 = vmatpush2.msra.mxu0 %v3775
        %3777 = vmatprep.subr.mxu0 0.0
        %v3778 = vand.u32 %v419, 4294901760
        %v3779 = vsub.f32 %v419, %v3778
        %v3780 = vand.u32 %v3779, 4294901760
        %3781 = vmatpush2.msra.mxu0 %v3780
        %3782 = vmatprep.subr.mxu0 0.0
        %v3783 = vand.u32 %v418, 4294901760
        %v3784 = vsub.f32 %v418, %v3783
        %v3785 = vand.u32 %v3784, 4294901760
        %3786 = vmatpush2.msra.mxu0 %v3785
        %3787 = vmatprep.subr.mxu0 0.0
        %v3788 = vand.u32 %v417, 4294901760
        %v3789 = vsub.f32 %v417, %v3788
        %v3790 = vand.u32 %v3789, 4294901760
        %3791 = vmatpush2.msra.mxu0 %v3790
        %3792 = vmatprep.subr.mxu0 0.0
        %v3793 = vand.u32 %v416, 4294901760
        %v3794 = vsub.f32 %v416, %v3793
        %v3795 = vand.u32 %v3794, 4294901760
        %3796 = vmatpush2.msra.mxu0 %v3795
        %3797 = vmatprep.subr.mxu0 0.0
        %v3798 = vand.u32 %v415, 4294901760
        %v3799 = vsub.f32 %v415, %v3798
        %v3800 = vand.u32 %v3799, 4294901760
        %3801 = vmatpush2.msra.mxu0 %v3800
        %3802 = vmatprep.subr.mxu0 0.0
        %v3803 = vand.u32 %v414, 4294901760
        %v3804 = vsub.f32 %v414, %v3803
        %v3805 = vand.u32 %v3804, 4294901760
        %3806 = vmatpush2.msra.mxu0 %v3805
        %v3807 = vand.u32 %v462, 4294901760
        %3808 = vmatprep.mubr.f32.mxu0 %v3807
        %v3809 = vand.u32 %v458, 4294901760
        %3810 = vmatmul.mubr.f32.gmra.mxu0 %v3809
        %v3811 = vpop.f32.mrf.mxu0
        %v3812 = vadd.f32 %v3644, %v3811
        %v3813 = vpop.f32.mrf.mxu0
        %3814 = vdwg.mxu0
        %3815 = vmatprep.subr.mxu0 0.0
        %v3816 = vand.u32 %v413, 4294901760
        %3817 = vmatpush1.msra.mxu0 %v3816
        %3818 = vmatprep.subr.mxu0 0.0
        %v3819 = vand.u32 %v412, 4294901760
        %3820 = vmatpush1.msra.mxu0 %v3819
        %3821 = vmatprep.subr.mxu0 0.0
        %v3822 = vand.u32 %v411, 4294901760
        %3823 = vmatpush1.msra.mxu0 %v3822
        %3824 = vmatprep.subr.mxu0 0.0
        %v3825 = vand.u32 %v410, 4294901760
        %3826 = vmatpush1.msra.mxu0 %v3825
        %3827 = vmatprep.subr.mxu0 0.0
        %v3828 = vand.u32 %v409, 4294901760
        %3829 = vmatpush1.msra.mxu0 %v3828
        %3830 = vmatprep.subr.mxu0 0.0
        %v3831 = vand.u32 %v408, 4294901760
        %3832 = vmatpush1.msra.mxu0 %v3831
        %3833 = vmatprep.subr.mxu0 0.0
        %v3834 = vand.u32 %v407, 4294901760
        %3835 = vmatpush1.msra.mxu0 %v3834
        %3836 = vmatprep.subr.mxu0 0.0
        %v3837 = vand.u32 %v406, 4294901760
        %3838 = vmatpush1.msra.mxu0 %v3837
        %3839 = vmatprep.subr.mxu0 0.0
        %v3840 = vand.u32 %v405, 4294901760
        %3841 = vmatpush1.msra.mxu0 %v3840
        %3842 = vmatprep.subr.mxu0 0.0
        %v3843 = vand.u32 %v404, 4294901760
        %3844 = vmatpush1.msra.mxu0 %v3843
        %3845 = vmatprep.subr.mxu0 0.0
        %v3846 = vand.u32 %v403, 4294901760
        %3847 = vmatpush1.msra.mxu0 %v3846
        %3848 = vmatprep.subr.mxu0 0.0
        %v3849 = vand.u32 %v402, 4294901760
        %3850 = vmatpush1.msra.mxu0 %v3849
        %3851 = vmatprep.subr.mxu0 0.0
        %v3852 = vand.u32 %v401, 4294901760
        %3853 = vmatpush1.msra.mxu0 %v3852
        %3854 = vmatprep.subr.mxu0 0.0
        %v3855 = vand.u32 %v400, 4294901760
        %3856 = vmatpush1.msra.mxu0 %v3855
        %3857 = vmatprep.subr.mxu0 0.0
        %v3858 = vand.u32 %v399, 4294901760
        %3859 = vmatpush1.msra.mxu0 %v3858
        %3860 = vmatprep.subr.mxu0 0.0
        %v3861 = vand.u32 %v398, 4294901760
        %3862 = vmatpush1.msra.mxu0 %v3861
        %3863 = vmatprep.subr.mxu0 0.0
        %v3864 = vand.u32 %v429, 4294901760
        %3865 = vmatpush2.msra.mxu0 %v3864
        %3866 = vmatprep.subr.mxu0 0.0
        %v3867 = vand.u32 %v428, 4294901760
        %3868 = vmatpush2.msra.mxu0 %v3867
        %3869 = vmatprep.subr.mxu0 0.0
        %v3870 = vand.u32 %v427, 4294901760
        %3871 = vmatpush2.msra.mxu0 %v3870
        %3872 = vmatprep.subr.mxu0 0.0
        %v3873 = vand.u32 %v426, 4294901760
        %3874 = vmatpush2.msra.mxu0 %v3873
        %3875 = vmatprep.subr.mxu0 0.0
        %v3876 = vand.u32 %v425, 4294901760
        %3877 = vmatpush2.msra.mxu0 %v3876
        %3878 = vmatprep.subr.mxu0 0.0
        %v3879 = vand.u32 %v424, 4294901760
        %3880 = vmatpush2.msra.mxu0 %v3879
        %3881 = vmatprep.subr.mxu0 0.0
        %v3882 = vand.u32 %v423, 4294901760
        %3883 = vmatpush2.msra.mxu0 %v3882
        %3884 = vmatprep.subr.mxu0 0.0
        %v3885 = vand.u32 %v422, 4294901760
        %3886 = vmatpush2.msra.mxu0 %v3885
        %3887 = vmatprep.subr.mxu0 0.0
        %v3888 = vand.u32 %v421, 4294901760
        %3889 = vmatpush2.msra.mxu0 %v3888
        %3890 = vmatprep.subr.mxu0 0.0
        %v3891 = vand.u32 %v420, 4294901760
        %3892 = vmatpush2.msra.mxu0 %v3891
        %3893 = vmatprep.subr.mxu0 0.0
        %v3894 = vand.u32 %v419, 4294901760
        %3895 = vmatpush2.msra.mxu0 %v3894
        %3896 = vmatprep.subr.mxu0 0.0
        %v3897 = vand.u32 %v418, 4294901760
        %3898 = vmatpush2.msra.mxu0 %v3897
        %3899 = vmatprep.subr.mxu0 0.0
        %v3900 = vand.u32 %v417, 4294901760
        %3901 = vmatpush2.msra.mxu0 %v3900
        %3902 = vmatprep.subr.mxu0 0.0
        %v3903 = vand.u32 %v416, 4294901760
        %3904 = vmatpush2.msra.mxu0 %v3903
        %3905 = vmatprep.subr.mxu0 0.0
        %v3906 = vand.u32 %v415, 4294901760
        %3907 = vmatpush2.msra.mxu0 %v3906
        %3908 = vmatprep.subr.mxu0 0.0
        %v3909 = vand.u32 %v414, 4294901760
        %3910 = vmatpush2.msra.mxu0 %v3909
        %v3911 = vand.u32 %v462, 4294901760
        %3912 = vmatprep.mubr.f32.mxu0 %v3911
        %v3913 = vand.u32 %v458, 4294901760
        %3914 = vmatmul.mubr.f32.gmra.mxu0 %v3913
        %v3915 = vpop.f32.mrf.mxu0
        %v3916 = vadd.f32 %v3812, %v3915
        %v3917 = vpop.f32.mrf.mxu0
        %3918 = vdwg.mxu0
        %v3919 = vld [vmem:[%s2] sm:$0xff]
        %v3920 = vld [vmem:[%s2 + $0x8] sm:$0xff]
        %v3921 = vld [vmem:[%s2 + $0x10] sm:$0xff]
        %v3922 = vld [vmem:[%s2 + $0x18] sm:$0xff]
        %v3923 = vld [vmem:[%s2 + $0x20] sm:$0xf]
        %v3924 = vld [vmem:[%s3] sm:$0x1]
        %vm3925 = vcmask 293888
        %v3927 = vsel %vm3925, %v3916, 0
        %vm3929 = vcmask 1043456
        %v3931 = vsel %vm3929, %v3923, 0
        %3933 = vmatprep.subr.mxu0 0.0
        %3934 = vmatpush1.msra.mxu0 0.0
        %3935 = vmatprep.subr.mxu0 0.0
        %3936 = vmatpush1.msra.mxu0 0.0
        %3937 = vmatprep.subr.mxu0 0.0
        %3938 = vmatpush1.msra.mxu0 0.0
        %3939 = vmatprep.subr.mxu0 0.0
        %3940 = vmatpush1.msra.mxu0 0.0
        %3941 = vmatprep.subr.mxu0 0.0
        %3942 = vmatpush1.msra.mxu0 0.0
        %3943 = vmatprep.subr.mxu0 0.0
        %3944 = vmatpush1.msra.mxu0 0.0
        %3945 = vmatprep.subr.mxu0 0.0
        %3946 = vmatpush1.msra.mxu0 0.0
        %3947 = vmatprep.subr.mxu0 0.0
        %3948 = vmatpush1.msra.mxu0 0.0
        %3949 = vmatprep.subr.mxu0 0.0
        %3950 = vmatpush1.msra.mxu0 0.0
        %3951 = vmatprep.subr.mxu0 0.0
        %3952 = vmatpush1.msra.mxu0 0.0
        %3953 = vmatprep.subr.mxu0 0.0
        %3954 = vmatpush1.msra.mxu0 0.0
        %3955 = vmatprep.subr.mxu0 0.0
        %v3956 = vand.u32 %v3931, 4294901760
        %3957 = vmatpush1.msra.mxu0 %v3956
        %3958 = vmatprep.subr.mxu0 0.0
        %v3959 = vand.u32 %v3922, 4294901760
        %3960 = vmatpush1.msra.mxu0 %v3959
        %3961 = vmatprep.subr.mxu0 0.0
        %v3962 = vand.u32 %v3921, 4294901760
        %3963 = vmatpush1.msra.mxu0 %v3962
        %3964 = vmatprep.subr.mxu0 0.0
        %v3965 = vand.u32 %v3920, 4294901760
        %3966 = vmatpush1.msra.mxu0 %v3965
        %3967 = vmatprep.subr.mxu0 0.0
        %v3968 = vand.u32 %v3919, 4294901760
        %3969 = vmatpush1.msra.mxu0 %v3968
        %3970 = vmatprep.subr.mxu0 0.0
        %3971 = vmatpush2.msra.mxu0 0.0
        %3972 = vmatprep.subr.mxu0 0.0
        %3973 = vmatpush2.msra.mxu0 0.0
        %3974 = vmatprep.subr.mxu0 0.0
        %3975 = vmatpush2.msra.mxu0 0.0
        %3976 = vmatprep.subr.mxu0 0.0
        %3977 = vmatpush2.msra.mxu0 0.0
        %3978 = vmatprep.subr.mxu0 0.0
        %3979 = vmatpush2.msra.mxu0 0.0
        %3980 = vmatprep.subr.mxu0 0.0
        %3981 = vmatpush2.msra.mxu0 0.0
        %3982 = vmatprep.subr.mxu0 0.0
        %3983 = vmatpush2.msra.mxu0 0.0
        %3984 = vmatprep.subr.mxu0 0.0
        %3985 = vmatpush2.msra.mxu0 0.0
        %3986 = vmatprep.subr.mxu0 0.0
        %3987 = vmatpush2.msra.mxu0 0.0
        %3988 = vmatprep.subr.mxu0 0.0
        %3989 = vmatpush2.msra.mxu0 0.0
        %3990 = vmatprep.subr.mxu0 0.0
        %3991 = vmatpush2.msra.mxu0 0.0
        %3992 = vmatprep.subr.mxu0 0.0
        %3993 = vmatpush2.msra.mxu0 0.0
        %3994 = vmatprep.subr.mxu0 0.0
        %3995 = vmatpush2.msra.mxu0 0.0
        %3996 = vmatprep.subr.mxu0 0.0
        %3997 = vmatpush2.msra.mxu0 0.0
        %3998 = vmatprep.subr.mxu0 0.0
        %3999 = vmatpush2.msra.mxu0 0.0
        %4000 = vmatprep.subr.mxu0 0.0
        %4001 = vmatpush2.msra.mxu0 0.0
        %4002 = vmatprep.mubr.f32.mxu0 0.0
        %v4003 = vand.u32 %v3927, 4294901760
        %v4004 = vsub.f32 %v3927, %v4003
        %v4005 = vand.u32 %v4004, 4294901760
        %v4006 = vsub.f32 %v4004, %v4005
        %v4007 = vand.u32 %v4006, 4294901760
        %4008 = vmatmul.mubr.f32.gmra.mxu0 %v4007
        %v4009 = vpop.f32.mrf.mxu0
        %v4010 = vadd.f32 %v3924, %v4009
        %v4011 = vpop.f32.mrf.mxu0
        %4012 = vdwg.mxu0
        %4013 = vmatprep.subr.mxu0 0.0
        %4014 = vmatpush1.msra.mxu0 0.0
        %4015 = vmatprep.subr.mxu0 0.0
        %4016 = vmatpush1.msra.mxu0 0.0
        %4017 = vmatprep.subr.mxu0 0.0
        %4018 = vmatpush1.msra.mxu0 0.0
        %4019 = vmatprep.subr.mxu0 0.0
        %4020 = vmatpush1.msra.mxu0 0.0
        %4021 = vmatprep.subr.mxu0 0.0
        %4022 = vmatpush1.msra.mxu0 0.0
        %4023 = vmatprep.subr.mxu0 0.0
        %4024 = vmatpush1.msra.mxu0 0.0
        %4025 = vmatprep.subr.mxu0 0.0
        %4026 = vmatpush1.msra.mxu0 0.0
        %4027 = vmatprep.subr.mxu0 0.0
        %4028 = vmatpush1.msra.mxu0 0.0
        %4029 = vmatprep.subr.mxu0 0.0
        %4030 = vmatpush1.msra.mxu0 0.0
        %4031 = vmatprep.subr.mxu0 0.0
        %4032 = vmatpush1.msra.mxu0 0.0
        %4033 = vmatprep.subr.mxu0 0.0
        %4034 = vmatpush1.msra.mxu0 0.0
        %4035 = vmatprep.subr.mxu0 0.0
        %v4036 = vand.u32 %v3931, 4294901760
        %v4037 = vsub.f32 %v3931, %v4036
        %v4038 = vand.u32 %v4037, 4294901760
        %v4039 = vsub.f32 %v4037, %v4038
        %v4040 = vand.u32 %v4039, 4294901760
        %4041 = vmatpush1.msra.mxu0 %v4040
        %4042 = vmatprep.subr.mxu0 0.0
        %v4043 = vand.u32 %v3922, 4294901760
        %v4044 = vsub.f32 %v3922, %v4043
        %v4045 = vand.u32 %v4044, 4294901760
        %v4046 = vsub.f32 %v4044, %v4045
        %v4047 = vand.u32 %v4046, 4294901760
        %4048 = vmatpush1.msra.mxu0 %v4047
        %4049 = vmatprep.subr.mxu0 0.0
        %v4050 = vand.u32 %v3921, 4294901760
        %v4051 = vsub.f32 %v3921, %v4050
        %v4052 = vand.u32 %v4051, 4294901760
        %v4053 = vsub.f32 %v4051, %v4052
        %v4054 = vand.u32 %v4053, 4294901760
        %4055 = vmatpush1.msra.mxu0 %v4054
        %4056 = vmatprep.subr.mxu0 0.0
        %v4057 = vand.u32 %v3920, 4294901760
        %v4058 = vsub.f32 %v3920, %v4057
        %v4059 = vand.u32 %v4058, 4294901760
        %v4060 = vsub.f32 %v4058, %v4059
        %v4061 = vand.u32 %v4060, 4294901760
        %4062 = vmatpush1.msra.mxu0 %v4061
        %4063 = vmatprep.subr.mxu0 0.0
        %v4064 = vand.u32 %v3919, 4294901760
        %v4065 = vsub.f32 %v3919, %v4064
        %v4066 = vand.u32 %v4065, 4294901760
        %v4067 = vsub.f32 %v4065, %v4066
        %v4068 = vand.u32 %v4067, 4294901760
        %4069 = vmatpush1.msra.mxu0 %v4068
        %4070 = vmatprep.subr.mxu0 0.0
        %4071 = vmatpush2.msra.mxu0 0.0
        %4072 = vmatprep.subr.mxu0 0.0
        %4073 = vmatpush2.msra.mxu0 0.0
        %4074 = vmatprep.subr.mxu0 0.0
        %4075 = vmatpush2.msra.mxu0 0.0
        %4076 = vmatprep.subr.mxu0 0.0
        %4077 = vmatpush2.msra.mxu0 0.0
        %4078 = vmatprep.subr.mxu0 0.0
        %4079 = vmatpush2.msra.mxu0 0.0
        %4080 = vmatprep.subr.mxu0 0.0
        %4081 = vmatpush2.msra.mxu0 0.0
        %4082 = vmatprep.subr.mxu0 0.0
        %4083 = vmatpush2.msra.mxu0 0.0
        %4084 = vmatprep.subr.mxu0 0.0
        %4085 = vmatpush2.msra.mxu0 0.0
        %4086 = vmatprep.subr.mxu0 0.0
        %4087 = vmatpush2.msra.mxu0 0.0
        %4088 = vmatprep.subr.mxu0 0.0
        %4089 = vmatpush2.msra.mxu0 0.0
        %4090 = vmatprep.subr.mxu0 0.0
        %4091 = vmatpush2.msra.mxu0 0.0
        %4092 = vmatprep.subr.mxu0 0.0
        %4093 = vmatpush2.msra.mxu0 0.0
        %4094 = vmatprep.subr.mxu0 0.0
        %4095 = vmatpush2.msra.mxu0 0.0
        %4096 = vmatprep.subr.mxu0 0.0
        %4097 = vmatpush2.msra.mxu0 0.0
        %4098 = vmatprep.subr.mxu0 0.0
        %4099 = vmatpush2.msra.mxu0 0.0
        %4100 = vmatprep.subr.mxu0 0.0
        %4101 = vmatpush2.msra.mxu0 0.0
        %4102 = vmatprep.mubr.f32.mxu0 0.0
        %v4103 = vand.u32 %v3927, 4294901760
        %4104 = vmatmul.mubr.f32.gmra.mxu0 %v4103
        %v4105 = vpop.f32.mrf.mxu0
        %v4106 = vadd.f32 %v4010, %v4105
        %v4107 = vpop.f32.mrf.mxu0
        %4108 = vdwg.mxu0
        %4109 = vmatprep.subr.mxu0 0.0
        %4110 = vmatpush1.msra.mxu0 0.0
        %4111 = vmatprep.subr.mxu0 0.0
        %4112 = vmatpush1.msra.mxu0 0.0
        %4113 = vmatprep.subr.mxu0 0.0
        %4114 = vmatpush1.msra.mxu0 0.0
        %4115 = vmatprep.subr.mxu0 0.0
        %4116 = vmatpush1.msra.mxu0 0.0
        %4117 = vmatprep.subr.mxu0 0.0
        %4118 = vmatpush1.msra.mxu0 0.0
        %4119 = vmatprep.subr.mxu0 0.0
        %4120 = vmatpush1.msra.mxu0 0.0
        %4121 = vmatprep.subr.mxu0 0.0
        %4122 = vmatpush1.msra.mxu0 0.0
        %4123 = vmatprep.subr.mxu0 0.0
        %4124 = vmatpush1.msra.mxu0 0.0
        %4125 = vmatprep.subr.mxu0 0.0
        %4126 = vmatpush1.msra.mxu0 0.0
        %4127 = vmatprep.subr.mxu0 0.0
        %4128 = vmatpush1.msra.mxu0 0.0
        %4129 = vmatprep.subr.mxu0 0.0
        %4130 = vmatpush1.msra.mxu0 0.0
        %4131 = vmatprep.subr.mxu0 0.0
        %v4132 = vand.u32 %v3931, 4294901760
        %v4133 = vsub.f32 %v3931, %v4132
        %4134 = vmatpush1.msra.mxu0 %v4133
        %4135 = vmatprep.subr.mxu0 0.0
        %v4136 = vand.u32 %v3922, 4294901760
        %v4137 = vsub.f32 %v3922, %v4136
        %4138 = vmatpush1.msra.mxu0 %v4137
        %4139 = vmatprep.subr.mxu0 0.0
        %v4140 = vand.u32 %v3921, 4294901760
        %v4141 = vsub.f32 %v3921, %v4140
        %4142 = vmatpush1.msra.mxu0 %v4141
        %4143 = vmatprep.subr.mxu0 0.0
        %v4144 = vand.u32 %v3920, 4294901760
        %v4145 = vsub.f32 %v3920, %v4144
        %4146 = vmatpush1.msra.mxu0 %v4145
        %4147 = vmatprep.subr.mxu0 0.0
        %v4148 = vand.u32 %v3919, 4294901760
        %v4149 = vsub.f32 %v3919, %v4148
        %4150 = vmatpush1.msra.mxu0 %v4149
        %4151 = vmatprep.subr.mxu0 0.0
        %4152 = vmatpush2.msra.mxu0 0.0
        %4153 = vmatprep.subr.mxu0 0.0
        %4154 = vmatpush2.msra.mxu0 0.0
        %4155 = vmatprep.subr.mxu0 0.0
        %4156 = vmatpush2.msra.mxu0 0.0
        %4157 = vmatprep.subr.mxu0 0.0
        %4158 = vmatpush2.msra.mxu0 0.0
        %4159 = vmatprep.subr.mxu0 0.0
        %4160 = vmatpush2.msra.mxu0 0.0
        %4161 = vmatprep.subr.mxu0 0.0
        %4162 = vmatpush2.msra.mxu0 0.0
        %4163 = vmatprep.subr.mxu0 0.0
        %4164 = vmatpush2.msra.mxu0 0.0
        %4165 = vmatprep.subr.mxu0 0.0
        %4166 = vmatpush2.msra.mxu0 0.0
        %4167 = vmatprep.subr.mxu0 0.0
        %4168 = vmatpush2.msra.mxu0 0.0
        %4169 = vmatprep.subr.mxu0 0.0
        %4170 = vmatpush2.msra.mxu0 0.0
        %4171 = vmatprep.subr.mxu0 0.0
        %4172 = vmatpush2.msra.mxu0 0.0
        %4173 = vmatprep.subr.mxu0 0.0
        %4174 = vmatpush2.msra.mxu0 0.0
        %4175 = vmatprep.subr.mxu0 0.0
        %4176 = vmatpush2.msra.mxu0 0.0
        %4177 = vmatprep.subr.mxu0 0.0
        %4178 = vmatpush2.msra.mxu0 0.0
        %4179 = vmatprep.subr.mxu0 0.0
        %4180 = vmatpush2.msra.mxu0 0.0
        %4181 = vmatprep.subr.mxu0 0.0
        %4182 = vmatpush2.msra.mxu0 0.0
        %4183 = vmatprep.mubr.f32.mxu0 0.0
        %v4184 = vand.u32 %v3927, 4294901760
        %v4185 = vsub.f32 %v3927, %v4184
        %4186 = vmatmul.mubr.f32.gmra.mxu0 %v4185
        %v4187 = vpop.f32.mrf.mxu0
        %v4188 = vadd.f32 %v4106, %v4187
        %v4189 = vpop.f32.mrf.mxu0
        %4190 = vdwg.mxu0
        %4191 = vmatprep.subr.mxu0 0.0
        %4192 = vmatpush1.msra.mxu0 0.0
        %4193 = vmatprep.subr.mxu0 0.0
        %4194 = vmatpush1.msra.mxu0 0.0
        %4195 = vmatprep.subr.mxu0 0.0
        %4196 = vmatpush1.msra.mxu0 0.0
        %4197 = vmatprep.subr.mxu0 0.0
        %4198 = vmatpush1.msra.mxu0 0.0
        %4199 = vmatprep.subr.mxu0 0.0
        %4200 = vmatpush1.msra.mxu0 0.0
        %4201 = vmatprep.subr.mxu0 0.0
        %4202 = vmatpush1.msra.mxu0 0.0
        %4203 = vmatprep.subr.mxu0 0.0
        %4204 = vmatpush1.msra.mxu0 0.0
        %4205 = vmatprep.subr.mxu0 0.0
        %4206 = vmatpush1.msra.mxu0 0.0
        %4207 = vmatprep.subr.mxu0 0.0
        %4208 = vmatpush1.msra.mxu0 0.0
        %4209 = vmatprep.subr.mxu0 0.0
        %4210 = vmatpush1.msra.mxu0 0.0
        %4211 = vmatprep.subr.mxu0 0.0
        %4212 = vmatpush1.msra.mxu0 0.0
        %4213 = vmatprep.subr.mxu0 0.0
        %v4214 = vand.u32 %v3931, 4294901760
        %4215 = vmatpush1.msra.mxu0 %v4214
        %4216 = vmatprep.subr.mxu0 0.0
        %v4217 = vand.u32 %v3922, 4294901760
        %4218 = vmatpush1.msra.mxu0 %v4217
        %4219 = vmatprep.subr.mxu0 0.0
        %v4220 = vand.u32 %v3921, 4294901760
        %4221 = vmatpush1.msra.mxu0 %v4220
        %4222 = vmatprep.subr.mxu0 0.0
        %v4223 = vand.u32 %v3920, 4294901760
        %4224 = vmatpush1.msra.mxu0 %v4223
        %4225 = vmatprep.subr.mxu0 0.0
        %v4226 = vand.u32 %v3919, 4294901760
        %4227 = vmatpush1.msra.mxu0 %v4226
        %4228 = vmatprep.subr.mxu0 0.0
        %4229 = vmatpush2.msra.mxu0 0.0
        %4230 = vmatprep.subr.mxu0 0.0
        %4231 = vmatpush2.msra.mxu0 0.0
        %4232 = vmatprep.subr.mxu0 0.0
        %4233 = vmatpush2.msra.mxu0 0.0
        %4234 = vmatprep.subr.mxu0 0.0
        %4235 = vmatpush2.msra.mxu0 0.0
        %4236 = vmatprep.subr.mxu0 0.0
        %4237 = vmatpush2.msra.mxu0 0.0
        %4238 = vmatprep.subr.mxu0 0.0
        %4239 = vmatpush2.msra.mxu0 0.0
        %4240 = vmatprep.subr.mxu0 0.0
        %4241 = vmatpush2.msra.mxu0 0.0
        %4242 = vmatprep.subr.mxu0 0.0
        %4243 = vmatpush2.msra.mxu0 0.0
        %4244 = vmatprep.subr.mxu0 0.0
        %4245 = vmatpush2.msra.mxu0 0.0
        %4246 = vmatprep.subr.mxu0 0.0
        %4247 = vmatpush2.msra.mxu0 0.0
        %4248 = vmatprep.subr.mxu0 0.0
        %4249 = vmatpush2.msra.mxu0 0.0
        %4250 = vmatprep.subr.mxu0 0.0
        %4251 = vmatpush2.msra.mxu0 0.0
        %4252 = vmatprep.subr.mxu0 0.0
        %4253 = vmatpush2.msra.mxu0 0.0
        %4254 = vmatprep.subr.mxu0 0.0
        %4255 = vmatpush2.msra.mxu0 0.0
        %4256 = vmatprep.subr.mxu0 0.0
        %4257 = vmatpush2.msra.mxu0 0.0
        %4258 = vmatprep.subr.mxu0 0.0
        %4259 = vmatpush2.msra.mxu0 0.0
        %4260 = vmatprep.mubr.f32.mxu0 0.0
        %v4261 = vand.u32 %v3927, 4294901760
        %v4262 = vsub.f32 %v3927, %v4261
        %v4263 = vand.u32 %v4262, 4294901760
        %4264 = vmatmul.mubr.f32.gmra.mxu0 %v4263
        %v4265 = vpop.f32.mrf.mxu0
        %v4266 = vadd.f32 %v4188, %v4265
        %v4267 = vpop.f32.mrf.mxu0
        %4268 = vdwg.mxu0
        %4269 = vmatprep.subr.mxu0 0.0
        %4270 = vmatpush1.msra.mxu0 0.0
        %4271 = vmatprep.subr.mxu0 0.0
        %4272 = vmatpush1.msra.mxu0 0.0
        %4273 = vmatprep.subr.mxu0 0.0
        %4274 = vmatpush1.msra.mxu0 0.0
        %4275 = vmatprep.subr.mxu0 0.0
        %4276 = vmatpush1.msra.mxu0 0.0
        %4277 = vmatprep.subr.mxu0 0.0
        %4278 = vmatpush1.msra.mxu0 0.0
        %4279 = vmatprep.subr.mxu0 0.0
        %4280 = vmatpush1.msra.mxu0 0.0
        %4281 = vmatprep.subr.mxu0 0.0
        %4282 = vmatpush1.msra.mxu0 0.0
        %4283 = vmatprep.subr.mxu0 0.0
        %4284 = vmatpush1.msra.mxu0 0.0
        %4285 = vmatprep.subr.mxu0 0.0
        %4286 = vmatpush1.msra.mxu0 0.0
        %4287 = vmatprep.subr.mxu0 0.0
        %4288 = vmatpush1.msra.mxu0 0.0
        %4289 = vmatprep.subr.mxu0 0.0
        %4290 = vmatpush1.msra.mxu0 0.0
        %4291 = vmatprep.subr.mxu0 0.0
        %v4292 = vand.u32 %v3931, 4294901760
        %v4293 = vsub.f32 %v3931, %v4292
        %v4294 = vand.u32 %v4293, 4294901760
        %4295 = vmatpush1.msra.mxu0 %v4294
        %4296 = vmatprep.subr.mxu0 0.0
        %v4297 = vand.u32 %v3922, 4294901760
        %v4298 = vsub.f32 %v3922, %v4297
        %v4299 = vand.u32 %v4298, 4294901760
        %4300 = vmatpush1.msra.mxu0 %v4299
        %4301 = vmatprep.subr.mxu0 0.0
        %v4302 = vand.u32 %v3921, 4294901760
        %v4303 = vsub.f32 %v3921, %v4302
        %v4304 = vand.u32 %v4303, 4294901760
        %4305 = vmatpush1.msra.mxu0 %v4304
        %4306 = vmatprep.subr.mxu0 0.0
        %v4307 = vand.u32 %v3920, 4294901760
        %v4308 = vsub.f32 %v3920, %v4307
        %v4309 = vand.u32 %v4308, 4294901760
        %4310 = vmatpush1.msra.mxu0 %v4309
        %4311 = vmatprep.subr.mxu0 0.0
        %v4312 = vand.u32 %v3919, 4294901760
        %v4313 = vsub.f32 %v3919, %v4312
        %v4314 = vand.u32 %v4313, 4294901760
        %4315 = vmatpush1.msra.mxu0 %v4314
        %4316 = vmatprep.subr.mxu0 0.0
        %4317 = vmatpush2.msra.mxu0 0.0
        %4318 = vmatprep.subr.mxu0 0.0
        %4319 = vmatpush2.msra.mxu0 0.0
        %4320 = vmatprep.subr.mxu0 0.0
        %4321 = vmatpush2.msra.mxu0 0.0
        %4322 = vmatprep.subr.mxu0 0.0
        %4323 = vmatpush2.msra.mxu0 0.0
        %4324 = vmatprep.subr.mxu0 0.0
        %4325 = vmatpush2.msra.mxu0 0.0
        %4326 = vmatprep.subr.mxu0 0.0
        %4327 = vmatpush2.msra.mxu0 0.0
        %4328 = vmatprep.subr.mxu0 0.0
        %4329 = vmatpush2.msra.mxu0 0.0
        %4330 = vmatprep.subr.mxu0 0.0
        %4331 = vmatpush2.msra.mxu0 0.0
        %4332 = vmatprep.subr.mxu0 0.0
        %4333 = vmatpush2.msra.mxu0 0.0
        %4334 = vmatprep.subr.mxu0 0.0
        %4335 = vmatpush2.msra.mxu0 0.0
        %4336 = vmatprep.subr.mxu0 0.0
        %4337 = vmatpush2.msra.mxu0 0.0
        %4338 = vmatprep.subr.mxu0 0.0
        %4339 = vmatpush2.msra.mxu0 0.0
        %4340 = vmatprep.subr.mxu0 0.0
        %4341 = vmatpush2.msra.mxu0 0.0
        %4342 = vmatprep.subr.mxu0 0.0
        %4343 = vmatpush2.msra.mxu0 0.0
        %4344 = vmatprep.subr.mxu0 0.0
        %4345 = vmatpush2.msra.mxu0 0.0
        %4346 = vmatprep.subr.mxu0 0.0
        %4347 = vmatpush2.msra.mxu0 0.0
        %4348 = vmatprep.mubr.f32.mxu0 0.0
        %v4349 = vand.u32 %v3927, 4294901760
        %4350 = vmatmul.mubr.f32.gmra.mxu0 %v4349
        %v4351 = vpop.f32.mrf.mxu0
        %v4352 = vadd.f32 %v4266, %v4351
        %v4353 = vpop.f32.mrf.mxu0
        %4354 = vdwg.mxu0
        %4355 = vmatprep.subr.mxu0 0.0
        %4356 = vmatpush1.msra.mxu0 0.0
        %4357 = vmatprep.subr.mxu0 0.0
        %4358 = vmatpush1.msra.mxu0 0.0
        %4359 = vmatprep.subr.mxu0 0.0
        %4360 = vmatpush1.msra.mxu0 0.0
        %4361 = vmatprep.subr.mxu0 0.0
        %4362 = vmatpush1.msra.mxu0 0.0
        %4363 = vmatprep.subr.mxu0 0.0
        %4364 = vmatpush1.msra.mxu0 0.0
        %4365 = vmatprep.subr.mxu0 0.0
        %4366 = vmatpush1.msra.mxu0 0.0
        %4367 = vmatprep.subr.mxu0 0.0
        %4368 = vmatpush1.msra.mxu0 0.0
        %4369 = vmatprep.subr.mxu0 0.0
        %4370 = vmatpush1.msra.mxu0 0.0
        %4371 = vmatprep.subr.mxu0 0.0
        %4372 = vmatpush1.msra.mxu0 0.0
        %4373 = vmatprep.subr.mxu0 0.0
        %4374 = vmatpush1.msra.mxu0 0.0
        %4375 = vmatprep.subr.mxu0 0.0
        %4376 = vmatpush1.msra.mxu0 0.0
        %4377 = vmatprep.subr.mxu0 0.0
        %v4378 = vand.u32 %v3931, 4294901760
        %4379 = vmatpush1.msra.mxu0 %v4378
        %4380 = vmatprep.subr.mxu0 0.0
        %v4381 = vand.u32 %v3922, 4294901760
        %4382 = vmatpush1.msra.mxu0 %v4381
        %4383 = vmatprep.subr.mxu0 0.0
        %v4384 = vand.u32 %v3921, 4294901760
        %4385 = vmatpush1.msra.mxu0 %v4384
        %4386 = vmatprep.subr.mxu0 0.0
        %v4387 = vand.u32 %v3920, 4294901760
        %4388 = vmatpush1.msra.mxu0 %v4387
        %4389 = vmatprep.subr.mxu0 0.0
        %v4390 = vand.u32 %v3919, 4294901760
        %4391 = vmatpush1.msra.mxu0 %v4390
        %4392 = vmatprep.subr.mxu0 0.0
        %4393 = vmatpush2.msra.mxu0 0.0
        %4394 = vmatprep.subr.mxu0 0.0
        %4395 = vmatpush2.msra.mxu0 0.0
        %4396 = vmatprep.subr.mxu0 0.0
        %4397 = vmatpush2.msra.mxu0 0.0
        %4398 = vmatprep.subr.mxu0 0.0
        %4399 = vmatpush2.msra.mxu0 0.0
        %4400 = vmatprep.subr.mxu0 0.0
        %4401 = vmatpush2.msra.mxu0 0.0
        %4402 = vmatprep.subr.mxu0 0.0
        %4403 = vmatpush2.msra.mxu0 0.0
        %4404 = vmatprep.subr.mxu0 0.0
        %4405 = vmatpush2.msra.mxu0 0.0
        %4406 = vmatprep.subr.mxu0 0.0
        %4407 = vmatpush2.msra.mxu0 0.0
        %4408 = vmatprep.subr.mxu0 0.0
        %4409 = vmatpush2.msra.mxu0 0.0
        %4410 = vmatprep.subr.mxu0 0.0
        %4411 = vmatpush2.msra.mxu0 0.0
        %4412 = vmatprep.subr.mxu0 0.0
        %4413 = vmatpush2.msra.mxu0 0.0
        %4414 = vmatprep.subr.mxu0 0.0
        %4415 = vmatpush2.msra.mxu0 0.0
        %4416 = vmatprep.subr.mxu0 0.0
        %4417 = vmatpush2.msra.mxu0 0.0
        %4418 = vmatprep.subr.mxu0 0.0
        %4419 = vmatpush2.msra.mxu0 0.0
        %4420 = vmatprep.subr.mxu0 0.0
        %4421 = vmatpush2.msra.mxu0 0.0
        %4422 = vmatprep.subr.mxu0 0.0
        %4423 = vmatpush2.msra.mxu0 0.0
        %4424 = vmatprep.mubr.f32.mxu0 0.0
        %v4425 = vand.u32 %v3927, 4294901760
        %4426 = vmatmul.mubr.f32.gmra.mxu0 %v4425
        %v4427 = vpop.f32.mrf.mxu0
        %v4428 = vadd.f32 %v4352, %v4427
        %v4429 = vpop.f32.mrf.mxu0
        %4430 = vdwg.mxu0
        %v4431 = vld [vmem:[%s4] sm:$0xff]
        %v4432 = vld [vmem:[%s4 + $0x8] sm:$0xff]
        %v4433 = vld [vmem:[%s4 + $0x10] sm:$0xff]
        %v4434 = vld [vmem:[%s4 + $0x18] sm:$0xff]
        %v4435 = vld [vmem:[%s4 + $0x20] sm:$0xf]
        %v4436 = vld [vmem:[%s5] sm:$0x1]
        %v4438 = vsel %vm3929, %v4435, 0
        %4440 = vmatprep.subr.mxu0 0.0
        %4441 = vmatpush1.msra.mxu0 0.0
        %4442 = vmatprep.subr.mxu0 0.0
        %4443 = vmatpush1.msra.mxu0 0.0
        %4444 = vmatprep.subr.mxu0 0.0
        %4445 = vmatpush1.msra.mxu0 0.0
        %4446 = vmatprep.subr.mxu0 0.0
        %4447 = vmatpush1.msra.mxu0 0.0
        %4448 = vmatprep.subr.mxu0 0.0
        %4449 = vmatpush1.msra.mxu0 0.0
        %4450 = vmatprep.subr.mxu0 0.0
        %4451 = vmatpush1.msra.mxu0 0.0
        %4452 = vmatprep.subr.mxu0 0.0
        %4453 = vmatpush1.msra.mxu0 0.0
        %4454 = vmatprep.subr.mxu0 0.0
        %4455 = vmatpush1.msra.mxu0 0.0
        %4456 = vmatprep.subr.mxu0 0.0
        %4457 = vmatpush1.msra.mxu0 0.0
        %4458 = vmatprep.subr.mxu0 0.0
        %4459 = vmatpush1.msra.mxu0 0.0
        %4460 = vmatprep.subr.mxu0 0.0
        %4461 = vmatpush1.msra.mxu0 0.0
        %4462 = vmatprep.subr.mxu0 0.0
        %v4463 = vand.u32 %v4438, 4294901760
        %4464 = vmatpush1.msra.mxu0 %v4463
        %4465 = vmatprep.subr.mxu0 0.0
        %v4466 = vand.u32 %v4434, 4294901760
        %4467 = vmatpush1.msra.mxu0 %v4466
        %4468 = vmatprep.subr.mxu0 0.0
        %v4469 = vand.u32 %v4433, 4294901760
        %4470 = vmatpush1.msra.mxu0 %v4469
        %4471 = vmatprep.subr.mxu0 0.0
        %v4472 = vand.u32 %v4432, 4294901760
        %4473 = vmatpush1.msra.mxu0 %v4472
        %4474 = vmatprep.subr.mxu0 0.0
        %v4475 = vand.u32 %v4431, 4294901760
        %4476 = vmatpush1.msra.mxu0 %v4475
        %4477 = vmatprep.subr.mxu0 0.0
        %4478 = vmatpush2.msra.mxu0 0.0
        %4479 = vmatprep.subr.mxu0 0.0
        %4480 = vmatpush2.msra.mxu0 0.0
        %4481 = vmatprep.subr.mxu0 0.0
        %4482 = vmatpush2.msra.mxu0 0.0
        %4483 = vmatprep.subr.mxu0 0.0
        %4484 = vmatpush2.msra.mxu0 0.0
        %4485 = vmatprep.subr.mxu0 0.0
        %4486 = vmatpush2.msra.mxu0 0.0
        %4487 = vmatprep.subr.mxu0 0.0
        %4488 = vmatpush2.msra.mxu0 0.0
        %4489 = vmatprep.subr.mxu0 0.0
        %4490 = vmatpush2.msra.mxu0 0.0
        %4491 = vmatprep.subr.mxu0 0.0
        %4492 = vmatpush2.msra.mxu0 0.0
        %4493 = vmatprep.subr.mxu0 0.0
        %4494 = vmatpush2.msra.mxu0 0.0
        %4495 = vmatprep.subr.mxu0 0.0
        %4496 = vmatpush2.msra.mxu0 0.0
        %4497 = vmatprep.subr.mxu0 0.0
        %4498 = vmatpush2.msra.mxu0 0.0
        %4499 = vmatprep.subr.mxu0 0.0
        %4500 = vmatpush2.msra.mxu0 0.0
        %4501 = vmatprep.subr.mxu0 0.0
        %4502 = vmatpush2.msra.mxu0 0.0
        %4503 = vmatprep.subr.mxu0 0.0
        %4504 = vmatpush2.msra.mxu0 0.0
        %4505 = vmatprep.subr.mxu0 0.0
        %4506 = vmatpush2.msra.mxu0 0.0
        %4507 = vmatprep.subr.mxu0 0.0
        %4508 = vmatpush2.msra.mxu0 0.0
        %4509 = vmatprep.mubr.f32.mxu0 0.0
        %v4510 = vand.u32 %v3927, 4294901760
        %v4511 = vsub.f32 %v3927, %v4510
        %v4512 = vand.u32 %v4511, 4294901760
        %v4513 = vsub.f32 %v4511, %v4512
        %v4514 = vand.u32 %v4513, 4294901760
        %4515 = vmatmul.mubr.f32.gmra.mxu0 %v4514
        %v4516 = vpop.f32.mrf.mxu0
        %v4517 = vadd.f32 %v4436, %v4516
        %v4518 = vpop.f32.mrf.mxu0
        %4519 = vdwg.mxu0
        %4520 = vmatprep.subr.mxu0 0.0
        %4521 = vmatpush1.msra.mxu0 0.0
        %4522 = vmatprep.subr.mxu0 0.0
        %4523 = vmatpush1.msra.mxu0 0.0
        %4524 = vmatprep.subr.mxu0 0.0
        %4525 = vmatpush1.msra.mxu0 0.0
        %4526 = vmatprep.subr.mxu0 0.0
        %4527 = vmatpush1.msra.mxu0 0.0
        %4528 = vmatprep.subr.mxu0 0.0
        %4529 = vmatpush1.msra.mxu0 0.0
        %4530 = vmatprep.subr.mxu0 0.0
        %4531 = vmatpush1.msra.mxu0 0.0
        %4532 = vmatprep.subr.mxu0 0.0
        %4533 = vmatpush1.msra.mxu0 0.0
        %4534 = vmatprep.subr.mxu0 0.0
        %4535 = vmatpush1.msra.mxu0 0.0
        %4536 = vmatprep.subr.mxu0 0.0
        %4537 = vmatpush1.msra.mxu0 0.0
        %4538 = vmatprep.subr.mxu0 0.0
        %4539 = vmatpush1.msra.mxu0 0.0
        %4540 = vmatprep.subr.mxu0 0.0
        %4541 = vmatpush1.msra.mxu0 0.0
        %4542 = vmatprep.subr.mxu0 0.0
        %v4543 = vand.u32 %v4438, 4294901760
        %v4544 = vsub.f32 %v4438, %v4543
        %v4545 = vand.u32 %v4544, 4294901760
        %v4546 = vsub.f32 %v4544, %v4545
        %v4547 = vand.u32 %v4546, 4294901760
        %4548 = vmatpush1.msra.mxu0 %v4547
        %4549 = vmatprep.subr.mxu0 0.0
        %v4550 = vand.u32 %v4434, 4294901760
        %v4551 = vsub.f32 %v4434, %v4550
        %v4552 = vand.u32 %v4551, 4294901760
        %v4553 = vsub.f32 %v4551, %v4552
        %v4554 = vand.u32 %v4553, 4294901760
        %4555 = vmatpush1.msra.mxu0 %v4554
        %4556 = vmatprep.subr.mxu0 0.0
        %v4557 = vand.u32 %v4433, 4294901760
        %v4558 = vsub.f32 %v4433, %v4557
        %v4559 = vand.u32 %v4558, 4294901760
        %v4560 = vsub.f32 %v4558, %v4559
        %v4561 = vand.u32 %v4560, 4294901760
        %4562 = vmatpush1.msra.mxu0 %v4561
        %4563 = vmatprep.subr.mxu0 0.0
        %v4564 = vand.u32 %v4432, 4294901760
        %v4565 = vsub.f32 %v4432, %v4564
        %v4566 = vand.u32 %v4565, 4294901760
        %v4567 = vsub.f32 %v4565, %v4566
        %v4568 = vand.u32 %v4567, 4294901760
        %4569 = vmatpush1.msra.mxu0 %v4568
        %4570 = vmatprep.subr.mxu0 0.0
        %v4571 = vand.u32 %v4431, 4294901760
        %v4572 = vsub.f32 %v4431, %v4571
        %v4573 = vand.u32 %v4572, 4294901760
        %v4574 = vsub.f32 %v4572, %v4573
        %v4575 = vand.u32 %v4574, 4294901760
        %4576 = vmatpush1.msra.mxu0 %v4575
        %4577 = vmatprep.subr.mxu0 0.0
        %4578 = vmatpush2.msra.mxu0 0.0
        %4579 = vmatprep.subr.mxu0 0.0
        %4580 = vmatpush2.msra.mxu0 0.0
        %4581 = vmatprep.subr.mxu0 0.0
        %4582 = vmatpush2.msra.mxu0 0.0
        %4583 = vmatprep.subr.mxu0 0.0
        %4584 = vmatpush2.msra.mxu0 0.0
        %4585 = vmatprep.subr.mxu0 0.0
        %4586 = vmatpush2.msra.mxu0 0.0
        %4587 = vmatprep.subr.mxu0 0.0
        %4588 = vmatpush2.msra.mxu0 0.0
        %4589 = vmatprep.subr.mxu0 0.0
        %4590 = vmatpush2.msra.mxu0 0.0
        %4591 = vmatprep.subr.mxu0 0.0
        %4592 = vmatpush2.msra.mxu0 0.0
        %4593 = vmatprep.subr.mxu0 0.0
        %4594 = vmatpush2.msra.mxu0 0.0
        %4595 = vmatprep.subr.mxu0 0.0
        %4596 = vmatpush2.msra.mxu0 0.0
        %4597 = vmatprep.subr.mxu0 0.0
        %4598 = vmatpush2.msra.mxu0 0.0
        %4599 = vmatprep.subr.mxu0 0.0
        %4600 = vmatpush2.msra.mxu0 0.0
        %4601 = vmatprep.subr.mxu0 0.0
        %4602 = vmatpush2.msra.mxu0 0.0
        %4603 = vmatprep.subr.mxu0 0.0
        %4604 = vmatpush2.msra.mxu0 0.0
        %4605 = vmatprep.subr.mxu0 0.0
        %4606 = vmatpush2.msra.mxu0 0.0
        %4607 = vmatprep.subr.mxu0 0.0
        %4608 = vmatpush2.msra.mxu0 0.0
        %4609 = vmatprep.mubr.f32.mxu0 0.0
        %v4610 = vand.u32 %v3927, 4294901760
        %4611 = vmatmul.mubr.f32.gmra.mxu0 %v4610
        %v4612 = vpop.f32.mrf.mxu0
        %v4613 = vadd.f32 %v4517, %v4612
        %v4614 = vpop.f32.mrf.mxu0
        %4615 = vdwg.mxu0
        %4616 = vmatprep.subr.mxu0 0.0
        %4617 = vmatpush1.msra.mxu0 0.0
        %4618 = vmatprep.subr.mxu0 0.0
        %4619 = vmatpush1.msra.mxu0 0.0
        %4620 = vmatprep.subr.mxu0 0.0
        %4621 = vmatpush1.msra.mxu0 0.0
        %4622 = vmatprep.subr.mxu0 0.0
        %4623 = vmatpush1.msra.mxu0 0.0
        %4624 = vmatprep.subr.mxu0 0.0
        %4625 = vmatpush1.msra.mxu0 0.0
        %4626 = vmatprep.subr.mxu0 0.0
        %4627 = vmatpush1.msra.mxu0 0.0
        %4628 = vmatprep.subr.mxu0 0.0
        %4629 = vmatpush1.msra.mxu0 0.0
        %4630 = vmatprep.subr.mxu0 0.0
        %4631 = vmatpush1.msra.mxu0 0.0
        %4632 = vmatprep.subr.mxu0 0.0
        %4633 = vmatpush1.msra.mxu0 0.0
        %4634 = vmatprep.subr.mxu0 0.0
        %4635 = vmatpush1.msra.mxu0 0.0
        %4636 = vmatprep.subr.mxu0 0.0
        %4637 = vmatpush1.msra.mxu0 0.0
        %4638 = vmatprep.subr.mxu0 0.0
        %v4639 = vand.u32 %v4438, 4294901760
        %v4640 = vsub.f32 %v4438, %v4639
        %4641 = vmatpush1.msra.mxu0 %v4640
        %4642 = vmatprep.subr.mxu0 0.0
        %v4643 = vand.u32 %v4434, 4294901760
        %v4644 = vsub.f32 %v4434, %v4643
        %4645 = vmatpush1.msra.mxu0 %v4644
        %4646 = vmatprep.subr.mxu0 0.0
        %v4647 = vand.u32 %v4433, 4294901760
        %v4648 = vsub.f32 %v4433, %v4647
        %4649 = vmatpush1.msra.mxu0 %v4648
        %4650 = vmatprep.subr.mxu0 0.0
        %v4651 = vand.u32 %v4432, 4294901760
        %v4652 = vsub.f32 %v4432, %v4651
        %4653 = vmatpush1.msra.mxu0 %v4652
        %4654 = vmatprep.subr.mxu0 0.0
        %v4655 = vand.u32 %v4431, 4294901760
        %v4656 = vsub.f32 %v4431, %v4655
        %4657 = vmatpush1.msra.mxu0 %v4656
        %4658 = vmatprep.subr.mxu0 0.0
        %4659 = vmatpush2.msra.mxu0 0.0
        %4660 = vmatprep.subr.mxu0 0.0
        %4661 = vmatpush2.msra.mxu0 0.0
        %4662 = vmatprep.subr.mxu0 0.0
        %4663 = vmatpush2.msra.mxu0 0.0
        %4664 = vmatprep.subr.mxu0 0.0
        %4665 = vmatpush2.msra.mxu0 0.0
        %4666 = vmatprep.subr.mxu0 0.0
        %4667 = vmatpush2.msra.mxu0 0.0
        %4668 = vmatprep.subr.mxu0 0.0
        %4669 = vmatpush2.msra.mxu0 0.0
        %4670 = vmatprep.subr.mxu0 0.0
        %4671 = vmatpush2.msra.mxu0 0.0
        %4672 = vmatprep.subr.mxu0 0.0
        %4673 = vmatpush2.msra.mxu0 0.0
        %4674 = vmatprep.subr.mxu0 0.0
        %4675 = vmatpush2.msra.mxu0 0.0
        %4676 = vmatprep.subr.mxu0 0.0
        %4677 = vmatpush2.msra.mxu0 0.0
        %4678 = vmatprep.subr.mxu0 0.0
        %4679 = vmatpush2.msra.mxu0 0.0
        %4680 = vmatprep.subr.mxu0 0.0
        %4681 = vmatpush2.msra.mxu0 0.0
        %4682 = vmatprep.subr.mxu0 0.0
        %4683 = vmatpush2.msra.mxu0 0.0
        %4684 = vmatprep.subr.mxu0 0.0
        %4685 = vmatpush2.msra.mxu0 0.0
        %4686 = vmatprep.subr.mxu0 0.0
        %4687 = vmatpush2.msra.mxu0 0.0
        %4688 = vmatprep.subr.mxu0 0.0
        %4689 = vmatpush2.msra.mxu0 0.0
        %4690 = vmatprep.mubr.f32.mxu0 0.0
        %v4691 = vand.u32 %v3927, 4294901760
        %v4692 = vsub.f32 %v3927, %v4691
        %4693 = vmatmul.mubr.f32.gmra.mxu0 %v4692
        %v4694 = vpop.f32.mrf.mxu0
        %v4695 = vadd.f32 %v4613, %v4694
        %v4696 = vpop.f32.mrf.mxu0
        %4697 = vdwg.mxu0
        %4698 = vmatprep.subr.mxu0 0.0
        %4699 = vmatpush1.msra.mxu0 0.0
        %4700 = vmatprep.subr.mxu0 0.0
        %4701 = vmatpush1.msra.mxu0 0.0
        %4702 = vmatprep.subr.mxu0 0.0
        %4703 = vmatpush1.msra.mxu0 0.0
        %4704 = vmatprep.subr.mxu0 0.0
        %4705 = vmatpush1.msra.mxu0 0.0
        %4706 = vmatprep.subr.mxu0 0.0
        %4707 = vmatpush1.msra.mxu0 0.0
        %4708 = vmatprep.subr.mxu0 0.0
        %4709 = vmatpush1.msra.mxu0 0.0
        %4710 = vmatprep.subr.mxu0 0.0
        %4711 = vmatpush1.msra.mxu0 0.0
        %4712 = vmatprep.subr.mxu0 0.0
        %4713 = vmatpush1.msra.mxu0 0.0
        %4714 = vmatprep.subr.mxu0 0.0
        %4715 = vmatpush1.msra.mxu0 0.0
        %4716 = vmatprep.subr.mxu0 0.0
        %4717 = vmatpush1.msra.mxu0 0.0
        %4718 = vmatprep.subr.mxu0 0.0
        %4719 = vmatpush1.msra.mxu0 0.0
        %4720 = vmatprep.subr.mxu0 0.0
        %v4721 = vand.u32 %v4438, 4294901760
        %4722 = vmatpush1.msra.mxu0 %v4721
        %4723 = vmatprep.subr.mxu0 0.0
        %v4724 = vand.u32 %v4434, 4294901760
        %4725 = vmatpush1.msra.mxu0 %v4724
        %4726 = vmatprep.subr.mxu0 0.0
        %v4727 = vand.u32 %v4433, 4294901760
        %4728 = vmatpush1.msra.mxu0 %v4727
        %4729 = vmatprep.subr.mxu0 0.0
        %v4730 = vand.u32 %v4432, 4294901760
        %4731 = vmatpush1.msra.mxu0 %v4730
        %4732 = vmatprep.subr.mxu0 0.0
        %v4733 = vand.u32 %v4431, 4294901760
        %4734 = vmatpush1.msra.mxu0 %v4733
        %4735 = vmatprep.subr.mxu0 0.0
        %4736 = vmatpush2.msra.mxu0 0.0
        %4737 = vmatprep.subr.mxu0 0.0
        %4738 = vmatpush2.msra.mxu0 0.0
        %4739 = vmatprep.subr.mxu0 0.0
        %4740 = vmatpush2.msra.mxu0 0.0
        %4741 = vmatprep.subr.mxu0 0.0
        %4742 = vmatpush2.msra.mxu0 0.0
        %4743 = vmatprep.subr.mxu0 0.0
        %4744 = vmatpush2.msra.mxu0 0.0
        %4745 = vmatprep.subr.mxu0 0.0
        %4746 = vmatpush2.msra.mxu0 0.0
        %4747 = vmatprep.subr.mxu0 0.0
        %4748 = vmatpush2.msra.mxu0 0.0
        %4749 = vmatprep.subr.mxu0 0.0
        %4750 = vmatpush2.msra.mxu0 0.0
        %4751 = vmatprep.subr.mxu0 0.0
        %4752 = vmatpush2.msra.mxu0 0.0
        %4753 = vmatprep.subr.mxu0 0.0
        %4754 = vmatpush2.msra.mxu0 0.0
        %4755 = vmatprep.subr.mxu0 0.0
        %4756 = vmatpush2.msra.mxu0 0.0
        %4757 = vmatprep.subr.mxu0 0.0
        %4758 = vmatpush2.msra.mxu0 0.0
        %4759 = vmatprep.subr.mxu0 0.0
        %4760 = vmatpush2.msra.mxu0 0.0
        %4761 = vmatprep.subr.mxu0 0.0
        %4762 = vmatpush2.msra.mxu0 0.0
        %4763 = vmatprep.subr.mxu0 0.0
        %4764 = vmatpush2.msra.mxu0 0.0
        %4765 = vmatprep.subr.mxu0 0.0
        %4766 = vmatpush2.msra.mxu0 0.0
        %4767 = vmatprep.mubr.f32.mxu0 0.0
        %v4768 = vand.u32 %v3927, 4294901760
        %v4769 = vsub.f32 %v3927, %v4768
        %v4770 = vand.u32 %v4769, 4294901760
        %4771 = vmatmul.mubr.f32.gmra.mxu0 %v4770
        %v4772 = vpop.f32.mrf.mxu0
        %v4773 = vadd.f32 %v4695, %v4772
        %v4774 = vpop.f32.mrf.mxu0
        %4775 = vdwg.mxu0
        %4776 = vmatprep.subr.mxu0 0.0
        %4777 = vmatpush1.msra.mxu0 0.0
        %4778 = vmatprep.subr.mxu0 0.0
        %4779 = vmatpush1.msra.mxu0 0.0
        %4780 = vmatprep.subr.mxu0 0.0
        %4781 = vmatpush1.msra.mxu0 0.0
        %4782 = vmatprep.subr.mxu0 0.0
        %4783 = vmatpush1.msra.mxu0 0.0
        %4784 = vmatprep.subr.mxu0 0.0
        %4785 = vmatpush1.msra.mxu0 0.0
        %4786 = vmatprep.subr.mxu0 0.0
        %4787 = vmatpush1.msra.mxu0 0.0
        %4788 = vmatprep.subr.mxu0 0.0
        %4789 = vmatpush1.msra.mxu0 0.0
        %4790 = vmatprep.subr.mxu0 0.0
        %4791 = vmatpush1.msra.mxu0 0.0
        %4792 = vmatprep.subr.mxu0 0.0
        %4793 = vmatpush1.msra.mxu0 0.0
        %4794 = vmatprep.subr.mxu0 0.0
        %4795 = vmatpush1.msra.mxu0 0.0
        %4796 = vmatprep.subr.mxu0 0.0
        %4797 = vmatpush1.msra.mxu0 0.0
        %4798 = vmatprep.subr.mxu0 0.0
        %v4799 = vand.u32 %v4438, 4294901760
        %v4800 = vsub.f32 %v4438, %v4799
        %v4801 = vand.u32 %v4800, 4294901760
        %4802 = vmatpush1.msra.mxu0 %v4801
        %4803 = vmatprep.subr.mxu0 0.0
        %v4804 = vand.u32 %v4434, 4294901760
        %v4805 = vsub.f32 %v4434, %v4804
        %v4806 = vand.u32 %v4805, 4294901760
        %4807 = vmatpush1.msra.mxu0 %v4806
        %4808 = vmatprep.subr.mxu0 0.0
        %v4809 = vand.u32 %v4433, 4294901760
        %v4810 = vsub.f32 %v4433, %v4809
        %v4811 = vand.u32 %v4810, 4294901760
        %4812 = vmatpush1.msra.mxu0 %v4811
        %4813 = vmatprep.subr.mxu0 0.0
        %v4814 = vand.u32 %v4432, 4294901760
        %v4815 = vsub.f32 %v4432, %v4814
        %v4816 = vand.u32 %v4815, 4294901760
        %4817 = vmatpush1.msra.mxu0 %v4816
        %4818 = vmatprep.subr.mxu0 0.0
        %v4819 = vand.u32 %v4431, 4294901760
        %v4820 = vsub.f32 %v4431, %v4819
        %v4821 = vand.u32 %v4820, 4294901760
        %4822 = vmatpush1.msra.mxu0 %v4821
        %4823 = vmatprep.subr.mxu0 0.0
        %4824 = vmatpush2.msra.mxu0 0.0
        %4825 = vmatprep.subr.mxu0 0.0
        %4826 = vmatpush2.msra.mxu0 0.0
        %4827 = vmatprep.subr.mxu0 0.0
        %4828 = vmatpush2.msra.mxu0 0.0
        %4829 = vmatprep.subr.mxu0 0.0
        %4830 = vmatpush2.msra.mxu0 0.0
        %4831 = vmatprep.subr.mxu0 0.0
        %4832 = vmatpush2.msra.mxu0 0.0
        %4833 = vmatprep.subr.mxu0 0.0
        %4834 = vmatpush2.msra.mxu0 0.0
        %4835 = vmatprep.subr.mxu0 0.0
        %4836 = vmatpush2.msra.mxu0 0.0
        %4837 = vmatprep.subr.mxu0 0.0
        %4838 = vmatpush2.msra.mxu0 0.0
        %4839 = vmatprep.subr.mxu0 0.0
        %4840 = vmatpush2.msra.mxu0 0.0
        %4841 = vmatprep.subr.mxu0 0.0
        %4842 = vmatpush2.msra.mxu0 0.0
        %4843 = vmatprep.subr.mxu0 0.0
        %4844 = vmatpush2.msra.mxu0 0.0
        %4845 = vmatprep.subr.mxu0 0.0
        %4846 = vmatpush2.msra.mxu0 0.0
        %4847 = vmatprep.subr.mxu0 0.0
        %4848 = vmatpush2.msra.mxu0 0.0
        %4849 = vmatprep.subr.mxu0 0.0
        %4850 = vmatpush2.msra.mxu0 0.0
        %4851 = vmatprep.subr.mxu0 0.0
        %4852 = vmatpush2.msra.mxu0 0.0
        %4853 = vmatprep.subr.mxu0 0.0
        %4854 = vmatpush2.msra.mxu0 0.0
        %4855 = vmatprep.mubr.f32.mxu0 0.0
        %v4856 = vand.u32 %v3927, 4294901760
        %4857 = vmatmul.mubr.f32.gmra.mxu0 %v4856
        %v4858 = vpop.f32.mrf.mxu0
        %v4859 = vadd.f32 %v4773, %v4858
        %v4860 = vpop.f32.mrf.mxu0
        %4861 = vdwg.mxu0
        %4862 = vmatprep.subr.mxu0 0.0
        %4863 = vmatpush1.msra.mxu0 0.0
        %4864 = vmatprep.subr.mxu0 0.0
        %4865 = vmatpush1.msra.mxu0 0.0
        %4866 = vmatprep.subr.mxu0 0.0
        %4867 = vmatpush1.msra.mxu0 0.0
        %4868 = vmatprep.subr.mxu0 0.0
        %4869 = vmatpush1.msra.mxu0 0.0
        %4870 = vmatprep.subr.mxu0 0.0
        %4871 = vmatpush1.msra.mxu0 0.0
        %4872 = vmatprep.subr.mxu0 0.0
        %4873 = vmatpush1.msra.mxu0 0.0
        %4874 = vmatprep.subr.mxu0 0.0
        %4875 = vmatpush1.msra.mxu0 0.0
        %4876 = vmatprep.subr.mxu0 0.0
        %4877 = vmatpush1.msra.mxu0 0.0
        %4878 = vmatprep.subr.mxu0 0.0
        %4879 = vmatpush1.msra.mxu0 0.0
        %4880 = vmatprep.subr.mxu0 0.0
        %4881 = vmatpush1.msra.mxu0 0.0
        %4882 = vmatprep.subr.mxu0 0.0
        %4883 = vmatpush1.msra.mxu0 0.0
        %4884 = vmatprep.subr.mxu0 0.0
        %v4885 = vand.u32 %v4438, 4294901760
        %4886 = vmatpush1.msra.mxu0 %v4885
        %4887 = vmatprep.subr.mxu0 0.0
        %v4888 = vand.u32 %v4434, 4294901760
        %4889 = vmatpush1.msra.mxu0 %v4888
        %4890 = vmatprep.subr.mxu0 0.0
        %v4891 = vand.u32 %v4433, 4294901760
        %4892 = vmatpush1.msra.mxu0 %v4891
        %4893 = vmatprep.subr.mxu0 0.0
        %v4894 = vand.u32 %v4432, 4294901760
        %4895 = vmatpush1.msra.mxu0 %v4894
        %4896 = vmatprep.subr.mxu0 0.0
        %v4897 = vand.u32 %v4431, 4294901760
        %4898 = vmatpush1.msra.mxu0 %v4897
        %4899 = vmatprep.subr.mxu0 0.0
        %4900 = vmatpush2.msra.mxu0 0.0
        %4901 = vmatprep.subr.mxu0 0.0
        %4902 = vmatpush2.msra.mxu0 0.0
        %4903 = vmatprep.subr.mxu0 0.0
        %4904 = vmatpush2.msra.mxu0 0.0
        %4905 = vmatprep.subr.mxu0 0.0
        %4906 = vmatpush2.msra.mxu0 0.0
        %4907 = vmatprep.subr.mxu0 0.0
        %4908 = vmatpush2.msra.mxu0 0.0
        %4909 = vmatprep.subr.mxu0 0.0
        %4910 = vmatpush2.msra.mxu0 0.0
        %4911 = vmatprep.subr.mxu0 0.0
        %4912 = vmatpush2.msra.mxu0 0.0
        %4913 = vmatprep.subr.mxu0 0.0
        %4914 = vmatpush2.msra.mxu0 0.0
        %4915 = vmatprep.subr.mxu0 0.0
        %4916 = vmatpush2.msra.mxu0 0.0
        %4917 = vmatprep.subr.mxu0 0.0
        %4918 = vmatpush2.msra.mxu0 0.0
        %4919 = vmatprep.subr.mxu0 0.0
        %4920 = vmatpush2.msra.mxu0 0.0
        %4921 = vmatprep.subr.mxu0 0.0
        %4922 = vmatpush2.msra.mxu0 0.0
        %4923 = vmatprep.subr.mxu0 0.0
        %4924 = vmatpush2.msra.mxu0 0.0
        %4925 = vmatprep.subr.mxu0 0.0
        %4926 = vmatpush2.msra.mxu0 0.0
        %4927 = vmatprep.subr.mxu0 0.0
        %4928 = vmatpush2.msra.mxu0 0.0
        %4929 = vmatprep.subr.mxu0 0.0
        %4930 = vmatpush2.msra.mxu0 0.0
        %4931 = vmatprep.mubr.f32.mxu0 0.0
        %v4932 = vand.u32 %v3927, 4294901760
        %4933 = vmatmul.mubr.f32.gmra.mxu0 %v4932
        %v4934 = vpop.f32.mrf.mxu0
        %v4935 = vadd.f32 %v4859, %v4934
        %v4936 = vpop.f32.mrf.mxu0
        %4937 = vdwg.mxu0
        %v4938 = vld [vmem:[%s6] sm:$0x3f]
        %v4939 = vld [vmem:[%s6 + $0x8] sm:$0x3f]
        %vm4940 = vcmask 48128
        %v4942 = vsel %vm4940, %v4935, 0
        %vm4944 = vcmask 1045504
        %v4946 = vsel %vm4944, %v4938, 0
        %v4949 = vsel %vm4944, %v4939, 0
        %4951 = vmatprep.subr.mxu0 0.0
        %4952 = vmatpush1.msra.mxu0 0.0
        %4953 = vmatprep.subr.mxu0 0.0
        %4954 = vmatpush1.msra.mxu0 0.0
        %4955 = vmatprep.subr.mxu0 0.0
        %4956 = vmatpush1.msra.mxu0 0.0
        %4957 = vmatprep.subr.mxu0 0.0
        %4958 = vmatpush1.msra.mxu0 0.0
        %4959 = vmatprep.subr.mxu0 0.0
        %4960 = vmatpush1.msra.mxu0 0.0
        %4961 = vmatprep.subr.mxu0 0.0
        %4962 = vmatpush1.msra.mxu0 0.0
        %4963 = vmatprep.subr.mxu0 0.0
        %4964 = vmatpush1.msra.mxu0 0.0
        %4965 = vmatprep.subr.mxu0 0.0
        %4966 = vmatpush1.msra.mxu0 0.0
        %4967 = vmatprep.subr.mxu0 0.0
        %4968 = vmatpush1.msra.mxu0 0.0
        %4969 = vmatprep.subr.mxu0 0.0
        %4970 = vmatpush1.msra.mxu0 0.0
        %4971 = vmatprep.subr.mxu0 0.0
        %4972 = vmatpush1.msra.mxu0 0.0
        %4973 = vmatprep.subr.mxu0 0.0
        %4974 = vmatpush1.msra.mxu0 0.0
        %4975 = vmatprep.subr.mxu0 0.0
        %4976 = vmatpush1.msra.mxu0 0.0
        %4977 = vmatprep.subr.mxu0 0.0
        %4978 = vmatpush1.msra.mxu0 0.0
        %4979 = vmatprep.subr.mxu0 0.0
        %4980 = vmatpush1.msra.mxu0 0.0
        %4981 = vmatprep.subr.mxu0 %v4949
        %4982 = vmatpush1.msra.mxu0 %v4946
        %4983 = vmatprep.subr.mxu0 0.0
        %4984 = vmatpush2.msra.mxu0 0.0
        %4985 = vmatprep.subr.mxu0 0.0
        %4986 = vmatpush2.msra.mxu0 0.0
        %4987 = vmatprep.subr.mxu0 0.0
        %4988 = vmatpush2.msra.mxu0 0.0
        %4989 = vmatprep.subr.mxu0 0.0
        %4990 = vmatpush2.msra.mxu0 0.0
        %4991 = vmatprep.subr.mxu0 0.0
        %4992 = vmatpush2.msra.mxu0 0.0
        %4993 = vmatprep.subr.mxu0 0.0
        %4994 = vmatpush2.msra.mxu0 0.0
        %4995 = vmatprep.subr.mxu0 0.0
        %4996 = vmatpush2.msra.mxu0 0.0
        %4997 = vmatprep.subr.mxu0 0.0
        %4998 = vmatpush2.msra.mxu0 0.0
        %4999 = vmatprep.subr.mxu0 0.0
        %5000 = vmatpush2.msra.mxu0 0.0
        %5001 = vmatprep.subr.mxu0 0.0
        %5002 = vmatpush2.msra.mxu0 0.0
        %5003 = vmatprep.subr.mxu0 0.0
        %5004 = vmatpush2.msra.mxu0 0.0
        %5005 = vmatprep.subr.mxu0 0.0
        %5006 = vmatpush2.msra.mxu0 0.0
        %5007 = vmatprep.subr.mxu0 0.0
        %5008 = vmatpush2.msra.mxu0 0.0
        %5009 = vmatprep.subr.mxu0 0.0
        %5010 = vmatpush2.msra.mxu0 0.0
        %5011 = vmatprep.subr.mxu0 0.0
        %5012 = vmatpush2.msra.mxu0 0.0
        %5013 = vmatprep.subr.mxu0 0.0
        %5014 = vmatpush2.msra.mxu0 0.0
        %5015 = vmatprep.mubr.f32.mxu0 0.0
        %5016 = vmatmul.mubr.f32.gmra.mxu0 %v4942
        %v5017 = vpop.f32.mrf.mxu0
        %v5018 = vadd.f32 0.0, %v5017
        %v5019 = vpop.f32.mrf.mxu0
        %v5020 = vadd.f32 0.0, %v5019
        %5021 = vdwg.mxu0
        %v5022 = vld [vmem:[%s7] sm:$0xff]
        %v5023 = vld [vmem:[%s7 + $0x8] sm:$0xff]
        %v5024 = vld [vmem:[%s7 + $0x10] sm:$0xff]
        %v5025 = vld [vmem:[%s7 + $0x18] sm:$0xff]
        %v5026 = vld [vmem:[%s7 + $0x20] sm:$0xff]
        %v5027 = vld [vmem:[%s7 + $0x28] sm:$0xff]
        %v5028 = vld [vmem:[%s7 + $0x30] sm:$0xff]
        %v5029 = vld [vmem:[%s7 + $0x38] sm:$0xff]
        %v5030 = vld [vmem:[%s7 + $0x40] sm:$0xf]
        %v5031 = vld [vmem:[%s7 + $0x48] sm:$0xf]
        %v5033 = vsel %vm3925, %v4428, 0
        %v5036 = vsel %vm3929, %v5030, 0
        %v5039 = vsel %vm3929, %v5031, 0
        %5041 = vmatprep.subr.mxu0 0.0
        %5042 = vmatpush1.msra.mxu0 0.0
        %5043 = vmatprep.subr.mxu0 0.0
        %5044 = vmatpush1.msra.mxu0 0.0
        %5045 = vmatprep.subr.mxu0 0.0
        %5046 = vmatpush1.msra.mxu0 0.0
        %5047 = vmatprep.subr.mxu0 0.0
        %5048 = vmatpush1.msra.mxu0 0.0
        %5049 = vmatprep.subr.mxu0 0.0
        %5050 = vmatpush1.msra.mxu0 0.0
        %5051 = vmatprep.subr.mxu0 0.0
        %5052 = vmatpush1.msra.mxu0 0.0
        %5053 = vmatprep.subr.mxu0 0.0
        %5054 = vmatpush1.msra.mxu0 0.0
        %5055 = vmatprep.subr.mxu0 0.0
        %5056 = vmatpush1.msra.mxu0 0.0
        %5057 = vmatprep.subr.mxu0 0.0
        %5058 = vmatpush1.msra.mxu0 0.0
        %5059 = vmatprep.subr.mxu0 0.0
        %5060 = vmatpush1.msra.mxu0 0.0
        %5061 = vmatprep.subr.mxu0 0.0
        %5062 = vmatpush1.msra.mxu0 0.0
        %5063 = vmatprep.subr.mxu0 %v5039
        %5064 = vmatpush1.msra.mxu0 %v5036
        %5065 = vmatprep.subr.mxu0 %v5029
        %5066 = vmatpush1.msra.mxu0 %v5028
        %5067 = vmatprep.subr.mxu0 %v5027
        %5068 = vmatpush1.msra.mxu0 %v5026
        %5069 = vmatprep.subr.mxu0 %v5025
        %5070 = vmatpush1.msra.mxu0 %v5024
        %5071 = vmatprep.subr.mxu0 %v5023
        %5072 = vmatpush1.msra.mxu0 %v5022
        %5073 = vmatprep.subr.mxu0 0.0
        %5074 = vmatpush2.msra.mxu0 0.0
        %5075 = vmatprep.subr.mxu0 0.0
        %5076 = vmatpush2.msra.mxu0 0.0
        %5077 = vmatprep.subr.mxu0 0.0
        %5078 = vmatpush2.msra.mxu0 0.0
        %5079 = vmatprep.subr.mxu0 0.0
        %5080 = vmatpush2.msra.mxu0 0.0
        %5081 = vmatprep.subr.mxu0 0.0
        %5082 = vmatpush2.msra.mxu0 0.0
        %5083 = vmatprep.subr.mxu0 0.0
        %5084 = vmatpush2.msra.mxu0 0.0
        %5085 = vmatprep.subr.mxu0 0.0
        %5086 = vmatpush2.msra.mxu0 0.0
        %5087 = vmatprep.subr.mxu0 0.0
        %5088 = vmatpush2.msra.mxu0 0.0
        %5089 = vmatprep.subr.mxu0 0.0
        %5090 = vmatpush2.msra.mxu0 0.0
        %5091 = vmatprep.subr.mxu0 0.0
        %5092 = vmatpush2.msra.mxu0 0.0
        %5093 = vmatprep.subr.mxu0 0.0
        %5094 = vmatpush2.msra.mxu0 0.0
        %5095 = vmatprep.subr.mxu0 0.0
        %5096 = vmatpush2.msra.mxu0 0.0
        %5097 = vmatprep.subr.mxu0 0.0
        %5098 = vmatpush2.msra.mxu0 0.0
        %5099 = vmatprep.subr.mxu0 0.0
        %5100 = vmatpush2.msra.mxu0 0.0
        %5101 = vmatprep.subr.mxu0 0.0
        %5102 = vmatpush2.msra.mxu0 0.0
        %5103 = vmatprep.subr.mxu0 0.0
        %5104 = vmatpush2.msra.mxu0 0.0
        %5105 = vmatprep.mubr.f32.mxu0 0.0
        %5106 = vmatmul.mubr.f32.gmra.mxu0 %v5033
        %v5107 = vpop.f32.mrf.mxu0
        %v5108 = vadd.f32 0.0, %v5107
        %v5109 = vpop.f32.mrf.mxu0
        %v5110 = vadd.f32 0.0, %v5109
        %5111 = vdwg.mxu0
        %v5112 = vmul.f32 %v5018, %v5108
        %v5113 = vmul.f32 %v5020, %v5110
        %v5114 = vxor.u32 %v5112, 2147483648
        %v5115 = vxor.u32 %v5113, 2147483648
        %v5116 = vmul.f32 %v5114, 1.442695
        %v5117 = vpow.pop %v5116
        %v5118 = vmul.f32 %v5115, 1.442695
        %v5119 = vpow.pop %v5118
        %v5120 = vadd.f32 %v5117, 1.0
        %v5121 = vadd.f32 %v5119, 1.0
        %v5122 = vrcp.pop %v5120
        %v5123 = vmul.f32 1.0, %v5122
        %v5124 = vrcp.pop %v5121
        %v5125 = vmul.f32 1.0, %v5124
        %v5126 = vmul.f32 %v5123, 2.0
        %v5127 = vmul.f32 %v5125, 2.0
        %v5128 = vsub.f32 %v5126, 1.0
        %v5129 = vsub.f32 %v5127, 1.0
        %v5130 = vmul.f32 %v5128, 0.33333334
        %v5131 = vmul.f32 %v5129, 0.33333334
        %v5134 = vcombine.low %v5130, %v5131
        %v5136 = vunpack.c.l.s4 1966171168
        %v5137 = vunpack.c.0.s8 %v5136
        %v5138 = vlaneseq
        %v5139 = vshrl.u32 %v5138, 7
        %v5140 = vsub.s32 %v5137, %v5139
        %v5141 = vrot.slane %v5134, %v5140
        %v5143 = vunpack.c.l.s4 1966171168
        %v5144 = vunpack.c.0.s8 %v5143
        %v5145 = vlaneseq
        %v5146 = vshrl.u32 %v5145, 7
        %v5147 = vsub.s32 %v5144, %v5146
        %v5148 = vrot.slane %v5141, %v5147
        %v5150 = vlaneseq
        %vm5151 = vcmp.ge.s32.totalorder %v5150, 0
        %vm5152 = vcmp.lt.s32.totalorder %v5150, 216
        %vm5153 = vmand %vm5151, %vm5152
        %5154 = vst.msk [vmem:[%s296] sm:$0x3] %vm5153, %v5148
        %s5155 = sand.u32 %s203, 1
        %s5156 = scalar_lea.sflag [#allocation3], %s5155
        %s5157 = sand.u32 %s203, 1
        %s5158 = smul.addr %s5157, 2
        %s5159 = scalar_lea.vmem [#allocation2], %s5158
        // Predicated region
        $region53: #{tpu_custom_call.1} parent=51 // pred_check
          %p5160 = pneg %p213
        $region54: #{tpu_custom_call.1} parent=51 // pred_check_branch
          %5162 = sbr.rel (%p5160) target = $region56
        $region55: #{tpu_custom_call.1} parent=51 // pred_region
          %s5164 = ssub.s32 32, 32
          %5165 = vsyncadd %s5156, %s5164
          %s5166 = smul.addr %s22, 2
          %s5167 = smul.addr %s5166, 16
          %s5168 = scalar_lea.hbm %s8, %s5167
          %s5170 = sshll.u32 %s5159, 4
          %s5171 = int_to_ptr.vmem [resolvable:$true] %s5170
          %5173 = dma.vmem_to_hbm [thread:$0]  %s5171, 32, %s5168, %s5156
        $region56: #{tpu_custom_call.1} parent=51 // pred_fallthru
          _
      $region52: #{tpu_custom_call.1} parent=5 // pred_fallthru
        _
      %p5174 = scmp.le.s32.totalorder 2, %s17
      // Predicated region
      $region57: #{tpu_custom_call.1} parent=5 // pred_check
        %p5175 = pneg %p5174
      $region58: #{tpu_custom_call.1} parent=5 // pred_check_branch
        %5177 = sbr.rel (%p5175) target = $region60
      $region59: #{tpu_custom_call.1} parent=5 // pred_region
        %s5178 = ssub.s32 %s17, 2
        // Predicated region
        $region61: #{tpu_custom_call.1} parent=59 // pred_check
          %p5179 = pneg %p219
        $region62: #{tpu_custom_call.1} parent=59 // pred_check_branch
          %5181 = sbr.rel (%p5179) target = $region64
        $region63: #{tpu_custom_call.1} parent=59 // pred_region
          %s5182 = sand.u32 %s204, 1
          %s5183 = scalar_lea.sflag [#allocation3], %s5182
          %s5184 = sand.u32 %s204, 1
          %s5185 = smul.addr %s5184, 2
          %s5186 = scalar_lea.vmem [#allocation2], %s5185
          %5187 = dma.done %s5183, 32
        $region64: #{tpu_custom_call.1} parent=59 // pred_fallthru
          _
      $region60: #{tpu_custom_call.1} parent=5 // pred_fallthru
        _
    $region6: #{tpu_custom_call.1} parent=1 // loop_footer
      %s21 = sadd.s32 1, %s17
    $region7: #{tpu_custom_call.1} parent=1 // loop_footer_branch
      %16 = sbr.rel target = $region3
    $region8: #{tpu_custom_call.1} parent=1 // loop_exit
      _
    %5188 = vsyncpa [#allocation3], 1
    %s5189 = scalar_lea.sflag [#allocation3], 1
    %5190 = vsyncpa %s5189, 1

</llo_original>
